<compile_context>
chip_gen: v7x
topology: tpu7x:2x2x1
jax: 0.10.0
libtpu: 0.0.40
codegen_flags: <defaults>
</compile_context>

<pallas_src>
import jax
import jax.numpy as jnp
from jax import lax
from jax.experimental import pallas as pl
from jax.experimental.pallas import tpu as pltpu


# ----------------------------------------------------------------------------
# Pallas kernel
# ----------------------------------------------------------------------------
def _bisenet_output_kernel(xp_ref, w1_ref, shift_ref, w2_ref, b2_ref,
                           uh_ref, uwt_ref, out_ref, g_ref):
    """Grid = (batch n [parallel], output-row tile j [arbitrary]).

    xp_ref   : (1, H+2, W+2, Cin)        padded NHWC activation (matmul dtype)
    w1_ref   : (9, Cin, Cmid)            3x3 conv weights, BN scale folded in
    shift_ref: (1, Cmid)  f32            folded BN shift
    w2_ref   : (Cmid, Ncls)              1x1 conv weights
    b2_ref   : (1, Ncls)  f32            1x1 conv bias
    uh_ref   : (row_block, H)            bilinear H->Ho rows for this tile
    uwt_ref  : (W, Wo)                   bilinear W->Wo (transposed)
    out_ref  : (1, Ncls, row_block, Wo)  NCHW output tile (f32)
    g_ref    : (Ncls, H, W) f32          VMEM scratch: 1x1-conv output
    """
    mm = w1_ref.dtype
    h = xp_ref.shape[1] - 2
    w = xp_ref.shape[2] - 2
    cmid = w2_ref.shape[0]
    n_classes = w2_ref.shape[1]

    # --- Stage 1 (once per batch): 3x3 conv + folded-BN shift + ReLU + 1x1 --
    @pl.when(pl.program_id(1) == 0)
    def _stage1():
        xp = xp_ref[0]                                        # (h+2, w+2, cin)
        acc = jnp.zeros((h * w, cmid), jnp.float32)
        for t in range(9):                                    # static 3x3 taps
            dy, dx = divmod(t, 3)
            tap = xp[dy:dy + h, dx:dx + w, :].reshape(h * w, -1)
            acc = acc + lax.dot_general(
                tap, w1_ref[t],
                dimension_numbers=(((1,), (0,)), ((), ())),
                preferred_element_type=jnp.float32)
        # Folded-BN shift + ReLU in f32 (VPU), then cast for the next MXU pass.
        f = jnp.maximum(acc + shift_ref[...], 0.0).astype(mm)
        # 1x1 conv + bias -> (h*w, n_classes), f32 accumulate.
        g = lax.dot_general(
            f, w2_ref[...],
            dimension_numbers=(((1,), (0,)), ((), ())),
            preferred_element_type=jnp.float32) + b2_ref[...]
        # Re-layout to class-major (Ncls, h, w) scratch: one small relayout per
        # batch here means the per-tile upsample matmuls below contract the
        # MXU-natural axes with no transposes in the hot loop.
        g3 = g.reshape(h, w, n_classes)
        for hh in range(h):                                   # static, small
            g_ref[:, hh, :] = jnp.transpose(g3[hh], (1, 0))

    # --- Stage 2 (per output-row tile): separable bilinear upsample ---------
    # H -> Ho first (only this tile's rows), W -> Wo last so the stored block
    # is lane-dense in Wo (full-width unmasked stores, NCHW layout directly).
    uh_t = uh_ref[...]                                        # (row_block, h)
    uw_t = uwt_ref[...]                                       # (w, wo)
    for c in range(n_classes):                                # static, small
        gc = g_ref[c].astype(mm)                              # (h, w)
        a = lax.dot_general(
            uh_t, gc,
            dimension_numbers=(((1,), (0,)), ((), ())),
            preferred_element_type=jnp.float32)               # (row_block, w)
        oc = lax.dot_general(
            a.astype(mm), uw_t,
            dimension_numbers=(((1,), (0,)), ((), ())),
            preferred_element_type=jnp.float32)               # (row_block, wo)
        out_ref[0, c] = oc.astype(out_ref.dtype)


# ----------------------------------------------------------------------------
# Glue: bilinear matrices, BN folding, tiling heuristic, pallas_call wrapper
# ----------------------------------------------------------------------------
def _bilinear_matrix(out_size, in_size, scale):
    """PyTorch nn.Upsample(mode='bilinear', align_corners=False) row weights."""
    o = jnp.arange(out_size, dtype=jnp.float32)
    src = (o + 0.5) / scale - 0.5
    src = jnp.maximum(src, 0.0)                   # PyTorch clamps negatives
    x0 = jnp.minimum(jnp.floor(src).astype(jnp.int32), in_size - 1)
    x1 = jnp.minimum(x0 + 1, in_size - 1)
    lam = src - x0.astype(jnp.float32)
    m = jnp.zeros((out_size, in_size), jnp.float32)
    m = m.at[jnp.arange(out_size), x0].add(1.0 - lam)
    m = m.at[jnp.arange(out_size), x1].add(lam)
    return m


def _default_row_block(ho):
    """Largest multiple of 8 dividing Ho, <= min(128, Ho//2); fallback Ho."""
    cap = max(8, min(128, ho // 2))
    best = ho
    for cand in range(8, cap + 1, 8):
        if ho % cand == 0:
            best = cand
    return best


def bisenet_output_forward(x_nchw, params, up_factor, *,
                           matmul_dtype=jnp.bfloat16, row_block=None):
    """x_nchw: (N, Cin, H, W) f32 -> (N, Ncls, H*up, W*up) f32 (PyTorch NCHW)."""
    (w_conv, bn_gamma, bn_beta, bn_mean, bn_var, bn_eps,
     w_out, b_out) = params

    N, Cin, H, W = x_nchw.shape
    Cmid = w_conv.shape[0]
    Ncls = w_out.shape[0]
    Ho, Wo = H * up_factor, W * up_factor

    # ---- layout / constant preparation (not the hot path) ------------------
    # NCHW -> NHWC + spatial pad 1 (tiny vs. a 9x im2col blow-up: the kernel
    # builds the 3x3 taps in VMEM instead of reading an expanded patches array).
    x = jnp.transpose(x_nchw, (0, 2, 3, 1)).astype(jnp.float32)
    xp = jnp.pad(x, ((0, 0), (1, 1), (1, 1), (0, 0))).astype(matmul_dtype)

    # Conv weights (Cmid, Cin, 3, 3) -> (9, Cin, Cmid) with BN scale folded in.
    scale = bn_gamma / jnp.sqrt(bn_var + bn_eps)                      # (Cmid,)
    w1 = (jnp.transpose(w_conv, (2, 3, 1, 0)).reshape(9, Cin, Cmid)
          * scale[None, None, :]).astype(matmul_dtype)
    shift = (bn_beta - bn_mean * scale).reshape(1, Cmid).astype(jnp.float32)

    # 1x1 conv: (Ncls, Cmid, 1, 1) -> (Cmid, Ncls), bias -> (1, Ncls).
    w2 = jnp.transpose(w_out[:, :, 0, 0], (1, 0)).astype(matmul_dtype)
    b2 = b_out.reshape(1, Ncls).astype(jnp.float32)

    # Separable bilinear upsample operators.
    uh = _bilinear_matrix(Ho, H, float(up_factor)).astype(matmul_dtype)   # (Ho, H)
    uwt = _bilinear_matrix(Wo, W, float(up_factor)).T.astype(matmul_dtype)  # (W, Wo)

    if row_block is None:
        row_block = _default_row_block(Ho)
    if Ho % row_block != 0:
        row_block = Ho
    n_row_tiles = Ho // row_block

    # Advisory cost estimate + explicit VMEM budget with headroom (<= 48 MiB,
    # leaving room under v7x's 64 MiB per-core VMEM for compiler scratch).
    mm_size = jnp.dtype(matmul_dtype).itemsize
    block_bytes = ((H + 2) * (W + 2) * Cin * mm_size        # xp block
                   + 9 * Cin * Cmid * mm_size               # w1
                   + Cmid * 4 + Ncls * 4                    # shift + bias
                   + Cmid * Ncls * mm_size                  # w2
                   + row_block * H * mm_size                # uh block
                   + W * Wo * mm_size                       # uwT
                   + Ncls * row_block * Wo * 4)             # output block
    vmem_limit = int(min(48 << 20,
                         max(16 << 20,
                             2 * block_bytes + Ncls * H * W * 4 + (4 << 20))))

    flops = int(2 * N * H * W * 9 * Cin * Cmid
                + 2 * N * H * W * Cmid * Ncls
                + 2 * N * Ncls * (Ho * H * W + Ho * W * Wo))
    in_arrays = (xp, w1, shift, w2, b2, uh, uwt)
    bytes_accessed = int(sum(a.size * a.dtype.itemsize for a in in_arrays)
                         + N * Ncls * Ho * Wo * 4)

    out = pl.pallas_call(
        _bisenet_output_kernel,
        out_shape=jax.ShapeDtypeStruct((N, Ncls, Ho, Wo), jnp.float32),
        grid_spec=pltpu.PrefetchScalarGridSpec(
            num_scalar_prefetch=0,
            grid=(N, n_row_tiles),
            in_specs=[
                pl.BlockSpec((1, H + 2, W + 2, Cin), lambda n, j: (n, 0, 0, 0)),
                pl.BlockSpec((9, Cin, Cmid),         lambda n, j: (0, 0, 0)),
                pl.BlockSpec((1, Cmid),              lambda n, j: (0, 0)),
                pl.BlockSpec((Cmid, Ncls),           lambda n, j: (0, 0)),
                pl.BlockSpec((1, Ncls),              lambda n, j: (0, 0)),
                pl.BlockSpec((row_block, H),         lambda n, j: (j, 0)),
                pl.BlockSpec((W, Wo),                lambda n, j: (0, 0)),
            ],
            out_specs=pl.BlockSpec((1, Ncls, row_block, Wo),
                                   lambda n, j: (n, 0, j, 0)),
            scratch_shapes=[pltpu.VMEM((Ncls, H, W), jnp.float32)],
        ),
        compiler_params=pltpu.CompilerParams(
            dimension_semantics=("parallel", "arbitrary"),
            vmem_limit_bytes=vmem_limit),
        cost_estimate=pl.CostEstimate(flops=flops, transcendentals=0,
                                      bytes_accessed=bytes_accessed),
    )(xp, w1, shift, w2, b2, uh, uwt)

    return out


# ----------------------------------------------------------------------------
# Pure-JAX reference (correctness check only)
# ----------------------------------------------------------------------------
def _reference_forward(x_nchw, params, up_factor):
    (w_conv, bn_gamma, bn_beta, bn_mean, bn_var, bn_eps, w_out, b_out) = params
    N, Cin, H, W = x_nchw.shape
    Ho, Wo = H * up_factor, W * up_factor
    x = jnp.transpose(x_nchw, (0, 2, 3, 1))
    w_hwio = jnp.transpose(w_conv, (2, 3, 1, 0))
    y = lax.conv_general_dilated(
        x, w_hwio, window_strides=(1, 1), padding=((1, 1), (1, 1)),
        dimension_numbers=("NHWC", "HWIO", "NHWC"))
    scale = bn_gamma / jnp.sqrt(bn_var + bn_eps)
    y = jnp.maximum(y * scale + (bn_beta - bn_mean * scale), 0.0)
    y = jnp.einsum("nhwc,oc->nhwo", y, w_out[:, :, 0, 0]) + b_out
    uh = _bilinear_matrix(Ho, H, float(up_factor))
    uw = _bilinear_matrix(Wo, W, float(up_factor))
    y = jnp.einsum("ph,nhwc->npwc", uh, y)
    y = jnp.einsum("qw,npwc->npqc", uw, y)
    return jnp.transpose(y, (0, 3, 1, 2))


# ----------------------------------------------------------------------------
# Main
# ----------------------------------------------------------------------------
if __name__ == "__main__":
    # Small, module-consistent shapes.
    N, in_chan, mid_chan, n_classes = 2, 4, 8, 4
    H = W = 16
    up_factor = 4

    key = jax.random.PRNGKey(0)
    k0, k1, k2, k3, k4, k5, k6 = jax.random.split(key, 7)

    x = jax.random.normal(k0, (N, in_chan, H, W), jnp.float32)

    # Deterministic synthetic parameters (kaiming-style normals; BN stats
    # varied so the folded scale/shift actually does something).
    gain = (2.0 / (1.0 + 1.0 ** 2)) ** 0.5  # kaiming_normal_ with a=1
    w_conv = jax.random.normal(k1, (mid_chan, in_chan, 3, 3), jnp.float32) \
        * (gain / (in_chan * 9) ** 0.5)
    bn_gamma = 1.0 + 0.1 * jax.random.normal(k2, (mid_chan,), jnp.float32)
    bn_beta = 0.1 * jax.random.normal(k3, (mid_chan,), jnp.float32)
    bn_mean = 0.1 * jax.random.normal(k4, (mid_chan,), jnp.float32)
    bn_var = jnp.abs(1.0 + 0.1 * jax.random.normal(k5, (mid_chan,), jnp.float32))
    bn_eps = 1e-5
    w_out = jax.random.normal(k6, (n_classes, mid_chan, 1, 1), jnp.float32) \
        * (gain / mid_chan ** 0.5)
    b_out = jnp.zeros((n_classes,), jnp.float32)

    params = (w_conv, bn_gamma, bn_beta, bn_mean, bn_var, bn_eps, w_out, b_out)

    # f32 mode: bit-faithful to the PyTorch module, tight check.
    out_f32 = jax.block_until_ready(
        bisenet_output_forward(x, params, up_factor, matmul_dtype=jnp.float32))
    # bf16 matmul operands (v6e/v7x perf configuration), f32 accumulation.
    out_bf16 = jax.block_until_ready(
        bisenet_output_forward(x, params, up_factor, matmul_dtype=jnp.bfloat16))

    ref = jax.block_until_ready(_reference_forward(x, params, up_factor))

    assert out_f32.shape == (N, n_classes, H * up_factor, W * up_factor), \
        out_f32.shape
    assert jnp.allclose(out_f32, ref, atol=1e-4, rtol=1e-4), \
        float(jnp.max(jnp.abs(out_f32 - ref)))
    assert jnp.allclose(out_bf16, ref, atol=5e-2, rtol=5e-2), \
        float(jnp.max(jnp.abs(out_bf16 - ref)))

    print("KERNEL_OK")
</pallas_src>

<mosaic_0001>
module attributes {stable_mosaic.version = 11 : i64} {
  func.func @_bisenet_output_kernel(%arg0: i32, %arg1: i32, %arg2: memref<1x18x18x4xf32, #tpu.memory_space<vmem>>, %arg3: memref<9x4x8xf32, #tpu.memory_space<vmem>>, %arg4: memref<1x8xf32, #tpu.memory_space<vmem>>, %arg5: memref<8x4xf32, #tpu.memory_space<vmem>>, %arg6: memref<1x4xf32, #tpu.memory_space<vmem>>, %arg7: memref<32x16xf32, #tpu.memory_space<vmem>>, %arg8: memref<16x64xf32, #tpu.memory_space<vmem>>, %arg9: memref<1x4x32x64xf32, #tpu.memory_space<vmem>>, %arg10: memref<4x16x16xf32, #tpu.memory_space<vmem>>) attributes {dimension_semantics = [#tpu.dimension_semantics<parallel>, #tpu.dimension_semantics<arbitrary>], iteration_bounds = array<i64: 2, 2>, scalar_prefetch = 0 : i64, scratch_operands = 1 : i64, tpu.core_type = #tpu.core_type<tc>, window_params = [{transform_indices = @transform_0, window_bounds = array<i64: 1, 18, 18, 4>}, {pipeline_mode = #tpu.pipeline_mode<synchronous>, transform_indices = @transform_1, window_bounds = array<i64: 9, 4, 8>}, {pipeline_mode = #tpu.pipeline_mode<synchronous>, transform_indices = @transform_2, window_bounds = array<i64: 1, 8>}, {pipeline_mode = #tpu.pipeline_mode<synchronous>, transform_indices = @transform_3, window_bounds = array<i64: 8, 4>}, {pipeline_mode = #tpu.pipeline_mode<synchronous>, transform_indices = @transform_4, window_bounds = array<i64: 1, 4>}, {transform_indices = @transform_5, window_bounds = array<i64: 32, 16>}, {pipeline_mode = #tpu.pipeline_mode<synchronous>, transform_indices = @transform_6, window_bounds = array<i64: 16, 64>}, {transform_indices = @transform_7, window_bounds = array<i64: 1, 4, 32, 64>}]} {
    %c0_i32 = arith.constant 0 : i32
    %0 = arith.cmpi eq, %arg1, %c0_i32 : i32
    %1 = arith.extui %0 : i1 to i32
    %c0_i32_0 = arith.constant 0 : i32
    %2 = arith.cmpi ne, %1, %c0_i32_0 : i32
    scf.if %2 {
      %c0_36 = arith.constant 0 : index
      %c0_37 = arith.constant 0 : index
      %c0_38 = arith.constant 0 : index
      %c0_39 = arith.constant 0 : index
      %33 = vector.load %arg2[%c0_36, %c0_37, %c0_38, %c0_39] : memref<1x18x18x4xf32, #tpu.memory_space<vmem>>, vector<1x18x18x4xf32>
      %34 = vector.shape_cast %33 : vector<1x18x18x4xf32> to vector<18x18x4xf32>
      %cst_40 = arith.constant 0.000000e+00 : f32
      %35 = vector.broadcast %cst_40 : f32 to vector<256x8xf32>
      %36 = vector.extract_strided_slice %34 {offsets = [0, 0, 0], sizes = [16, 16, 4], strides = [1, 1, 1]} : vector<18x18x4xf32> to vector<16x16x4xf32>
      %37 = vector.shape_cast %36 : vector<16x16x4xf32> to vector<256x4xf32>
      %c0_41 = arith.constant 0 : index
      %c0_42 = arith.constant 0 : index
      %c0_43 = arith.constant 0 : index
      %38 = vector.load %arg3[%c0_41, %c0_42, %c0_43] : memref<9x4x8xf32, #tpu.memory_space<vmem>>, vector<1x4x8xf32>
      %39 = vector.shape_cast %38 : vector<1x4x8xf32> to vector<4x8xf32>
      %cst_44 = arith.constant dense<0.000000e+00> : vector<256x8xf32>
      %40 = tpu.matmul %37, %39, %cst_44 {dimension_numbers = #tpu.dot_dimension_numbers<[1], [0], [0], [1], [0, 0, 1, 1], [], []>} : vector<256x4xf32>, vector<4x8xf32>, vector<256x8xf32> -> vector<256x8xf32>
      %41 = arith.addf %35, %40 : vector<256x8xf32>
      %42 = vector.extract_strided_slice %34 {offsets = [0, 1, 0], sizes = [16, 16, 4], strides = [1, 1, 1]} : vector<18x18x4xf32> to vector<16x16x4xf32>
      %43 = vector.shape_cast %42 : vector<16x16x4xf32> to vector<256x4xf32>
      %c1_45 = arith.constant 1 : index
      %c0_46 = arith.constant 0 : index
      %c0_47 = arith.constant 0 : index
      %44 = vector.load %arg3[%c1_45, %c0_46, %c0_47] : memref<9x4x8xf32, #tpu.memory_space<vmem>>, vector<1x4x8xf32>
      %45 = vector.shape_cast %44 : vector<1x4x8xf32> to vector<4x8xf32>
      %cst_48 = arith.constant dense<0.000000e+00> : vector<256x8xf32>
      %46 = tpu.matmul %43, %45, %cst_48 {dimension_numbers = #tpu.dot_dimension_numbers<[1], [0], [0], [1], [0, 0, 1, 1], [], []>} : vector<256x4xf32>, vector<4x8xf32>, vector<256x8xf32> -> vector<256x8xf32>
      %47 = arith.addf %41, %46 : vector<256x8xf32>
      %48 = vector.extract_strided_slice %34 {offsets = [0, 2, 0], sizes = [16, 16, 4], strides = [1, 1, 1]} : vector<18x18x4xf32> to vector<16x16x4xf32>
      %49 = vector.shape_cast %48 : vector<16x16x4xf32> to vector<256x4xf32>
      %c2_49 = arith.constant 2 : index
      %c0_50 = arith.constant 0 : index
      %c0_51 = arith.constant 0 : index
      %50 = vector.load %arg3[%c2_49, %c0_50, %c0_51] : memref<9x4x8xf32, #tpu.memory_space<vmem>>, vector<1x4x8xf32>
      %51 = vector.shape_cast %50 : vector<1x4x8xf32> to vector<4x8xf32>
      %cst_52 = arith.constant dense<0.000000e+00> : vector<256x8xf32>
      %52 = tpu.matmul %49, %51, %cst_52 {dimension_numbers = #tpu.dot_dimension_numbers<[1], [0], [0], [1], [0, 0, 1, 1], [], []>} : vector<256x4xf32>, vector<4x8xf32>, vector<256x8xf32> -> vector<256x8xf32>
      %53 = arith.addf %47, %52 : vector<256x8xf32>
      %54 = vector.extract_strided_slice %34 {offsets = [1, 0, 0], sizes = [16, 16, 4], strides = [1, 1, 1]} : vector<18x18x4xf32> to vector<16x16x4xf32>
      %55 = vector.shape_cast %54 : vector<16x16x4xf32> to vector<256x4xf32>
      %c3_53 = arith.constant 3 : index
      %c0_54 = arith.constant 0 : index
      %c0_55 = arith.constant 0 : index
      %56 = vector.load %arg3[%c3_53, %c0_54, %c0_55] : memref<9x4x8xf32, #tpu.memory_space<vmem>>, vector<1x4x8xf32>
      %57 = vector.shape_cast %56 : vector<1x4x8xf32> to vector<4x8xf32>
      %cst_56 = arith.constant dense<0.000000e+00> : vector<256x8xf32>
      %58 = tpu.matmul %55, %57, %cst_56 {dimension_numbers = #tpu.dot_dimension_numbers<[1], [0], [0], [1], [0, 0, 1, 1], [], []>} : vector<256x4xf32>, vector<4x8xf32>, vector<256x8xf32> -> vector<256x8xf32>
      %59 = arith.addf %53, %58 : vector<256x8xf32>
      %60 = vector.extract_strided_slice %34 {offsets = [1, 1, 0], sizes = [16, 16, 4], strides = [1, 1, 1]} : vector<18x18x4xf32> to vector<16x16x4xf32>
      %61 = vector.shape_cast %60 : vector<16x16x4xf32> to vector<256x4xf32>
      %c4 = arith.constant 4 : index
      %c0_57 = arith.constant 0 : index
      %c0_58 = arith.constant 0 : index
      %62 = vector.load %arg3[%c4, %c0_57, %c0_58] : memref<9x4x8xf32, #tpu.memory_space<vmem>>, vector<1x4x8xf32>
      %63 = vector.shape_cast %62 : vector<1x4x8xf32> to vector<4x8xf32>
      %cst_59 = arith.constant dense<0.000000e+00> : vector<256x8xf32>
      %64 = tpu.matmul %61, %63, %cst_59 {dimension_numbers = #tpu.dot_dimension_numbers<[1], [0], [0], [1], [0, 0, 1, 1], [], []>} : vector<256x4xf32>, vector<4x8xf32>, vector<256x8xf32> -> vector<256x8xf32>
      %65 = arith.addf %59, %64 : vector<256x8xf32>
      %66 = vector.extract_strided_slice %34 {offsets = [1, 2, 0], sizes = [16, 16, 4], strides = [1, 1, 1]} : vector<18x18x4xf32> to vector<16x16x4xf32>
      %67 = vector.shape_cast %66 : vector<16x16x4xf32> to vector<256x4xf32>
      %c5 = arith.constant 5 : index
      %c0_60 = arith.constant 0 : index
      %c0_61 = arith.constant 0 : index
      %68 = vector.load %arg3[%c5, %c0_60, %c0_61] : memref<9x4x8xf32, #tpu.memory_space<vmem>>, vector<1x4x8xf32>
      %69 = vector.shape_cast %68 : vector<1x4x8xf32> to vector<4x8xf32>
      %cst_62 = arith.constant dense<0.000000e+00> : vector<256x8xf32>
      %70 = tpu.matmul %67, %69, %cst_62 {dimension_numbers = #tpu.dot_dimension_numbers<[1], [0], [0], [1], [0, 0, 1, 1], [], []>} : vector<256x4xf32>, vector<4x8xf32>, vector<256x8xf32> -> vector<256x8xf32>
      %71 = arith.addf %65, %70 : vector<256x8xf32>
      %72 = vector.extract_strided_slice %34 {offsets = [2, 0, 0], sizes = [16, 16, 4], strides = [1, 1, 1]} : vector<18x18x4xf32> to vector<16x16x4xf32>
      %73 = vector.shape_cast %72 : vector<16x16x4xf32> to vector<256x4xf32>
      %c6 = arith.constant 6 : index
      %c0_63 = arith.constant 0 : index
      %c0_64 = arith.constant 0 : index
      %74 = vector.load %arg3[%c6, %c0_63, %c0_64] : memref<9x4x8xf32, #tpu.memory_space<vmem>>, vector<1x4x8xf32>
      %75 = vector.shape_cast %74 : vector<1x4x8xf32> to vector<4x8xf32>
      %cst_65 = arith.constant dense<0.000000e+00> : vector<256x8xf32>
      %76 = tpu.matmul %73, %75, %cst_65 {dimension_numbers = #tpu.dot_dimension_numbers<[1], [0], [0], [1], [0, 0, 1, 1], [], []>} : vector<256x4xf32>, vector<4x8xf32>, vector<256x8xf32> -> vector<256x8xf32>
      %77 = arith.addf %71, %76 : vector<256x8xf32>
      %78 = vector.extract_strided_slice %34 {offsets = [2, 1, 0], sizes = [16, 16, 4], strides = [1, 1, 1]} : vector<18x18x4xf32> to vector<16x16x4xf32>
      %79 = vector.shape_cast %78 : vector<16x16x4xf32> to vector<256x4xf32>
      %c7 = arith.constant 7 : index
      %c0_66 = arith.constant 0 : index
      %c0_67 = arith.constant 0 : index
      %80 = vector.load %arg3[%c7, %c0_66, %c0_67] : memref<9x4x8xf32, #tpu.memory_space<vmem>>, vector<1x4x8xf32>
      %81 = vector.shape_cast %80 : vector<1x4x8xf32> to vector<4x8xf32>
      %cst_68 = arith.constant dense<0.000000e+00> : vector<256x8xf32>
      %82 = tpu.matmul %79, %81, %cst_68 {dimension_numbers = #tpu.dot_dimension_numbers<[1], [0], [0], [1], [0, 0, 1, 1], [], []>} : vector<256x4xf32>, vector<4x8xf32>, vector<256x8xf32> -> vector<256x8xf32>
      %83 = arith.addf %77, %82 : vector<256x8xf32>
      %84 = vector.extract_strided_slice %34 {offsets = [2, 2, 0], sizes = [16, 16, 4], strides = [1, 1, 1]} : vector<18x18x4xf32> to vector<16x16x4xf32>
      %85 = vector.shape_cast %84 : vector<16x16x4xf32> to vector<256x4xf32>
      %c8 = arith.constant 8 : index
      %c0_69 = arith.constant 0 : index
      %c0_70 = arith.constant 0 : index
      %86 = vector.load %arg3[%c8, %c0_69, %c0_70] : memref<9x4x8xf32, #tpu.memory_space<vmem>>, vector<1x4x8xf32>
      %87 = vector.shape_cast %86 : vector<1x4x8xf32> to vector<4x8xf32>
      %cst_71 = arith.constant dense<0.000000e+00> : vector<256x8xf32>
      %88 = tpu.matmul %85, %87, %cst_71 {dimension_numbers = #tpu.dot_dimension_numbers<[1], [0], [0], [1], [0, 0, 1, 1], [], []>} : vector<256x4xf32>, vector<4x8xf32>, vector<256x8xf32> -> vector<256x8xf32>
      %89 = arith.addf %83, %88 : vector<256x8xf32>
      %c0_72 = arith.constant 0 : index
      %c0_73 = arith.constant 0 : index
      %90 = vector.load %arg4[%c0_72, %c0_73] : memref<1x8xf32, #tpu.memory_space<vmem>>, vector<1x8xf32>
      %91 = vector.broadcast %90 : vector<1x8xf32> to vector<256x8xf32>
      %92 = arith.addf %89, %91 : vector<256x8xf32>
      %cst_74 = arith.constant 0.000000e+00 : f32
      %93 = vector.broadcast %cst_74 : f32 to vector<256x8xf32>
      %94 = arith.maximumf %92, %93 : vector<256x8xf32>
      %c0_75 = arith.constant 0 : index
      %c0_76 = arith.constant 0 : index
      %95 = vector.load %arg5[%c0_75, %c0_76] : memref<8x4xf32, #tpu.memory_space<vmem>>, vector<8x4xf32>
      %cst_77 = arith.constant dense<0.000000e+00> : vector<256x4xf32>
      %96 = tpu.matmul %94, %95, %cst_77 {dimension_numbers = #tpu.dot_dimension_numbers<[1], [0], [0], [1], [0, 0, 1, 1], [], []>} : vector<256x8xf32>, vector<8x4xf32>, vector<256x4xf32> -> vector<256x4xf32>
      %c0_78 = arith.constant 0 : index
      %c0_79 = arith.constant 0 : index
      %97 = vector.load %arg6[%c0_78, %c0_79] : memref<1x4xf32, #tpu.memory_space<vmem>>, vector<1x4xf32>
      %98 = vector.broadcast %97 : vector<1x4xf32> to vector<256x4xf32>
      %99 = arith.addf %96, %98 : vector<256x4xf32>
      %100 = vector.shape_cast %99 : vector<256x4xf32> to vector<16x16x4xf32>
      %101 = vector.extract_strided_slice %100 {offsets = [0, 0, 0], sizes = [1, 16, 4], strides = [1, 1, 1]} : vector<16x16x4xf32> to vector<1x16x4xf32>
      %102 = vector.shape_cast %101 : vector<1x16x4xf32> to vector<16x4xf32>
      %103 = tpu.transpose %102, [1, 0] : vector<16x4xf32> -> vector<4x16xf32>
      %c0_80 = arith.constant 0 : index
      %c0_81 = arith.constant 0 : index
      %c0_82 = arith.constant 0 : index
      %104 = vector.load %arg10[%c0_80, %c0_81, %c0_82] : memref<4x16x16xf32, #tpu.memory_space<vmem>>, vector<4x1x16xf32>
      %105 = vector.shape_cast %104 : vector<4x1x16xf32> to vector<4x16xf32>
      %106 = vector.shape_cast %103 : vector<4x16xf32> to vector<4x1x16xf32>
      tpu.vector_store %arg10[%c0_80, %c0_81, %c0_82], %106 {strides = array<i32>} : memref<4x16x16xf32, #tpu.memory_space<vmem>>, vector<4x1x16xf32>,
      %107 = vector.extract_strided_slice %100 {offsets = [1, 0, 0], sizes = [1, 16, 4], strides = [1, 1, 1]} : vector<16x16x4xf32> to vector<1x16x4xf32>
      %108 = vector.shape_cast %107 : vector<1x16x4xf32> to vector<16x4xf32>
      %109 = tpu.transpose %108, [1, 0] : vector<16x4xf32> -> vector<4x16xf32>
      %c0_83 = arith.constant 0 : index
      %c1_84 = arith.constant 1 : index
      %c0_85 = arith.constant 0 : index
      %110 = vector.load %arg10[%c0_83, %c1_84, %c0_85] : memref<4x16x16xf32, #tpu.memory_space<vmem>>, vector<4x1x16xf32>
      %111 = vector.shape_cast %110 : vector<4x1x16xf32> to vector<4x16xf32>
      %112 = vector.shape_cast %109 : vector<4x16xf32> to vector<4x1x16xf32>
      tpu.vector_store %arg10[%c0_83, %c1_84, %c0_85], %112 {strides = array<i32>} : memref<4x16x16xf32, #tpu.memory_space<vmem>>, vector<4x1x16xf32>,
      %113 = vector.extract_strided_slice %100 {offsets = [2, 0, 0], sizes = [1, 16, 4], strides = [1, 1, 1]} : vector<16x16x4xf32> to vector<1x16x4xf32>
      %114 = vector.shape_cast %113 : vector<1x16x4xf32> to vector<16x4xf32>
      %115 = tpu.transpose %114, [1, 0] : vector<16x4xf32> -> vector<4x16xf32>
      %c0_86 = arith.constant 0 : index
      %c2_87 = arith.constant 2 : index
      %c0_88 = arith.constant 0 : index
      %116 = vector.load %arg10[%c0_86, %c2_87, %c0_88] : memref<4x16x16xf32, #tpu.memory_space<vmem>>, vector<4x1x16xf32>
      %117 = vector.shape_cast %116 : vector<4x1x16xf32> to vector<4x16xf32>
      %118 = vector.shape_cast %115 : vector<4x16xf32> to vector<4x1x16xf32>
      tpu.vector_store %arg10[%c0_86, %c2_87, %c0_88], %118 {strides = array<i32>} : memref<4x16x16xf32, #tpu.memory_space<vmem>>, vector<4x1x16xf32>,
      %119 = vector.extract_strided_slice %100 {offsets = [3, 0, 0], sizes = [1, 16, 4], strides = [1, 1, 1]} : vector<16x16x4xf32> to vector<1x16x4xf32>
      %120 = vector.shape_cast %119 : vector<1x16x4xf32> to vector<16x4xf32>
      %121 = tpu.transpose %120, [1, 0] : vector<16x4xf32> -> vector<4x16xf32>
      %c0_89 = arith.constant 0 : index
      %c3_90 = arith.constant 3 : index
      %c0_91 = arith.constant 0 : index
      %122 = vector.load %arg10[%c0_89, %c3_90, %c0_91] : memref<4x16x16xf32, #tpu.memory_space<vmem>>, vector<4x1x16xf32>
      %123 = vector.shape_cast %122 : vector<4x1x16xf32> to vector<4x16xf32>
      %124 = vector.shape_cast %121 : vector<4x16xf32> to vector<4x1x16xf32>
      tpu.vector_store %arg10[%c0_89, %c3_90, %c0_91], %124 {strides = array<i32>} : memref<4x16x16xf32, #tpu.memory_space<vmem>>, vector<4x1x16xf32>,
      %125 = vector.extract_strided_slice %100 {offsets = [4, 0, 0], sizes = [1, 16, 4], strides = [1, 1, 1]} : vector<16x16x4xf32> to vector<1x16x4xf32>
      %126 = vector.shape_cast %125 : vector<1x16x4xf32> to vector<16x4xf32>
      %127 = tpu.transpose %126, [1, 0] : vector<16x4xf32> -> vector<4x16xf32>
      %c0_92 = arith.constant 0 : index
      %c4_93 = arith.constant 4 : index
      %c0_94 = arith.constant 0 : index
      %128 = vector.load %arg10[%c0_92, %c4_93, %c0_94] : memref<4x16x16xf32, #tpu.memory_space<vmem>>, vector<4x1x16xf32>
      %129 = vector.shape_cast %128 : vector<4x1x16xf32> to vector<4x16xf32>
      %130 = vector.shape_cast %127 : vector<4x16xf32> to vector<4x1x16xf32>
      tpu.vector_store %arg10[%c0_92, %c4_93, %c0_94], %130 {strides = array<i32>} : memref<4x16x16xf32, #tpu.memory_space<vmem>>, vector<4x1x16xf32>,
      %131 = vector.extract_strided_slice %100 {offsets = [5, 0, 0], sizes = [1, 16, 4], strides = [1, 1, 1]} : vector<16x16x4xf32> to vector<1x16x4xf32>
      %132 = vector.shape_cast %131 : vector<1x16x4xf32> to vector<16x4xf32>
      %133 = tpu.transpose %132, [1, 0] : vector<16x4xf32> -> vector<4x16xf32>
      %c0_95 = arith.constant 0 : index
      %c5_96 = arith.constant 5 : index
      %c0_97 = arith.constant 0 : index
      %134 = vector.load %arg10[%c0_95, %c5_96, %c0_97] : memref<4x16x16xf32, #tpu.memory_space<vmem>>, vector<4x1x16xf32>
      %135 = vector.shape_cast %134 : vector<4x1x16xf32> to vector<4x16xf32>
      %136 = vector.shape_cast %133 : vector<4x16xf32> to vector<4x1x16xf32>
      tpu.vector_store %arg10[%c0_95, %c5_96, %c0_97], %136 {strides = array<i32>} : memref<4x16x16xf32, #tpu.memory_space<vmem>>, vector<4x1x16xf32>,
      %137 = vector.extract_strided_slice %100 {offsets = [6, 0, 0], sizes = [1, 16, 4], strides = [1, 1, 1]} : vector<16x16x4xf32> to vector<1x16x4xf32>
      %138 = vector.shape_cast %137 : vector<1x16x4xf32> to vector<16x4xf32>
      %139 = tpu.transpose %138, [1, 0] : vector<16x4xf32> -> vector<4x16xf32>
      %c0_98 = arith.constant 0 : index
      %c6_99 = arith.constant 6 : index
      %c0_100 = arith.constant 0 : index
      %140 = vector.load %arg10[%c0_98, %c6_99, %c0_100] : memref<4x16x16xf32, #tpu.memory_space<vmem>>, vector<4x1x16xf32>
      %141 = vector.shape_cast %140 : vector<4x1x16xf32> to vector<4x16xf32>
      %142 = vector.shape_cast %139 : vector<4x16xf32> to vector<4x1x16xf32>
      tpu.vector_store %arg10[%c0_98, %c6_99, %c0_100], %142 {strides = array<i32>} : memref<4x16x16xf32, #tpu.memory_space<vmem>>, vector<4x1x16xf32>,
      %143 = vector.extract_strided_slice %100 {offsets = [7, 0, 0], sizes = [1, 16, 4], strides = [1, 1, 1]} : vector<16x16x4xf32> to vector<1x16x4xf32>
      %144 = vector.shape_cast %143 : vector<1x16x4xf32> to vector<16x4xf32>
      %145 = tpu.transpose %144, [1, 0] : vector<16x4xf32> -> vector<4x16xf32>
      %c0_101 = arith.constant 0 : index
      %c7_102 = arith.constant 7 : index
      %c0_103 = arith.constant 0 : index
      %146 = vector.load %arg10[%c0_101, %c7_102, %c0_103] : memref<4x16x16xf32, #tpu.memory_space<vmem>>, vector<4x1x16xf32>
      %147 = vector.shape_cast %146 : vector<4x1x16xf32> to vector<4x16xf32>
      %148 = vector.shape_cast %145 : vector<4x16xf32> to vector<4x1x16xf32>
      tpu.vector_store %arg10[%c0_101, %c7_102, %c0_103], %148 {strides = array<i32>} : memref<4x16x16xf32, #tpu.memory_space<vmem>>, vector<4x1x16xf32>,
      %149 = vector.extract_strided_slice %100 {offsets = [8, 0, 0], sizes = [1, 16, 4], strides = [1, 1, 1]} : vector<16x16x4xf32> to vector<1x16x4xf32>
      %150 = vector.shape_cast %149 : vector<1x16x4xf32> to vector<16x4xf32>
      %151 = tpu.transpose %150, [1, 0] : vector<16x4xf32> -> vector<4x16xf32>
      %c0_104 = arith.constant 0 : index
      %c8_105 = arith.constant 8 : index
      %c0_106 = arith.constant 0 : index
      %152 = vector.load %arg10[%c0_104, %c8_105, %c0_106] : memref<4x16x16xf32, #tpu.memory_space<vmem>>, vector<4x1x16xf32>
      %153 = vector.shape_cast %152 : vector<4x1x16xf32> to vector<4x16xf32>
      %154 = vector.shape_cast %151 : vector<4x16xf32> to vector<4x1x16xf32>
      tpu.vector_store %arg10[%c0_104, %c8_105, %c0_106], %154 {strides = array<i32>} : memref<4x16x16xf32, #tpu.memory_space<vmem>>, vector<4x1x16xf32>,
      %155 = vector.extract_strided_slice %100 {offsets = [9, 0, 0], sizes = [1, 16, 4], strides = [1, 1, 1]} : vector<16x16x4xf32> to vector<1x16x4xf32>
      %156 = vector.shape_cast %155 : vector<1x16x4xf32> to vector<16x4xf32>
      %157 = tpu.transpose %156, [1, 0] : vector<16x4xf32> -> vector<4x16xf32>
      %c0_107 = arith.constant 0 : index
      %c9 = arith.constant 9 : index
      %c0_108 = arith.constant 0 : index
      %158 = vector.load %arg10[%c0_107, %c9, %c0_108] : memref<4x16x16xf32, #tpu.memory_space<vmem>>, vector<4x1x16xf32>
      %159 = vector.shape_cast %158 : vector<4x1x16xf32> to vector<4x16xf32>
      %160 = vector.shape_cast %157 : vector<4x16xf32> to vector<4x1x16xf32>
      tpu.vector_store %arg10[%c0_107, %c9, %c0_108], %160 {strides = array<i32>} : memref<4x16x16xf32, #tpu.memory_space<vmem>>, vector<4x1x16xf32>,
      %161 = vector.extract_strided_slice %100 {offsets = [10, 0, 0], sizes = [1, 16, 4], strides = [1, 1, 1]} : vector<16x16x4xf32> to vector<1x16x4xf32>
      %162 = vector.shape_cast %161 : vector<1x16x4xf32> to vector<16x4xf32>
      %163 = tpu.transpose %162, [1, 0] : vector<16x4xf32> -> vector<4x16xf32>
      %c0_109 = arith.constant 0 : index
      %c10 = arith.constant 10 : index
      %c0_110 = arith.constant 0 : index
      %164 = vector.load %arg10[%c0_109, %c10, %c0_110] : memref<4x16x16xf32, #tpu.memory_space<vmem>>, vector<4x1x16xf32>
      %165 = vector.shape_cast %164 : vector<4x1x16xf32> to vector<4x16xf32>
      %166 = vector.shape_cast %163 : vector<4x16xf32> to vector<4x1x16xf32>
      tpu.vector_store %arg10[%c0_109, %c10, %c0_110], %166 {strides = array<i32>} : memref<4x16x16xf32, #tpu.memory_space<vmem>>, vector<4x1x16xf32>,
      %167 = vector.extract_strided_slice %100 {offsets = [11, 0, 0], sizes = [1, 16, 4], strides = [1, 1, 1]} : vector<16x16x4xf32> to vector<1x16x4xf32>
      %168 = vector.shape_cast %167 : vector<1x16x4xf32> to vector<16x4xf32>
      %169 = tpu.transpose %168, [1, 0] : vector<16x4xf32> -> vector<4x16xf32>
      %c0_111 = arith.constant 0 : index
      %c11 = arith.constant 11 : index
      %c0_112 = arith.constant 0 : index
      %170 = vector.load %arg10[%c0_111, %c11, %c0_112] : memref<4x16x16xf32, #tpu.memory_space<vmem>>, vector<4x1x16xf32>
      %171 = vector.shape_cast %170 : vector<4x1x16xf32> to vector<4x16xf32>
      %172 = vector.shape_cast %169 : vector<4x16xf32> to vector<4x1x16xf32>
      tpu.vector_store %arg10[%c0_111, %c11, %c0_112], %172 {strides = array<i32>} : memref<4x16x16xf32, #tpu.memory_space<vmem>>, vector<4x1x16xf32>,
      %173 = vector.extract_strided_slice %100 {offsets = [12, 0, 0], sizes = [1, 16, 4], strides = [1, 1, 1]} : vector<16x16x4xf32> to vector<1x16x4xf32>
      %174 = vector.shape_cast %173 : vector<1x16x4xf32> to vector<16x4xf32>
      %175 = tpu.transpose %174, [1, 0] : vector<16x4xf32> -> vector<4x16xf32>
      %c0_113 = arith.constant 0 : index
      %c12 = arith.constant 12 : index
      %c0_114 = arith.constant 0 : index
      %176 = vector.load %arg10[%c0_113, %c12, %c0_114] : memref<4x16x16xf32, #tpu.memory_space<vmem>>, vector<4x1x16xf32>
      %177 = vector.shape_cast %176 : vector<4x1x16xf32> to vector<4x16xf32>
      %178 = vector.shape_cast %175 : vector<4x16xf32> to vector<4x1x16xf32>
      tpu.vector_store %arg10[%c0_113, %c12, %c0_114], %178 {strides = array<i32>} : memref<4x16x16xf32, #tpu.memory_space<vmem>>, vector<4x1x16xf32>,
      %179 = vector.extract_strided_slice %100 {offsets = [13, 0, 0], sizes = [1, 16, 4], strides = [1, 1, 1]} : vector<16x16x4xf32> to vector<1x16x4xf32>
      %180 = vector.shape_cast %179 : vector<1x16x4xf32> to vector<16x4xf32>
      %181 = tpu.transpose %180, [1, 0] : vector<16x4xf32> -> vector<4x16xf32>
      %c0_115 = arith.constant 0 : index
      %c13 = arith.constant 13 : index
      %c0_116 = arith.constant 0 : index
      %182 = vector.load %arg10[%c0_115, %c13, %c0_116] : memref<4x16x16xf32, #tpu.memory_space<vmem>>, vector<4x1x16xf32>
      %183 = vector.shape_cast %182 : vector<4x1x16xf32> to vector<4x16xf32>
      %184 = vector.shape_cast %181 : vector<4x16xf32> to vector<4x1x16xf32>
      tpu.vector_store %arg10[%c0_115, %c13, %c0_116], %184 {strides = array<i32>} : memref<4x16x16xf32, #tpu.memory_space<vmem>>, vector<4x1x16xf32>,
      %185 = vector.extract_strided_slice %100 {offsets = [14, 0, 0], sizes = [1, 16, 4], strides = [1, 1, 1]} : vector<16x16x4xf32> to vector<1x16x4xf32>
      %186 = vector.shape_cast %185 : vector<1x16x4xf32> to vector<16x4xf32>
      %187 = tpu.transpose %186, [1, 0] : vector<16x4xf32> -> vector<4x16xf32>
      %c0_117 = arith.constant 0 : index
      %c14 = arith.constant 14 : index
      %c0_118 = arith.constant 0 : index
      %188 = vector.load %arg10[%c0_117, %c14, %c0_118] : memref<4x16x16xf32, #tpu.memory_space<vmem>>, vector<4x1x16xf32>
      %189 = vector.shape_cast %188 : vector<4x1x16xf32> to vector<4x16xf32>
      %190 = vector.shape_cast %187 : vector<4x16xf32> to vector<4x1x16xf32>
      tpu.vector_store %arg10[%c0_117, %c14, %c0_118], %190 {strides = array<i32>} : memref<4x16x16xf32, #tpu.memory_space<vmem>>, vector<4x1x16xf32>,
      %191 = vector.extract_strided_slice %100 {offsets = [15, 0, 0], sizes = [1, 16, 4], strides = [1, 1, 1]} : vector<16x16x4xf32> to vector<1x16x4xf32>
      %192 = vector.shape_cast %191 : vector<1x16x4xf32> to vector<16x4xf32>
      %193 = tpu.transpose %192, [1, 0] : vector<16x4xf32> -> vector<4x16xf32>
      %c0_119 = arith.constant 0 : index
      %c15 = arith.constant 15 : index
      %c0_120 = arith.constant 0 : index
      %194 = vector.load %arg10[%c0_119, %c15, %c0_120] : memref<4x16x16xf32, #tpu.memory_space<vmem>>, vector<4x1x16xf32>
      %195 = vector.shape_cast %194 : vector<4x1x16xf32> to vector<4x16xf32>
      %196 = vector.shape_cast %193 : vector<4x16xf32> to vector<4x1x16xf32>
      tpu.vector_store %arg10[%c0_119, %c15, %c0_120], %196 {strides = array<i32>} : memref<4x16x16xf32, #tpu.memory_space<vmem>>, vector<4x1x16xf32>,
    } else {
    }
    %c0 = arith.constant 0 : index
    %c0_1 = arith.constant 0 : index
    %3 = vector.load %arg7[%c0, %c0_1] : memref<32x16xf32, #tpu.memory_space<vmem>>, vector<32x16xf32>
    %c0_2 = arith.constant 0 : index
    %c0_3 = arith.constant 0 : index
    %4 = vector.load %arg8[%c0_2, %c0_3] : memref<16x64xf32, #tpu.memory_space<vmem>>, vector<16x64xf32>
    %c0_4 = arith.constant 0 : index
    %c0_5 = arith.constant 0 : index
    %c0_6 = arith.constant 0 : index
    %5 = vector.load %arg10[%c0_4, %c0_5, %c0_6] : memref<4x16x16xf32, #tpu.memory_space<vmem>>, vector<1x16x16xf32>
    %6 = vector.shape_cast %5 : vector<1x16x16xf32> to vector<16x16xf32>
    %cst = arith.constant dense<0.000000e+00> : vector<32x16xf32>
    %7 = tpu.matmul %3, %6, %cst {dimension_numbers = #tpu.dot_dimension_numbers<[1], [0], [0], [1], [0, 0, 1, 1], [], []>} : vector<32x16xf32>, vector<16x16xf32>, vector<32x16xf32> -> vector<32x16xf32>
    %cst_7 = arith.constant dense<0.000000e+00> : vector<32x64xf32>
    %8 = tpu.matmul %7, %4, %cst_7 {dimension_numbers = #tpu.dot_dimension_numbers<[1], [0], [0], [1], [0, 0, 1, 1], [], []>} : vector<32x16xf32>, vector<16x64xf32>, vector<32x64xf32> -> vector<32x64xf32>
    %c0_8 = arith.constant 0 : index
    %c0_9 = arith.constant 0 : index
    %c0_10 = arith.constant 0 : index
    %c0_11 = arith.constant 0 : index
    %9 = vector.load %arg9[%c0_8, %c0_9, %c0_10, %c0_11] : memref<1x4x32x64xf32, #tpu.memory_space<vmem>>, vector<1x1x32x64xf32>
    %10 = vector.shape_cast %9 : vector<1x1x32x64xf32> to vector<32x64xf32>
    %11 = vector.shape_cast %8 : vector<32x64xf32> to vector<1x1x32x64xf32>
    tpu.vector_store %arg9[%c0_8, %c0_9, %c0_10, %c0_11], %11 {strides = array<i32>} : memref<1x4x32x64xf32, #tpu.memory_space<vmem>>, vector<1x1x32x64xf32>,
    %c1 = arith.constant 1 : index
    %c0_12 = arith.constant 0 : index
    %c0_13 = arith.constant 0 : index
    %12 = vector.load %arg10[%c1, %c0_12, %c0_13] : memref<4x16x16xf32, #tpu.memory_space<vmem>>, vector<1x16x16xf32>
    %13 = vector.shape_cast %12 : vector<1x16x16xf32> to vector<16x16xf32>
    %cst_14 = arith.constant dense<0.000000e+00> : vector<32x16xf32>
    %14 = tpu.matmul %3, %13, %cst_14 {dimension_numbers = #tpu.dot_dimension_numbers<[1], [0], [0], [1], [0, 0, 1, 1], [], []>} : vector<32x16xf32>, vector<16x16xf32>, vector<32x16xf32> -> vector<32x16xf32>
    %cst_15 = arith.constant dense<0.000000e+00> : vector<32x64xf32>
    %15 = tpu.matmul %14, %4, %cst_15 {dimension_numbers = #tpu.dot_dimension_numbers<[1], [0], [0], [1], [0, 0, 1, 1], [], []>} : vector<32x16xf32>, vector<16x64xf32>, vector<32x64xf32> -> vector<32x64xf32>
    %c0_16 = arith.constant 0 : index
    %c1_17 = arith.constant 1 : index
    %c0_18 = arith.constant 0 : index
    %c0_19 = arith.constant 0 : index
    %16 = vector.load %arg9[%c0_16, %c1_17, %c0_18, %c0_19] : memref<1x4x32x64xf32, #tpu.memory_space<vmem>>, vector<1x1x32x64xf32>
    %17 = vector.shape_cast %16 : vector<1x1x32x64xf32> to vector<32x64xf32>
    %18 = vector.shape_cast %15 : vector<32x64xf32> to vector<1x1x32x64xf32>
    tpu.vector_store %arg9[%c0_16, %c1_17, %c0_18, %c0_19], %18 {strides = array<i32>} : memref<1x4x32x64xf32, #tpu.memory_space<vmem>>, vector<1x1x32x64xf32>,
    %c2 = arith.constant 2 : index
    %c0_20 = arith.constant 0 : index
    %c0_21 = arith.constant 0 : index
    %19 = vector.load %arg10[%c2, %c0_20, %c0_21] : memref<4x16x16xf32, #tpu.memory_space<vmem>>, vector<1x16x16xf32>
    %20 = vector.shape_cast %19 : vector<1x16x16xf32> to vector<16x16xf32>
    %cst_22 = arith.constant dense<0.000000e+00> : vector<32x16xf32>
    %21 = tpu.matmul %3, %20, %cst_22 {dimension_numbers = #tpu.dot_dimension_numbers<[1], [0], [0], [1], [0, 0, 1, 1], [], []>} : vector<32x16xf32>, vector<16x16xf32>, vector<32x16xf32> -> vector<32x16xf32>
    %cst_23 = arith.constant dense<0.000000e+00> : vector<32x64xf32>
    %22 = tpu.matmul %21, %4, %cst_23 {dimension_numbers = #tpu.dot_dimension_numbers<[1], [0], [0], [1], [0, 0, 1, 1], [], []>} : vector<32x16xf32>, vector<16x64xf32>, vector<32x64xf32> -> vector<32x64xf32>
    %c0_24 = arith.constant 0 : index
    %c2_25 = arith.constant 2 : index
    %c0_26 = arith.constant 0 : index
    %c0_27 = arith.constant 0 : index
    %23 = vector.load %arg9[%c0_24, %c2_25, %c0_26, %c0_27] : memref<1x4x32x64xf32, #tpu.memory_space<vmem>>, vector<1x1x32x64xf32>
    %24 = vector.shape_cast %23 : vector<1x1x32x64xf32> to vector<32x64xf32>
    %25 = vector.shape_cast %22 : vector<32x64xf32> to vector<1x1x32x64xf32>
    tpu.vector_store %arg9[%c0_24, %c2_25, %c0_26, %c0_27], %25 {strides = array<i32>} : memref<1x4x32x64xf32, #tpu.memory_space<vmem>>, vector<1x1x32x64xf32>,
    %c3 = arith.constant 3 : index
    %c0_28 = arith.constant 0 : index
    %c0_29 = arith.constant 0 : index
    %26 = vector.load %arg10[%c3, %c0_28, %c0_29] : memref<4x16x16xf32, #tpu.memory_space<vmem>>, vector<1x16x16xf32>
    %27 = vector.shape_cast %26 : vector<1x16x16xf32> to vector<16x16xf32>
    %cst_30 = arith.constant dense<0.000000e+00> : vector<32x16xf32>
    %28 = tpu.matmul %3, %27, %cst_30 {dimension_numbers = #tpu.dot_dimension_numbers<[1], [0], [0], [1], [0, 0, 1, 1], [], []>} : vector<32x16xf32>, vector<16x16xf32>, vector<32x16xf32> -> vector<32x16xf32>
    %cst_31 = arith.constant dense<0.000000e+00> : vector<32x64xf32>
    %29 = tpu.matmul %28, %4, %cst_31 {dimension_numbers = #tpu.dot_dimension_numbers<[1], [0], [0], [1], [0, 0, 1, 1], [], []>} : vector<32x16xf32>, vector<16x64xf32>, vector<32x64xf32> -> vector<32x64xf32>
    %c0_32 = arith.constant 0 : index
    %c3_33 = arith.constant 3 : index
    %c0_34 = arith.constant 0 : index
    %c0_35 = arith.constant 0 : index
    %30 = vector.load %arg9[%c0_32, %c3_33, %c0_34, %c0_35] : memref<1x4x32x64xf32, #tpu.memory_space<vmem>>, vector<1x1x32x64xf32>
    %31 = vector.shape_cast %30 : vector<1x1x32x64xf32> to vector<32x64xf32>
    %32 = vector.shape_cast %29 : vector<32x64xf32> to vector<1x1x32x64xf32>
    tpu.vector_store %arg9[%c0_32, %c3_33, %c0_34, %c0_35], %32 {strides = array<i32>} : memref<1x4x32x64xf32, #tpu.memory_space<vmem>>, vector<1x1x32x64xf32>,
    return
  }
  func.func @transform_0(%arg0: i32, %arg1: i32) -> (i32, i32, i32, i32) {
    %c0_i32 = arith.constant 0 : i32
    %c0_i32_0 = arith.constant 0 : i32
    %c0_i32_1 = arith.constant 0 : i32
    %c0_i32_2 = arith.constant 0 : i32
    return %arg0, %c0_i32, %c0_i32_0, %c0_i32_1 : i32, i32, i32, i32
  }
  func.func @transform_1(%arg0: i32, %arg1: i32) -> (i32, i32, i32) {
    %c0_i32 = arith.constant 0 : i32
    %c0_i32_0 = arith.constant 0 : i32
    %c0_i32_1 = arith.constant 0 : i32
    %c0_i32_2 = arith.constant 0 : i32
    return %c0_i32, %c0_i32_0, %c0_i32_1 : i32, i32, i32
  }
  func.func @transform_2(%arg0: i32, %arg1: i32) -> (i32, i32) {
    %c0_i32 = arith.constant 0 : i32
    %c0_i32_0 = arith.constant 0 : i32
    %c0_i32_1 = arith.constant 0 : i32
    return %c0_i32, %c0_i32_0 : i32, i32
  }
  func.func @transform_3(%arg0: i32, %arg1: i32) -> (i32, i32) {
    %c0_i32 = arith.constant 0 : i32
    %c0_i32_0 = arith.constant 0 : i32
    %c0_i32_1 = arith.constant 0 : i32
    return %c0_i32, %c0_i32_0 : i32, i32
  }
  func.func @transform_4(%arg0: i32, %arg1: i32) -> (i32, i32) {
    %c0_i32 = arith.constant 0 : i32
    %c0_i32_0 = arith.constant 0 : i32
    %c0_i32_1 = arith.constant 0 : i32
    return %c0_i32, %c0_i32_0 : i32, i32
  }
  func.func @transform_5(%arg0: i32, %arg1: i32) -> (i32, i32) {
    %c0_i32 = arith.constant 0 : i32
    %c0_i32_0 = arith.constant 0 : i32
    return %arg1, %c0_i32 : i32, i32
  }
  func.func @transform_6(%arg0: i32, %arg1: i32) -> (i32, i32) {
    %c0_i32 = arith.constant 0 : i32
    %c0_i32_0 = arith.constant 0 : i32
    %c0_i32_1 = arith.constant 0 : i32
    return %c0_i32, %c0_i32_0 : i32, i32
  }
  func.func @transform_7(%arg0: i32, %arg1: i32) -> (i32, i32, i32, i32) {
    %c0_i32 = arith.constant 0 : i32
    %c0_i32_0 = arith.constant 0 : i32
    %c0_i32_1 = arith.constant 0 : i32
    return %arg0, %c0_i32, %arg1, %c0_i32_0 : i32, i32, i32, i32
  }
}

</mosaic_0001>

<llo_original>
// kernel: tpu_custom_call.1
$region0: #{tpu_custom_call.1}
  #allocation0 [shape = 'u32[]', space=smem, size = 0x4, offset = 0x4, fixed_abs, tag = 'smem constant byte address 0x4 - core index']
  #allocation1 [shape = 'u32[144,128]{1,0:T(1,128)}', space=vmem, size = 0x12000, scoped, tag = 'internal scratch']
  #allocation2 [shape = 'f32[4,16,16]{2,1,0:T(8,128)}', space=vmem, size = 0x8000, scoped, tag = 'scratch operand']
  #allocation5 [shape = 's32[]', space=sflag, size = 0x4, offset = 0, fixed_abs, tag = 'sflag constant byte address 0x0 - dummy sync flag']
  %s0 = inlined_call_operand.vmem [shape: f32[2,18,18,4], index: 0, kind: input, shape index: {}]
  %s1 = inlined_call_operand.vmem [shape: f32[9,4,8], index: 1, kind: input, shape index: {}]
  %s2 = inlined_call_operand.vmem [shape: f32[1,8], index: 2, kind: input, shape index: {}]
  %s3 = inlined_call_operand.vmem [shape: f32[8,4], index: 3, kind: input, shape index: {}]
  %s4 = inlined_call_operand.vmem [shape: f32[1,4], index: 4, kind: input, shape index: {}]
  %s5 = inlined_call_operand.vmem [shape: f32[64,16], index: 5, kind: input, shape index: {}]
  %s6 = inlined_call_operand.vmem [shape: f32[16,64], index: 6, kind: input, shape index: {}]
  %s7 = inlined_call_operand.hbm [shape: f32[2,4,64,64], index: 7, kind: output, shape index: {}]
  %s8 = sld [smem:[#allocation0]]
  $region65: #{tpu_custom_call.1} parent=0
    _
  %s10 = ssub.s32 1, %s8
  %s11 = scalar_select 0, %s10, %s8
  $region1: #{tpu_custom_call.1} parent=0
    #allocation3 [shape = 'u8[131072]{0}', space=vmem, size = 0x20000, scoped, tag = 'output window, operand 0']
    #allocation4 [shape = 's32[2]{0}', space=sflag, size = 0x8, scoped, tag = 'scoped memory for tpu_custom_call.1']
    %12 = vsyncpa [#allocation4], 0
    %s13 = scalar_lea.sflag [#allocation4], 1
    %14 = vsyncpa %s13, 0
    loop: start=0, step=1, limit=6
    $region2: #{tpu_custom_call.1} parent=1 // loop_pre_header
      _
    $region3: #{tpu_custom_call.1} parent=1 // loop_header
      %s16 = sphi 0, %s20
      %p17 = scmp.ge.s32.totalorder %s16, 6
      %s23 = sphi 0, %s35
      %s24 = sphi 0, %s31
      %s25 = sphi 0, %s23
      %s26 = sphi 0, %s24
      %s27 = sphi 0, %s25
      %s28 = sphi 0, %s26
      %s38 = sphi 0, %s40
      %s41 = sphi 0, %s38
      %s42 = sphi 0, %s41
      %s58 = sphi 0, %s42
      %s62 = sphi 0, %s62
      %s64 = sphi 0, %s62
      %s65 = sphi 0, %s64
      %s79 = sphi 0, %s65
      %s83 = sphi 0, %s83
      %s85 = sphi 0, %s83
      %s86 = sphi 0, %s85
      %s100 = sphi 0, %s86
      %s104 = sphi 0, %s104
      %s106 = sphi 0, %s104
      %s107 = sphi 0, %s106
      %s121 = sphi 0, %s107
      %s125 = sphi 0, %s125
      %s127 = sphi 0, %s125
      %s128 = sphi 0, %s127
      %s142 = sphi 0, %s128
      %s148 = sphi 0, %s150
      %s151 = sphi 0, %s148
      %s152 = sphi 0, %s151
      %s168 = sphi 0, %s152
      %s172 = sphi 0, %s172
      %s174 = sphi 0, %s172
      %s175 = sphi 0, %s174
      %s189 = sphi 0, %s175
      %s197 = sphi 0, %s199
      %s200 = sphi 0, %s197
      %s201 = sphi 0, %s200
      %s217 = sphi 0, %s201
    $region4: #{tpu_custom_call.1} parent=1 // loop_header_branch
      %19 = sbr.rel (%p17) target = $region8
    $region5: #{tpu_custom_call.1} parent=1 // loop_body
      %s21 = ssub.s32 %s16, 1
      %s22 = ssub.s32 %s16, 2
      %s29 = sadd.s32 1, %s24
      %p30 = scmp.ge.s32.totalorder %s29, 2
      %s31 = scalar_select %p30, 0, %s29
      %s32 = sadd.s32 1, %s23
      %s33 = scalar_select %p30, %s32, %s23
      %p34 = scmp.ge.s32.totalorder %s33, 2
      %s35 = scalar_select %p34, 0, %s33
      %s36 = ssub.s32 %s23, %s35
      %p37 = scmp.eq.s32.totalorder %s36, 0
      %s39 = sadd.s32 %s38, 1
      %s40 = scalar_select %p37, %s38, %s39
      %p43 = pneg %p37
      %p44 = scmp.eq.s32.totalorder %s16, 3
      %p45 = por %p43, %p44
      %p46 = scmp.ne.s32.totalorder %s38, %s41
      %p47 = scmp.eq.s32.totalorder %s16, 0
      %p48 = por %p46, %p47
      %p49 = scmp.ne.s32.totalorder %s38, %s41
      %p50 = scmp.eq.s32.totalorder %s21, 3
      %p51 = por %p49, %p50
      %p52 = scmp.ne.s32.totalorder %s41, %s42
      %p53 = scmp.eq.s32.totalorder %s21, 0
      %p54 = por %p52, %p53
      %p55 = scmp.ne.s32.totalorder %s41, %s42
      %p56 = scmp.eq.s32.totalorder %s22, 3
      %p57 = por %p55, %p56
      %p59 = scmp.ne.s32.totalorder %s42, %s58
      %p60 = scmp.eq.s32.totalorder %s22, 0
      %p61 = por %p59, %p60
      %s63 = sadd.s32 %s62, 1
      %p66 = scmp.eq.s32.totalorder %s16, 3
      %p67 = scmp.ne.s32.totalorder %s62, %s64
      %p68 = scmp.eq.s32.totalorder %s16, 0
      %p69 = por %p67, %p68
      %p70 = scmp.ne.s32.totalorder %s62, %s64
      %p71 = scmp.eq.s32.totalorder %s21, 3
      %p72 = por %p70, %p71
      %p73 = scmp.ne.s32.totalorder %s64, %s65
      %p74 = scmp.eq.s32.totalorder %s21, 0
      %p75 = por %p73, %p74
      %p76 = scmp.ne.s32.totalorder %s64, %s65
      %p77 = scmp.eq.s32.totalorder %s22, 3
      %p78 = por %p76, %p77
      %p80 = scmp.ne.s32.totalorder %s65, %s79
      %p81 = scmp.eq.s32.totalorder %s22, 0
      %p82 = por %p80, %p81
      %s84 = sadd.s32 %s83, 1
      %p87 = scmp.eq.s32.totalorder %s16, 3
      %p88 = scmp.ne.s32.totalorder %s83, %s85
      %p89 = scmp.eq.s32.totalorder %s16, 0
      %p90 = por %p88, %p89
      %p91 = scmp.ne.s32.totalorder %s83, %s85
      %p92 = scmp.eq.s32.totalorder %s21, 3
      %p93 = por %p91, %p92
      %p94 = scmp.ne.s32.totalorder %s85, %s86
      %p95 = scmp.eq.s32.totalorder %s21, 0
      %p96 = por %p94, %p95
      %p97 = scmp.ne.s32.totalorder %s85, %s86
      %p98 = scmp.eq.s32.totalorder %s22, 3
      %p99 = por %p97, %p98
      %p101 = scmp.ne.s32.totalorder %s86, %s100
      %p102 = scmp.eq.s32.totalorder %s22, 0
      %p103 = por %p101, %p102
      %s105 = sadd.s32 %s104, 1
      %p108 = scmp.eq.s32.totalorder %s16, 3
      %p109 = scmp.ne.s32.totalorder %s104, %s106
      %p110 = scmp.eq.s32.totalorder %s16, 0
      %p111 = por %p109, %p110
      %p112 = scmp.ne.s32.totalorder %s104, %s106
      %p113 = scmp.eq.s32.totalorder %s21, 3
      %p114 = por %p112, %p113
      %p115 = scmp.ne.s32.totalorder %s106, %s107
      %p116 = scmp.eq.s32.totalorder %s21, 0
      %p117 = por %p115, %p116
      %p118 = scmp.ne.s32.totalorder %s106, %s107
      %p119 = scmp.eq.s32.totalorder %s22, 3
      %p120 = por %p118, %p119
      %p122 = scmp.ne.s32.totalorder %s107, %s121
      %p123 = scmp.eq.s32.totalorder %s22, 0
      %p124 = por %p122, %p123
      %s126 = sadd.s32 %s125, 1
      %p129 = scmp.eq.s32.totalorder %s16, 3
      %p130 = scmp.ne.s32.totalorder %s125, %s127
      %p131 = scmp.eq.s32.totalorder %s16, 0
      %p132 = por %p130, %p131
      %p133 = scmp.ne.s32.totalorder %s125, %s127
      %p134 = scmp.eq.s32.totalorder %s21, 3
      %p135 = por %p133, %p134
      %p136 = scmp.ne.s32.totalorder %s127, %s128
      %p137 = scmp.eq.s32.totalorder %s21, 0
      %p138 = por %p136, %p137
      %p139 = scmp.ne.s32.totalorder %s127, %s128
      %p140 = scmp.eq.s32.totalorder %s22, 3
      %p141 = por %p139, %p140
      %p143 = scmp.ne.s32.totalorder %s128, %s142
      %p144 = scmp.eq.s32.totalorder %s22, 0
      %p145 = por %p143, %p144
      %s146 = ssub.s32 %s24, %s31
      %p147 = scmp.eq.s32.totalorder %s146, 0
      %s149 = sadd.s32 %s148, 1
      %s150 = scalar_select %p147, %s148, %s149
      %p153 = pneg %p147
      %p154 = scmp.eq.s32.totalorder %s16, 3
      %p155 = por %p153, %p154
      %p156 = scmp.ne.s32.totalorder %s148, %s151
      %p157 = scmp.eq.s32.totalorder %s16, 0
      %p158 = por %p156, %p157
      %p159 = scmp.ne.s32.totalorder %s148, %s151
      %p160 = scmp.eq.s32.totalorder %s21, 3
      %p161 = por %p159, %p160
      %p162 = scmp.ne.s32.totalorder %s151, %s152
      %p163 = scmp.eq.s32.totalorder %s21, 0
      %p164 = por %p162, %p163
      %p165 = scmp.ne.s32.totalorder %s151, %s152
      %p166 = scmp.eq.s32.totalorder %s22, 3
      %p167 = por %p165, %p166
      %p169 = scmp.ne.s32.totalorder %s152, %s168
      %p170 = scmp.eq.s32.totalorder %s22, 0
      %p171 = por %p169, %p170
      %s173 = sadd.s32 %s172, 1
      %p176 = scmp.eq.s32.totalorder %s16, 3
      %p177 = scmp.ne.s32.totalorder %s172, %s174
      %p178 = scmp.eq.s32.totalorder %s16, 0
      %p179 = por %p177, %p178
      %p180 = scmp.ne.s32.totalorder %s172, %s174
      %p181 = scmp.eq.s32.totalorder %s21, 3
      %p182 = por %p180, %p181
      %p183 = scmp.ne.s32.totalorder %s174, %s175
      %p184 = scmp.eq.s32.totalorder %s21, 0
      %p185 = por %p183, %p184
      %p186 = scmp.ne.s32.totalorder %s174, %s175
      %p187 = scmp.eq.s32.totalorder %s22, 3
      %p188 = por %p186, %p187
      %p190 = scmp.ne.s32.totalorder %s175, %s189
      %p191 = scmp.eq.s32.totalorder %s22, 0
      %p192 = por %p190, %p191
      %s193 = ssub.s32 %s23, %s35
      %s194 = ssub.s32 %s24, %s31
      %s195 = sor.u32 %s193, %s194
      %p196 = scmp.eq.s32.totalorder %s195, 0
      %s198 = sadd.s32 %s197, 1
      %s199 = scalar_select %p196, %s197, %s198
      %p202 = pneg %p196
      %p203 = scmp.eq.s32.totalorder %s16, 3
      %p204 = por %p202, %p203
      %p205 = scmp.ne.s32.totalorder %s197, %s200
      %p206 = scmp.eq.s32.totalorder %s16, 0
      %p207 = por %p205, %p206
      %p208 = scmp.ne.s32.totalorder %s197, %s200
      %p209 = scmp.eq.s32.totalorder %s21, 3
      %p210 = por %p208, %p209
      %p211 = scmp.ne.s32.totalorder %s200, %s201
      %p212 = scmp.eq.s32.totalorder %s21, 0
      %p213 = por %p211, %p212
      %p214 = scmp.ne.s32.totalorder %s200, %s201
      %p215 = scmp.eq.s32.totalorder %s22, 3
      %p216 = por %p214, %p215
      %p218 = scmp.ne.s32.totalorder %s201, %s217
      %p219 = scmp.eq.s32.totalorder %s22, 0
      %p220 = por %p218, %p219
      %p221 = scmp.le.s32.totalorder 1, %s16
      %p222 = scmp.lt.s32.totalorder %s16, 5
      %p223 = pnand %p221, %p222
      %p224 = pneg %p223
      // Predicated region
      $region9: #{tpu_custom_call.1} parent=5 // pred_check
        _
      $region10: #{tpu_custom_call.1} parent=5 // pred_check_branch
        %226 = sbr.rel (%p223) target = $region12
      $region11: #{tpu_custom_call.1} parent=5 // pred_region
        %s227 = ssub.s32 %s16, 1
        // Predicated region
        $region13: #{tpu_custom_call.1} parent=11 // pred_check
          %p228 = pneg %p75
        $region14: #{tpu_custom_call.1} parent=11 // pred_check_branch
          %230 = sbr.rel (%p228) target = $region16
        $region15: #{tpu_custom_call.1} parent=11 // pred_region
          _
        $region16: #{tpu_custom_call.1} parent=11 // pred_fallthru
          _
        // Predicated region
        $region17: #{tpu_custom_call.1} parent=11 // pred_check
          %p231 = pneg %p96
        $region18: #{tpu_custom_call.1} parent=11 // pred_check_branch
          %233 = sbr.rel (%p231) target = $region20
        $region19: #{tpu_custom_call.1} parent=11 // pred_region
          _
        $region20: #{tpu_custom_call.1} parent=11 // pred_fallthru
          _
        // Predicated region
        $region21: #{tpu_custom_call.1} parent=11 // pred_check
          %p234 = pneg %p117
        $region22: #{tpu_custom_call.1} parent=11 // pred_check_branch
          %236 = sbr.rel (%p234) target = $region24
        $region23: #{tpu_custom_call.1} parent=11 // pred_region
          _
        $region24: #{tpu_custom_call.1} parent=11 // pred_fallthru
          _
        // Predicated region
        $region25: #{tpu_custom_call.1} parent=11 // pred_check
          %p237 = pneg %p138
        $region26: #{tpu_custom_call.1} parent=11 // pred_check_branch
          %239 = sbr.rel (%p237) target = $region28
        $region27: #{tpu_custom_call.1} parent=11 // pred_region
          _
        $region28: #{tpu_custom_call.1} parent=11 // pred_fallthru
          _
        // Predicated region
        $region29: #{tpu_custom_call.1} parent=11 // pred_check
          %p240 = pneg %p185
        $region30: #{tpu_custom_call.1} parent=11 // pred_check_branch
          %242 = sbr.rel (%p240) target = $region32
        $region31: #{tpu_custom_call.1} parent=11 // pred_region
          _
        $region32: #{tpu_custom_call.1} parent=11 // pred_fallthru
          _
      $region12: #{tpu_custom_call.1} parent=5 // pred_fallthru
        _
      %p243 = scmp.lt.s32.totalorder %s16, 4
      // Predicated region
      $region33: #{tpu_custom_call.1} parent=5 // pred_check
        %p244 = pneg %p243
      $region34: #{tpu_custom_call.1} parent=5 // pred_check_branch
        %246 = sbr.rel (%p244) target = $region36
      $region35: #{tpu_custom_call.1} parent=5 // pred_region
        // Predicated region
        $region37: #{tpu_custom_call.1} parent=35 // pred_check
          %p247 = pneg %p48
        $region38: #{tpu_custom_call.1} parent=35 // pred_check_branch
          %249 = sbr.rel (%p247) target = $region40
        $region39: #{tpu_custom_call.1} parent=35 // pred_region
          %p250 = scmp.lt.s32.totalorder %s23, 1
          %s251 = scalar_select %p250, %s23, 1
          %s252 = smul.addr %s251, 54
          %s253 = smul.addr %s252, 8
          %s254 = scalar_lea.vmem %s0, %s253
        $region40: #{tpu_custom_call.1} parent=35 // pred_fallthru
          _
        // Predicated region
        $region41: #{tpu_custom_call.1} parent=35 // pred_check
          %p255 = pneg %p158
        $region42: #{tpu_custom_call.1} parent=35 // pred_check_branch
          %257 = sbr.rel (%p255) target = $region44
        $region43: #{tpu_custom_call.1} parent=35 // pred_region
          %s258 = smul.u32 4, %s24
          %p259 = scmp.lt.s32.totalorder %s258, 7
          %s260 = scalar_select %p259, %s258, 7
          %s261 = smul.addr %s260, 8
          %s262 = scalar_lea.vmem %s5, %s261
          %s263 = smul.u32 4, %s24
        $region44: #{tpu_custom_call.1} parent=35 // pred_fallthru
          _
      $region36: #{tpu_custom_call.1} parent=5 // pred_fallthru
        _
      %p264 = scmp.le.s32.totalorder 1, %s16
      %p265 = scmp.lt.s32.totalorder %s16, 5
      %p266 = pnand %p264, %p265
      %p267 = pneg %p266
      // Predicated region
      $region45: #{tpu_custom_call.1} parent=5 // pred_check
        _
      $region46: #{tpu_custom_call.1} parent=5 // pred_check_branch
        %269 = sbr.rel (%p266) target = $region48
      $region47: #{tpu_custom_call.1} parent=5 // pred_region
        %s270 = ssub.s32 %s16, 1
        %p271 = scmp.lt.s32.totalorder %s25, 1
        %s272 = scalar_select %p271, %s25, 1
        %s273 = smul.addr %s272, 54
        %s274 = smul.addr %s273, 8
        %s275 = scalar_lea.vmem %s0, %s274
        %p276 = pneg %p54
        %p277 = pneg %p51
        %p278 = pneg %p75
        %p279 = pneg %p72
        %p280 = pneg %p96
        %p281 = pneg %p93
        %p282 = pneg %p117
        %p283 = pneg %p114
        %p284 = pneg %p138
        %p285 = pneg %p135
        %s286 = smul.u32 4, %s26
        %p287 = scmp.lt.s32.totalorder %s286, 7
        %s288 = scalar_select %p287, %s286, 7
        %s289 = smul.addr %s288, 8
        %s290 = scalar_lea.vmem %s5, %s289
        %p291 = pneg %p164
        %p292 = pneg %p161
        %p293 = pneg %p185
        %p294 = pneg %p182
        %p295 = pneg %p213
        %p296 = pneg %p210
        %s297 = sand.u32 %s200, 1
        %s298 = scalar_lea.sflag [#allocation4], %s297
        %s299 = sand.u32 %s200, 1
        %s300 = smul.addr %s299, 128
        %s301 = scalar_lea.vmem [#allocation3], %s300
        %p302 = scmp.lt.s32.totalorder %s25, 1
        %s303 = scalar_select %p302, %s25, 1
        %s304 = smul.addr %s303, 54
        %s305 = smul.addr %s304, 8
        %s306 = scalar_lea.vmem %s0, %s305
        %s307 = smul.u32 4, %s26
        %p308 = scmp.lt.s32.totalorder %s307, 7
        %s309 = scalar_select %p308, %s307, 7
        %s310 = smul.addr %s309, 8
        %s311 = scalar_lea.vmem %s5, %s310
        %s312 = smul.u32 4, %s26
        %s313 = smul.u32 4, %s26
        %p314 = scmp.eq.s32.totalorder %s26, 0
        // Predicated region
        $region49: #{tpu_custom_call.1} parent=47 // pred_check
          %p315 = pneg %p314
        $region50: #{tpu_custom_call.1} parent=47 // pred_check_branch
          %317 = sbr.rel (%p315) target = $region52
        $region51: #{tpu_custom_call.1} parent=47 // pred_region
          %v318 = vld [vmem:[%s306] sm:$0xff]
          %v319 = vld [vmem:[%s306 + $0x8] sm:$0xff]
          %v320 = vld [vmem:[%s306 + $0x10] sm:$0x3]
          %v321 = vld [vmem:[%s306 + $0x18] sm:$0xff]
          %v322 = vld [vmem:[%s306 + $0x20] sm:$0xff]
          %v323 = vld [vmem:[%s306 + $0x28] sm:$0x3]
          %v324 = vld [vmem:[%s306 + $0x30] sm:$0xff]
          %v325 = vld [vmem:[%s306 + $0x38] sm:$0xff]
          %v326 = vld [vmem:[%s306 + $0x40] sm:$0x3]
          %v327 = vld [vmem:[%s306 + $0x48] sm:$0xff]
          %v328 = vld [vmem:[%s306 + $0x50] sm:$0xff]
          %v329 = vld [vmem:[%s306 + $0x58] sm:$0x3]
          %v330 = vld [vmem:[%s306 + $0x60] sm:$0xff]
          %v331 = vld [vmem:[%s306 + $0x68] sm:$0xff]
          %v332 = vld [vmem:[%s306 + $0x70] sm:$0x3]
          %v333 = vld [vmem:[%s306 + $0x78] sm:$0xff]
          %v334 = vld [vmem:[%s306 + $0x80] sm:$0xff]
          %v335 = vld [vmem:[%s306 + $0x88] sm:$0x3]
          %v336 = vld [vmem:[%s306 + $0x90] sm:$0xff]
          %v337 = vld [vmem:[%s306 + $0x98] sm:$0xff]
          %v338 = vld [vmem:[%s306 + $0xa0] sm:$0x3]
          %v339 = vld [vmem:[%s306 + $0xa8] sm:$0xff]
          %v340 = vld [vmem:[%s306 + $0xb0] sm:$0xff]
          %v341 = vld [vmem:[%s306 + $0xb8] sm:$0x3]
          %v342 = vld [vmem:[%s306 + $0xc0] sm:$0xff]
          %v343 = vld [vmem:[%s306 + $0xc8] sm:$0xff]
          %v344 = vld [vmem:[%s306 + $0xd0] sm:$0x3]
          %v345 = vld [vmem:[%s306 + $0xd8] sm:$0xff]
          %v346 = vld [vmem:[%s306 + $0xe0] sm:$0xff]
          %v347 = vld [vmem:[%s306 + $0xe8] sm:$0x3]
          %v348 = vld [vmem:[%s306 + $0xf0] sm:$0xff]
          %v349 = vld [vmem:[%s306 + $0xf8] sm:$0xff]
          %v350 = vld [vmem:[%s306 + $0x100] sm:$0x3]
          %v351 = vld [vmem:[%s306 + $0x108] sm:$0xff]
          %v352 = vld [vmem:[%s306 + $0x110] sm:$0xff]
          %v353 = vld [vmem:[%s306 + $0x118] sm:$0x3]
          %v354 = vld [vmem:[%s306 + $0x120] sm:$0xff]
          %v355 = vld [vmem:[%s306 + $0x128] sm:$0xff]
          %v356 = vld [vmem:[%s306 + $0x130] sm:$0x3]
          %v357 = vld [vmem:[%s306 + $0x138] sm:$0xff]
          %v358 = vld [vmem:[%s306 + $0x140] sm:$0xff]
          %v359 = vld [vmem:[%s306 + $0x148] sm:$0x3]
          %v360 = vld [vmem:[%s306 + $0x150] sm:$0xff]
          %v361 = vld [vmem:[%s306 + $0x158] sm:$0xff]
          %v362 = vld [vmem:[%s306 + $0x160] sm:$0x3]
          %v363 = vld [vmem:[%s306 + $0x168] sm:$0xff]
          %v364 = vld [vmem:[%s306 + $0x170] sm:$0xff]
          %v365 = vld [vmem:[%s306 + $0x178] sm:$0x3]
          %v366 = vld [vmem:[%s306 + $0x180] sm:$0xff]
          %v367 = vld [vmem:[%s306 + $0x188] sm:$0xff]
          %v368 = vld [vmem:[%s306 + $0x190] sm:$0x3]
          %v369 = vld [vmem:[%s306 + $0x198] sm:$0xff]
          %v370 = vld [vmem:[%s306 + $0x1a0] sm:$0xff]
          %v371 = vld [vmem:[%s306 + $0x1a8] sm:$0x3]
          %v372 = vld [vmem:[%s1] sm:$0xf]
          %vm421 = vcmask 1046528
          %v422 = vrot.slane %v318, 1
          %v423 = vrot.slane %v319, 1
          %v424 = vsel %vm421, %v422, %v423
          %v425 = vrot.slane %v320, 1
          %v426 = vsel %vm421, %v423, %v425
          %v427 = vrot.slane %v321, 1
          %v428 = vrot.slane %v322, 1
          %v429 = vsel %vm421, %v427, %v428
          %v430 = vrot.slane %v323, 1
          %v431 = vsel %vm421, %v428, %v430
          %v432 = vrot.slane %v324, 1
          %v433 = vrot.slane %v325, 1
          %v434 = vsel %vm421, %v432, %v433
          %v435 = vrot.slane %v326, 1
          %v436 = vsel %vm421, %v433, %v435
          %v437 = vrot.slane %v327, 1
          %v438 = vrot.slane %v328, 1
          %v439 = vsel %vm421, %v437, %v438
          %v440 = vrot.slane %v329, 1
          %v441 = vsel %vm421, %v438, %v440
          %v442 = vrot.slane %v330, 1
          %v443 = vrot.slane %v331, 1
          %v444 = vsel %vm421, %v442, %v443
          %v445 = vrot.slane %v332, 1
          %v446 = vsel %vm421, %v443, %v445
          %v447 = vrot.slane %v333, 1
          %v448 = vrot.slane %v334, 1
          %v449 = vsel %vm421, %v447, %v448
          %v450 = vrot.slane %v335, 1
          %v451 = vsel %vm421, %v448, %v450
          %v452 = vrot.slane %v336, 1
          %v453 = vrot.slane %v337, 1
          %v454 = vsel %vm421, %v452, %v453
          %v455 = vrot.slane %v338, 1
          %v456 = vsel %vm421, %v453, %v455
          %v457 = vrot.slane %v339, 1
          %v458 = vrot.slane %v340, 1
          %v459 = vsel %vm421, %v457, %v458
          %v460 = vrot.slane %v341, 1
          %v461 = vsel %vm421, %v458, %v460
          %v462 = vrot.slane %v342, 1
          %v463 = vrot.slane %v343, 1
          %v464 = vsel %vm421, %v462, %v463
          %v465 = vrot.slane %v344, 1
          %v466 = vsel %vm421, %v463, %v465
          %v467 = vrot.slane %v345, 1
          %v468 = vrot.slane %v346, 1
          %v469 = vsel %vm421, %v467, %v468
          %v470 = vrot.slane %v347, 1
          %v471 = vsel %vm421, %v468, %v470
          %v472 = vrot.slane %v348, 1
          %v473 = vrot.slane %v349, 1
          %v474 = vsel %vm421, %v472, %v473
          %v475 = vrot.slane %v350, 1
          %v476 = vsel %vm421, %v473, %v475
          %v477 = vrot.slane %v351, 1
          %v478 = vrot.slane %v352, 1
          %v479 = vsel %vm421, %v477, %v478
          %v480 = vrot.slane %v353, 1
          %v481 = vsel %vm421, %v478, %v480
          %v482 = vrot.slane %v354, 1
          %v483 = vrot.slane %v355, 1
          %v484 = vsel %vm421, %v482, %v483
          %v485 = vrot.slane %v356, 1
          %v486 = vsel %vm421, %v483, %v485
          %v487 = vrot.slane %v357, 1
          %v488 = vrot.slane %v358, 1
          %v489 = vsel %vm421, %v487, %v488
          %v490 = vrot.slane %v359, 1
          %v491 = vsel %vm421, %v488, %v490
          %v492 = vrot.slane %v360, 1
          %v493 = vrot.slane %v361, 1
          %v494 = vsel %vm421, %v492, %v493
          %v495 = vrot.slane %v362, 1
          %v496 = vsel %vm421, %v493, %v495
          %v497 = vrot.slane %v363, 1
          %v498 = vrot.slane %v364, 1
          %v499 = vsel %vm421, %v497, %v498
          %v500 = vrot.slane %v365, 1
          %v501 = vsel %vm421, %v498, %v500
          %s502 = scalar_lea.vmem %s1, 4
          %v503 = vld [vmem:[%s502] sm:$0xf]
          %vm504 = vcmask 31744
          %v505 = vsel %vm504, %v424, 0
          %v507 = vsel %vm504, %v426, 0
          %v509 = vsel %vm504, %v429, 0
          %v511 = vsel %vm504, %v431, 0
          %v513 = vsel %vm504, %v434, 0
          %v515 = vsel %vm504, %v436, 0
          %v517 = vsel %vm504, %v439, 0
          %v519 = vsel %vm504, %v441, 0
          %v521 = vsel %vm504, %v444, 0
          %v523 = vsel %vm504, %v446, 0
          %v525 = vsel %vm504, %v449, 0
          %v527 = vsel %vm504, %v451, 0
          %v529 = vsel %vm504, %v454, 0
          %v531 = vsel %vm504, %v456, 0
          %v533 = vsel %vm504, %v459, 0
          %v535 = vsel %vm504, %v461, 0
          %v537 = vsel %vm504, %v464, 0
          %v539 = vsel %vm504, %v466, 0
          %v541 = vsel %vm504, %v469, 0
          %v543 = vsel %vm504, %v471, 0
          %v545 = vsel %vm504, %v474, 0
          %v547 = vsel %vm504, %v476, 0
          %v549 = vsel %vm504, %v479, 0
          %v551 = vsel %vm504, %v481, 0
          %v553 = vsel %vm504, %v484, 0
          %v555 = vsel %vm504, %v486, 0
          %v557 = vsel %vm504, %v489, 0
          %v559 = vsel %vm504, %v491, 0
          %v561 = vsel %vm504, %v494, 0
          %v563 = vsel %vm504, %v496, 0
          %v565 = vsel %vm504, %v499, 0
          %v567 = vsel %vm504, %v501, 0
          %vm569 = vcmask 1043456
          %v571 = vsel %vm569, %v503, 0
          %573 = vmatprep.subr.mxu0 0.0
          %574 = vmatpush1.msra.mxu0 %v571
          %575 = vmatprep.subr.mxu0 0.0
          %576 = vmatpush1.msra.mxu0 0.0
          %577 = vmatprep.subr.mxu0 0.0
          %578 = vmatpush1.msra.mxu0 0.0
          %579 = vmatprep.subr.mxu0 0.0
          %580 = vmatpush1.msra.mxu0 0.0
          %581 = vmatprep.subr.mxu0 0.0
          %582 = vmatpush1.msra.mxu0 0.0
          %583 = vmatprep.subr.mxu0 0.0
          %584 = vmatpush1.msra.mxu0 0.0
          %585 = vmatprep.subr.mxu0 0.0
          %586 = vmatpush1.msra.mxu0 0.0
          %587 = vmatprep.subr.mxu0 0.0
          %588 = vmatpush1.msra.mxu0 0.0
          %589 = vmatprep.subr.mxu0 0.0
          %590 = vmatpush1.msra.mxu0 0.0
          %591 = vmatprep.subr.mxu0 0.0
          %592 = vmatpush1.msra.mxu0 0.0
          %593 = vmatprep.subr.mxu0 0.0
          %594 = vmatpush1.msra.mxu0 0.0
          %595 = vmatprep.subr.mxu0 0.0
          %596 = vmatpush1.msra.mxu0 0.0
          %597 = vmatprep.subr.mxu0 0.0
          %598 = vmatpush1.msra.mxu0 0.0
          %599 = vmatprep.subr.mxu0 0.0
          %600 = vmatpush1.msra.mxu0 0.0
          %601 = vmatprep.subr.mxu0 0.0
          %602 = vmatpush1.msra.mxu0 0.0
          %603 = vmatprep.subr.mxu0 0.0
          %604 = vmatpush1.msra.mxu0 0.0
          %605 = vmatprep.subr.mxu0 0.0
          %606 = vmatpush1.msra.mxu0 0.0
          %607 = vmatprep.subr.mxu0 0.0
          %608 = vmatpush1.msra.mxu0 0.0
          %609 = vmatprep.subr.mxu0 0.0
          %610 = vmatpush1.msra.mxu0 0.0
          %611 = vmatprep.subr.mxu0 0.0
          %612 = vmatpush1.msra.mxu0 0.0
          %613 = vmatprep.subr.mxu0 0.0
          %614 = vmatpush1.msra.mxu0 0.0
          %615 = vmatprep.subr.mxu0 0.0
          %616 = vmatpush1.msra.mxu0 0.0
          %617 = vmatprep.subr.mxu0 0.0
          %618 = vmatpush1.msra.mxu0 0.0
          %619 = vmatprep.subr.mxu0 0.0
          %620 = vmatpush1.msra.mxu0 0.0
          %621 = vmatprep.subr.mxu0 0.0
          %622 = vmatpush1.msra.mxu0 0.0
          %623 = vmatprep.subr.mxu0 0.0
          %624 = vmatpush1.msra.mxu0 0.0
          %625 = vmatprep.subr.mxu0 0.0
          %626 = vmatpush1.msra.mxu0 0.0
          %627 = vmatprep.subr.mxu0 0.0
          %628 = vmatpush1.msra.mxu0 0.0
          %629 = vmatprep.subr.mxu0 0.0
          %630 = vmatpush1.msra.mxu0 0.0
          %631 = vmatprep.subr.mxu0 0.0
          %632 = vmatpush1.msra.mxu0 0.0
          %633 = vmatprep.subr.mxu0 0.0
          %634 = vmatpush1.msra.mxu0 0.0
          %635 = vmatprep.subr.mxu0 0.0
          %636 = vmatpush1.msra.mxu0 0.0
          %637 = vmatprep.mubr.f32.mxu0 0.0
          %638 = vmatmul.mubr.f32.gmra.mrb[0].mxu0 %v505
          %v639 = vpop.f32.mrb[0].mxu0
          %v640 = vadd.f32 0.0, %v639
          %v641 = vpop.f32.mrb[0].mxu0
          %642 = vmatprep.mubr.f32.mxu0 0.0
          %643 = vmatmul.mubr.f32.gmra.mrb[0].mxu0 %v507
          %v644 = vpop.f32.mrb[0].mxu0
          %v645 = vadd.f32 0.0, %v644
          %v646 = vpop.f32.mrb[0].mxu0
          %647 = vmatprep.mubr.f32.mxu0 0.0
          %648 = vmatmul.mubr.f32.gmra.mrb[0].mxu0 %v509
          %v649 = vpop.f32.mrb[0].mxu0
          %v650 = vadd.f32 0.0, %v649
          %v651 = vpop.f32.mrb[0].mxu0
          %652 = vmatprep.mubr.f32.mxu0 0.0
          %653 = vmatmul.mubr.f32.gmra.mrb[0].mxu0 %v511
          %v654 = vpop.f32.mrb[0].mxu0
          %v655 = vadd.f32 0.0, %v654
          %v656 = vpop.f32.mrb[0].mxu0
          %657 = vmatprep.mubr.f32.mxu0 0.0
          %658 = vmatmul.mubr.f32.gmra.mrb[0].mxu0 %v513
          %v659 = vpop.f32.mrb[0].mxu0
          %v660 = vadd.f32 0.0, %v659
          %v661 = vpop.f32.mrb[0].mxu0
          %662 = vmatprep.mubr.f32.mxu0 0.0
          %663 = vmatmul.mubr.f32.gmra.mrb[0].mxu0 %v515
          %v664 = vpop.f32.mrb[0].mxu0
          %v665 = vadd.f32 0.0, %v664
          %v666 = vpop.f32.mrb[0].mxu0
          %667 = vmatprep.mubr.f32.mxu0 0.0
          %668 = vmatmul.mubr.f32.gmra.mrb[0].mxu0 %v517
          %v669 = vpop.f32.mrb[0].mxu0
          %v670 = vadd.f32 0.0, %v669
          %v671 = vpop.f32.mrb[0].mxu0
          %672 = vmatprep.mubr.f32.mxu0 0.0
          %673 = vmatmul.mubr.f32.gmra.mrb[0].mxu0 %v519
          %v674 = vpop.f32.mrb[0].mxu0
          %v675 = vadd.f32 0.0, %v674
          %v676 = vpop.f32.mrb[0].mxu0
          %677 = vmatprep.mubr.f32.mxu0 0.0
          %678 = vmatmul.mubr.f32.gmra.mrb[0].mxu0 %v521
          %v679 = vpop.f32.mrb[0].mxu0
          %v680 = vadd.f32 0.0, %v679
          %v681 = vpop.f32.mrb[0].mxu0
          %682 = vmatprep.mubr.f32.mxu0 0.0
          %683 = vmatmul.mubr.f32.gmra.mrb[0].mxu0 %v523
          %v684 = vpop.f32.mrb[0].mxu0
          %v685 = vadd.f32 0.0, %v684
          %v686 = vpop.f32.mrb[0].mxu0
          %687 = vmatprep.mubr.f32.mxu0 0.0
          %688 = vmatmul.mubr.f32.gmra.mrb[0].mxu0 %v525
          %v689 = vpop.f32.mrb[0].mxu0
          %v690 = vadd.f32 0.0, %v689
          %v691 = vpop.f32.mrb[0].mxu0
          %692 = vmatprep.mubr.f32.mxu0 0.0
          %693 = vmatmul.mubr.f32.gmra.mrb[0].mxu0 %v527
          %v694 = vpop.f32.mrb[0].mxu0
          %v695 = vadd.f32 0.0, %v694
          %v696 = vpop.f32.mrb[0].mxu0
          %697 = vmatprep.mubr.f32.mxu0 0.0
          %698 = vmatmul.mubr.f32.gmra.mrb[0].mxu0 %v529
          %v699 = vpop.f32.mrb[0].mxu0
          %v700 = vadd.f32 0.0, %v699
          %v701 = vpop.f32.mrb[0].mxu0
          %702 = vmatprep.mubr.f32.mxu0 0.0
          %703 = vmatmul.mubr.f32.gmra.mrb[0].mxu0 %v531
          %v704 = vpop.f32.mrb[0].mxu0
          %v705 = vadd.f32 0.0, %v704
          %v706 = vpop.f32.mrb[0].mxu0
          %707 = vmatprep.mubr.f32.mxu0 0.0
          %708 = vmatmul.mubr.f32.gmra.mrb[0].mxu0 %v533
          %v709 = vpop.f32.mrb[0].mxu0
          %v710 = vadd.f32 0.0, %v709
          %v711 = vpop.f32.mrb[0].mxu0
          %712 = vmatprep.mubr.f32.mxu0 0.0
          %713 = vmatmul.mubr.f32.gmra.mrb[0].mxu0 %v535
          %v714 = vpop.f32.mrb[0].mxu0
          %v715 = vadd.f32 0.0, %v714
          %v716 = vpop.f32.mrb[0].mxu0
          %717 = vmatprep.mubr.f32.mxu0 0.0
          %718 = vmatmul.mubr.f32.gmra.mrb[0].mxu0 %v537
          %v719 = vpop.f32.mrb[0].mxu0
          %v720 = vadd.f32 0.0, %v719
          %v721 = vpop.f32.mrb[0].mxu0
          %722 = vmatprep.mubr.f32.mxu0 0.0
          %723 = vmatmul.mubr.f32.gmra.mrb[0].mxu0 %v539
          %v724 = vpop.f32.mrb[0].mxu0
          %v725 = vadd.f32 0.0, %v724
          %v726 = vpop.f32.mrb[0].mxu0
          %727 = vmatprep.mubr.f32.mxu0 0.0
          %728 = vmatmul.mubr.f32.gmra.mrb[0].mxu0 %v541
          %v729 = vpop.f32.mrb[0].mxu0
          %v730 = vadd.f32 0.0, %v729
          %v731 = vpop.f32.mrb[0].mxu0
          %732 = vmatprep.mubr.f32.mxu0 0.0
          %733 = vmatmul.mubr.f32.gmra.mrb[0].mxu0 %v543
          %v734 = vpop.f32.mrb[0].mxu0
          %v735 = vadd.f32 0.0, %v734
          %v736 = vpop.f32.mrb[0].mxu0
          %737 = vmatprep.mubr.f32.mxu0 0.0
          %738 = vmatmul.mubr.f32.gmra.mrb[0].mxu0 %v545
          %v739 = vpop.f32.mrb[0].mxu0
          %v740 = vadd.f32 0.0, %v739
          %v741 = vpop.f32.mrb[0].mxu0
          %742 = vmatprep.mubr.f32.mxu0 0.0
          %743 = vmatmul.mubr.f32.gmra.mrb[0].mxu0 %v547
          %v744 = vpop.f32.mrb[0].mxu0
          %v745 = vadd.f32 0.0, %v744
          %v746 = vpop.f32.mrb[0].mxu0
          %747 = vmatprep.mubr.f32.mxu0 0.0
          %748 = vmatmul.mubr.f32.gmra.mrb[0].mxu0 %v549
          %v749 = vpop.f32.mrb[0].mxu0
          %v750 = vadd.f32 0.0, %v749
          %v751 = vpop.f32.mrb[0].mxu0
          %752 = vmatprep.mubr.f32.mxu0 0.0
          %753 = vmatmul.mubr.f32.gmra.mrb[0].mxu0 %v551
          %v754 = vpop.f32.mrb[0].mxu0
          %v755 = vadd.f32 0.0, %v754
          %v756 = vpop.f32.mrb[0].mxu0
          %757 = vmatprep.mubr.f32.mxu0 0.0
          %758 = vmatmul.mubr.f32.gmra.mrb[0].mxu0 %v553
          %v759 = vpop.f32.mrb[0].mxu0
          %v760 = vadd.f32 0.0, %v759
          %v761 = vpop.f32.mrb[0].mxu0
          %762 = vmatprep.mubr.f32.mxu0 0.0
          %763 = vmatmul.mubr.f32.gmra.mrb[0].mxu0 %v555
          %v764 = vpop.f32.mrb[0].mxu0
          %v765 = vadd.f32 0.0, %v764
          %v766 = vpop.f32.mrb[0].mxu0
          %767 = vmatprep.mubr.f32.mxu0 0.0
          %768 = vmatmul.mubr.f32.gmra.mrb[0].mxu0 %v557
          %v769 = vpop.f32.mrb[0].mxu0
          %v770 = vadd.f32 0.0, %v769
          %v771 = vpop.f32.mrb[0].mxu0
          %772 = vmatprep.mubr.f32.mxu0 0.0
          %773 = vmatmul.mubr.f32.gmra.mrb[0].mxu0 %v559
          %v774 = vpop.f32.mrb[0].mxu0
          %v775 = vadd.f32 0.0, %v774
          %v776 = vpop.f32.mrb[0].mxu0
          %777 = vmatprep.mubr.f32.mxu0 0.0
          %778 = vmatmul.mubr.f32.gmra.mrb[0].mxu0 %v561
          %v779 = vpop.f32.mrb[0].mxu0
          %v780 = vadd.f32 0.0, %v779
          %v781 = vpop.f32.mrb[0].mxu0
          %782 = vmatprep.mubr.f32.mxu0 0.0
          %783 = vmatmul.mubr.f32.gmra.mrb[0].mxu0 %v563
          %v784 = vpop.f32.mrb[0].mxu0
          %v785 = vadd.f32 0.0, %v784
          %v786 = vpop.f32.mrb[0].mxu0
          %787 = vmatprep.mubr.f32.mxu0 0.0
          %788 = vmatmul.mubr.f32.gmra.mrb[0].mxu0 %v565
          %v789 = vpop.f32.mrb[0].mxu0
          %v790 = vadd.f32 0.0, %v789
          %v791 = vpop.f32.mrb[0].mxu0
          %792 = vmatprep.mubr.f32.mxu0 0.0
          %793 = vmatmul.mubr.f32.gmra.mrb[0].mxu0 %v567
          %v794 = vpop.f32.mrb[0].mxu0
          %v795 = vadd.f32 0.0, %v794
          %v796 = vpop.f32.mrb[0].mxu0
          %797 = vdwg.mxu0
          %v798 = vsel %vm504, %v318, 0
          %v800 = vsel %vm504, %v319, 0
          %v802 = vsel %vm504, %v321, 0
          %v804 = vsel %vm504, %v322, 0
          %v806 = vsel %vm504, %v324, 0
          %v808 = vsel %vm504, %v325, 0
          %v810 = vsel %vm504, %v327, 0
          %v812 = vsel %vm504, %v328, 0
          %v814 = vsel %vm504, %v330, 0
          %v816 = vsel %vm504, %v331, 0
          %v818 = vsel %vm504, %v333, 0
          %v820 = vsel %vm504, %v334, 0
          %v822 = vsel %vm504, %v336, 0
          %v824 = vsel %vm504, %v337, 0
          %v826 = vsel %vm504, %v339, 0
          %v828 = vsel %vm504, %v340, 0
          %v830 = vsel %vm504, %v342, 0
          %v832 = vsel %vm504, %v343, 0
          %v834 = vsel %vm504, %v345, 0
          %v836 = vsel %vm504, %v346, 0
          %v838 = vsel %vm504, %v348, 0
          %v840 = vsel %vm504, %v349, 0
          %v842 = vsel %vm504, %v351, 0
          %v844 = vsel %vm504, %v352, 0
          %v846 = vsel %vm504, %v354, 0
          %v848 = vsel %vm504, %v355, 0
          %v850 = vsel %vm504, %v357, 0
          %v852 = vsel %vm504, %v358, 0
          %v854 = vsel %vm504, %v360, 0
          %v856 = vsel %vm504, %v361, 0
          %v858 = vsel %vm504, %v363, 0
          %v860 = vsel %vm504, %v364, 0
          %v863 = vsel %vm569, %v372, 0
          %865 = vmatprep.subr.mxu0 0.0
          %866 = vmatpush1.msra.mxu0 %v863
          %867 = vmatprep.subr.mxu0 0.0
          %868 = vmatpush1.msra.mxu0 0.0
          %869 = vmatprep.subr.mxu0 0.0
          %870 = vmatpush1.msra.mxu0 0.0
          %871 = vmatprep.subr.mxu0 0.0
          %872 = vmatpush1.msra.mxu0 0.0
          %873 = vmatprep.subr.mxu0 0.0
          %874 = vmatpush1.msra.mxu0 0.0
          %875 = vmatprep.subr.mxu0 0.0
          %876 = vmatpush1.msra.mxu0 0.0
          %877 = vmatprep.subr.mxu0 0.0
          %878 = vmatpush1.msra.mxu0 0.0
          %879 = vmatprep.subr.mxu0 0.0
          %880 = vmatpush1.msra.mxu0 0.0
          %881 = vmatprep.subr.mxu0 0.0
          %882 = vmatpush1.msra.mxu0 0.0
          %883 = vmatprep.subr.mxu0 0.0
          %884 = vmatpush1.msra.mxu0 0.0
          %885 = vmatprep.subr.mxu0 0.0
          %886 = vmatpush1.msra.mxu0 0.0
          %887 = vmatprep.subr.mxu0 0.0
          %888 = vmatpush1.msra.mxu0 0.0
          %889 = vmatprep.subr.mxu0 0.0
          %890 = vmatpush1.msra.mxu0 0.0
          %891 = vmatprep.subr.mxu0 0.0
          %892 = vmatpush1.msra.mxu0 0.0
          %893 = vmatprep.subr.mxu0 0.0
          %894 = vmatpush1.msra.mxu0 0.0
          %895 = vmatprep.subr.mxu0 0.0
          %896 = vmatpush1.msra.mxu0 0.0
          %897 = vmatprep.subr.mxu0 0.0
          %898 = vmatpush1.msra.mxu0 0.0
          %899 = vmatprep.subr.mxu0 0.0
          %900 = vmatpush1.msra.mxu0 0.0
          %901 = vmatprep.subr.mxu0 0.0
          %902 = vmatpush1.msra.mxu0 0.0
          %903 = vmatprep.subr.mxu0 0.0
          %904 = vmatpush1.msra.mxu0 0.0
          %905 = vmatprep.subr.mxu0 0.0
          %906 = vmatpush1.msra.mxu0 0.0
          %907 = vmatprep.subr.mxu0 0.0
          %908 = vmatpush1.msra.mxu0 0.0
          %909 = vmatprep.subr.mxu0 0.0
          %910 = vmatpush1.msra.mxu0 0.0
          %911 = vmatprep.subr.mxu0 0.0
          %912 = vmatpush1.msra.mxu0 0.0
          %913 = vmatprep.subr.mxu0 0.0
          %914 = vmatpush1.msra.mxu0 0.0
          %915 = vmatprep.subr.mxu0 0.0
          %916 = vmatpush1.msra.mxu0 0.0
          %917 = vmatprep.subr.mxu0 0.0
          %918 = vmatpush1.msra.mxu0 0.0
          %919 = vmatprep.subr.mxu0 0.0
          %920 = vmatpush1.msra.mxu0 0.0
          %921 = vmatprep.subr.mxu0 0.0
          %922 = vmatpush1.msra.mxu0 0.0
          %923 = vmatprep.subr.mxu0 0.0
          %924 = vmatpush1.msra.mxu0 0.0
          %925 = vmatprep.subr.mxu0 0.0
          %926 = vmatpush1.msra.mxu0 0.0
          %927 = vmatprep.subr.mxu0 0.0
          %928 = vmatpush1.msra.mxu0 0.0
          %929 = vmatprep.mubr.f32.mxu0 0.0
          %930 = vmatmul.mubr.f32.gmra.mrb[0].mxu0 %v798
          %v931 = vpop.f32.mrb[0].mxu0
          %v932 = vadd.f32 %v640, %v931
          %v933 = vpop.f32.mrb[0].mxu0
          %934 = vmatprep.mubr.f32.mxu0 0.0
          %935 = vmatmul.mubr.f32.gmra.mrb[0].mxu0 %v800
          %v936 = vpop.f32.mrb[0].mxu0
          %v937 = vadd.f32 %v645, %v936
          %v938 = vpop.f32.mrb[0].mxu0
          %939 = vmatprep.mubr.f32.mxu0 0.0
          %940 = vmatmul.mubr.f32.gmra.mrb[0].mxu0 %v802
          %v941 = vpop.f32.mrb[0].mxu0
          %v942 = vadd.f32 %v650, %v941
          %v943 = vpop.f32.mrb[0].mxu0
          %944 = vmatprep.mubr.f32.mxu0 0.0
          %945 = vmatmul.mubr.f32.gmra.mrb[0].mxu0 %v804
          %v946 = vpop.f32.mrb[0].mxu0
          %v947 = vadd.f32 %v655, %v946
          %v948 = vpop.f32.mrb[0].mxu0
          %949 = vmatprep.mubr.f32.mxu0 0.0
          %950 = vmatmul.mubr.f32.gmra.mrb[0].mxu0 %v806
          %v951 = vpop.f32.mrb[0].mxu0
          %v952 = vadd.f32 %v660, %v951
          %v953 = vpop.f32.mrb[0].mxu0
          %954 = vmatprep.mubr.f32.mxu0 0.0
          %955 = vmatmul.mubr.f32.gmra.mrb[0].mxu0 %v808
          %v956 = vpop.f32.mrb[0].mxu0
          %v957 = vadd.f32 %v665, %v956
          %v958 = vpop.f32.mrb[0].mxu0
          %959 = vmatprep.mubr.f32.mxu0 0.0
          %960 = vmatmul.mubr.f32.gmra.mrb[0].mxu0 %v810
          %v961 = vpop.f32.mrb[0].mxu0
          %v962 = vadd.f32 %v670, %v961
          %v963 = vpop.f32.mrb[0].mxu0
          %964 = vmatprep.mubr.f32.mxu0 0.0
          %965 = vmatmul.mubr.f32.gmra.mrb[0].mxu0 %v812
          %v966 = vpop.f32.mrb[0].mxu0
          %v967 = vadd.f32 %v675, %v966
          %v968 = vpop.f32.mrb[0].mxu0
          %969 = vmatprep.mubr.f32.mxu0 0.0
          %970 = vmatmul.mubr.f32.gmra.mrb[0].mxu0 %v814
          %v971 = vpop.f32.mrb[0].mxu0
          %v972 = vadd.f32 %v680, %v971
          %v973 = vpop.f32.mrb[0].mxu0
          %974 = vmatprep.mubr.f32.mxu0 0.0
          %975 = vmatmul.mubr.f32.gmra.mrb[0].mxu0 %v816
          %v976 = vpop.f32.mrb[0].mxu0
          %v977 = vadd.f32 %v685, %v976
          %v978 = vpop.f32.mrb[0].mxu0
          %979 = vmatprep.mubr.f32.mxu0 0.0
          %980 = vmatmul.mubr.f32.gmra.mrb[0].mxu0 %v818
          %v981 = vpop.f32.mrb[0].mxu0
          %v982 = vadd.f32 %v690, %v981
          %v983 = vpop.f32.mrb[0].mxu0
          %984 = vmatprep.mubr.f32.mxu0 0.0
          %985 = vmatmul.mubr.f32.gmra.mrb[0].mxu0 %v820
          %v986 = vpop.f32.mrb[0].mxu0
          %v987 = vadd.f32 %v695, %v986
          %v988 = vpop.f32.mrb[0].mxu0
          %989 = vmatprep.mubr.f32.mxu0 0.0
          %990 = vmatmul.mubr.f32.gmra.mrb[0].mxu0 %v822
          %v991 = vpop.f32.mrb[0].mxu0
          %v992 = vadd.f32 %v700, %v991
          %v993 = vpop.f32.mrb[0].mxu0
          %994 = vmatprep.mubr.f32.mxu0 0.0
          %995 = vmatmul.mubr.f32.gmra.mrb[0].mxu0 %v824
          %v996 = vpop.f32.mrb[0].mxu0
          %v997 = vadd.f32 %v705, %v996
          %v998 = vpop.f32.mrb[0].mxu0
          %999 = vmatprep.mubr.f32.mxu0 0.0
          %1000 = vmatmul.mubr.f32.gmra.mrb[0].mxu0 %v826
          %v1001 = vpop.f32.mrb[0].mxu0
          %v1002 = vadd.f32 %v710, %v1001
          %v1003 = vpop.f32.mrb[0].mxu0
          %1004 = vmatprep.mubr.f32.mxu0 0.0
          %1005 = vmatmul.mubr.f32.gmra.mrb[0].mxu0 %v828
          %v1006 = vpop.f32.mrb[0].mxu0
          %v1007 = vadd.f32 %v715, %v1006
          %v1008 = vpop.f32.mrb[0].mxu0
          %1009 = vmatprep.mubr.f32.mxu0 0.0
          %1010 = vmatmul.mubr.f32.gmra.mrb[0].mxu0 %v830
          %v1011 = vpop.f32.mrb[0].mxu0
          %v1012 = vadd.f32 %v720, %v1011
          %v1013 = vpop.f32.mrb[0].mxu0
          %1014 = vmatprep.mubr.f32.mxu0 0.0
          %1015 = vmatmul.mubr.f32.gmra.mrb[0].mxu0 %v832
          %v1016 = vpop.f32.mrb[0].mxu0
          %v1017 = vadd.f32 %v725, %v1016
          %v1018 = vpop.f32.mrb[0].mxu0
          %1019 = vmatprep.mubr.f32.mxu0 0.0
          %1020 = vmatmul.mubr.f32.gmra.mrb[0].mxu0 %v834
          %v1021 = vpop.f32.mrb[0].mxu0
          %v1022 = vadd.f32 %v730, %v1021
          %v1023 = vpop.f32.mrb[0].mxu0
          %1024 = vmatprep.mubr.f32.mxu0 0.0
          %1025 = vmatmul.mubr.f32.gmra.mrb[0].mxu0 %v836
          %v1026 = vpop.f32.mrb[0].mxu0
          %v1027 = vadd.f32 %v735, %v1026
          %v1028 = vpop.f32.mrb[0].mxu0
          %1029 = vmatprep.mubr.f32.mxu0 0.0
          %1030 = vmatmul.mubr.f32.gmra.mrb[0].mxu0 %v838
          %v1031 = vpop.f32.mrb[0].mxu0
          %v1032 = vadd.f32 %v740, %v1031
          %v1033 = vpop.f32.mrb[0].mxu0
          %1034 = vmatprep.mubr.f32.mxu0 0.0
          %1035 = vmatmul.mubr.f32.gmra.mrb[0].mxu0 %v840
          %v1036 = vpop.f32.mrb[0].mxu0
          %v1037 = vadd.f32 %v745, %v1036
          %v1038 = vpop.f32.mrb[0].mxu0
          %1039 = vmatprep.mubr.f32.mxu0 0.0
          %1040 = vmatmul.mubr.f32.gmra.mrb[0].mxu0 %v842
          %v1041 = vpop.f32.mrb[0].mxu0
          %v1042 = vadd.f32 %v750, %v1041
          %v1043 = vpop.f32.mrb[0].mxu0
          %1044 = vmatprep.mubr.f32.mxu0 0.0
          %1045 = vmatmul.mubr.f32.gmra.mrb[0].mxu0 %v844
          %v1046 = vpop.f32.mrb[0].mxu0
          %v1047 = vadd.f32 %v755, %v1046
          %v1048 = vpop.f32.mrb[0].mxu0
          %1049 = vmatprep.mubr.f32.mxu0 0.0
          %1050 = vmatmul.mubr.f32.gmra.mrb[0].mxu0 %v846
          %v1051 = vpop.f32.mrb[0].mxu0
          %v1052 = vadd.f32 %v760, %v1051
          %v1053 = vpop.f32.mrb[0].mxu0
          %1054 = vmatprep.mubr.f32.mxu0 0.0
          %1055 = vmatmul.mubr.f32.gmra.mrb[0].mxu0 %v848
          %v1056 = vpop.f32.mrb[0].mxu0
          %v1057 = vadd.f32 %v765, %v1056
          %v1058 = vpop.f32.mrb[0].mxu0
          %1059 = vmatprep.mubr.f32.mxu0 0.0
          %1060 = vmatmul.mubr.f32.gmra.mrb[0].mxu0 %v850
          %v1061 = vpop.f32.mrb[0].mxu0
          %v1062 = vadd.f32 %v770, %v1061
          %v1063 = vpop.f32.mrb[0].mxu0
          %1064 = vmatprep.mubr.f32.mxu0 0.0
          %1065 = vmatmul.mubr.f32.gmra.mrb[0].mxu0 %v852
          %v1066 = vpop.f32.mrb[0].mxu0
          %v1067 = vadd.f32 %v775, %v1066
          %v1068 = vpop.f32.mrb[0].mxu0
          %1069 = vmatprep.mubr.f32.mxu0 0.0
          %1070 = vmatmul.mubr.f32.gmra.mrb[0].mxu0 %v854
          %v1071 = vpop.f32.mrb[0].mxu0
          %v1072 = vadd.f32 %v780, %v1071
          %v1073 = vpop.f32.mrb[0].mxu0
          %1074 = vmatprep.mubr.f32.mxu0 0.0
          %1075 = vmatmul.mubr.f32.gmra.mrb[0].mxu0 %v856
          %v1076 = vpop.f32.mrb[0].mxu0
          %v1077 = vadd.f32 %v785, %v1076
          %v1078 = vpop.f32.mrb[0].mxu0
          %1079 = vmatprep.mubr.f32.mxu0 0.0
          %1080 = vmatmul.mubr.f32.gmra.mrb[0].mxu0 %v858
          %v1081 = vpop.f32.mrb[0].mxu0
          %v1082 = vadd.f32 %v790, %v1081
          %v1083 = vpop.f32.mrb[0].mxu0
          %1084 = vmatprep.mubr.f32.mxu0 0.0
          %1085 = vmatmul.mubr.f32.gmra.mrb[0].mxu0 %v860
          %v1086 = vpop.f32.mrb[0].mxu0
          %v1087 = vadd.f32 %v795, %v1086
          %v1088 = vpop.f32.mrb[0].mxu0
          %1089 = vdwg.mxu0
          %vm1090 = vcmask 1045504
          %v1091 = vrot.slane %v318, 2
          %v1092 = vrot.slane %v319, 2
          %v1093 = vsel %vm1090, %v1091, %v1092
          %v1094 = vrot.slane %v320, 2
          %v1095 = vsel %vm1090, %v1092, %v1094
          %v1096 = vrot.slane %v321, 2
          %v1097 = vrot.slane %v322, 2
          %v1098 = vsel %vm1090, %v1096, %v1097
          %v1099 = vrot.slane %v323, 2
          %v1100 = vsel %vm1090, %v1097, %v1099
          %v1101 = vrot.slane %v324, 2
          %v1102 = vrot.slane %v325, 2
          %v1103 = vsel %vm1090, %v1101, %v1102
          %v1104 = vrot.slane %v326, 2
          %v1105 = vsel %vm1090, %v1102, %v1104
          %v1106 = vrot.slane %v327, 2
          %v1107 = vrot.slane %v328, 2
          %v1108 = vsel %vm1090, %v1106, %v1107
          %v1109 = vrot.slane %v329, 2
          %v1110 = vsel %vm1090, %v1107, %v1109
          %v1111 = vrot.slane %v330, 2
          %v1112 = vrot.slane %v331, 2
          %v1113 = vsel %vm1090, %v1111, %v1112
          %v1114 = vrot.slane %v332, 2
          %v1115 = vsel %vm1090, %v1112, %v1114
          %v1116 = vrot.slane %v333, 2
          %v1117 = vrot.slane %v334, 2
          %v1118 = vsel %vm1090, %v1116, %v1117
          %v1119 = vrot.slane %v335, 2
          %v1120 = vsel %vm1090, %v1117, %v1119
          %v1121 = vrot.slane %v336, 2
          %v1122 = vrot.slane %v337, 2
          %v1123 = vsel %vm1090, %v1121, %v1122
          %v1124 = vrot.slane %v338, 2
          %v1125 = vsel %vm1090, %v1122, %v1124
          %v1126 = vrot.slane %v339, 2
          %v1127 = vrot.slane %v340, 2
          %v1128 = vsel %vm1090, %v1126, %v1127
          %v1129 = vrot.slane %v341, 2
          %v1130 = vsel %vm1090, %v1127, %v1129
          %v1131 = vrot.slane %v342, 2
          %v1132 = vrot.slane %v343, 2
          %v1133 = vsel %vm1090, %v1131, %v1132
          %v1134 = vrot.slane %v344, 2
          %v1135 = vsel %vm1090, %v1132, %v1134
          %v1136 = vrot.slane %v345, 2
          %v1137 = vrot.slane %v346, 2
          %v1138 = vsel %vm1090, %v1136, %v1137
          %v1139 = vrot.slane %v347, 2
          %v1140 = vsel %vm1090, %v1137, %v1139
          %v1141 = vrot.slane %v348, 2
          %v1142 = vrot.slane %v349, 2
          %v1143 = vsel %vm1090, %v1141, %v1142
          %v1144 = vrot.slane %v350, 2
          %v1145 = vsel %vm1090, %v1142, %v1144
          %v1146 = vrot.slane %v351, 2
          %v1147 = vrot.slane %v352, 2
          %v1148 = vsel %vm1090, %v1146, %v1147
          %v1149 = vrot.slane %v353, 2
          %v1150 = vsel %vm1090, %v1147, %v1149
          %v1151 = vrot.slane %v354, 2
          %v1152 = vrot.slane %v355, 2
          %v1153 = vsel %vm1090, %v1151, %v1152
          %v1154 = vrot.slane %v356, 2
          %v1155 = vsel %vm1090, %v1152, %v1154
          %v1156 = vrot.slane %v357, 2
          %v1157 = vrot.slane %v358, 2
          %v1158 = vsel %vm1090, %v1156, %v1157
          %v1159 = vrot.slane %v359, 2
          %v1160 = vsel %vm1090, %v1157, %v1159
          %v1161 = vrot.slane %v360, 2
          %v1162 = vrot.slane %v361, 2
          %v1163 = vsel %vm1090, %v1161, %v1162
          %v1164 = vrot.slane %v362, 2
          %v1165 = vsel %vm1090, %v1162, %v1164
          %v1166 = vrot.slane %v363, 2
          %v1167 = vrot.slane %v364, 2
          %v1168 = vsel %vm1090, %v1166, %v1167
          %v1169 = vrot.slane %v365, 2
          %v1170 = vsel %vm1090, %v1167, %v1169
          %s1171 = scalar_lea.vmem %s1, 8
          %v1172 = vld [vmem:[%s1171] sm:$0xf]
          %v1173 = vsel %vm504, %v1093, 0
          %v1175 = vsel %vm504, %v1095, 0
          %v1177 = vsel %vm504, %v1098, 0
          %v1179 = vsel %vm504, %v1100, 0
          %v1181 = vsel %vm504, %v1103, 0
          %v1183 = vsel %vm504, %v1105, 0
          %v1185 = vsel %vm504, %v1108, 0
          %v1187 = vsel %vm504, %v1110, 0
          %v1189 = vsel %vm504, %v1113, 0
          %v1191 = vsel %vm504, %v1115, 0
          %v1193 = vsel %vm504, %v1118, 0
          %v1195 = vsel %vm504, %v1120, 0
          %v1197 = vsel %vm504, %v1123, 0
          %v1199 = vsel %vm504, %v1125, 0
          %v1201 = vsel %vm504, %v1128, 0
          %v1203 = vsel %vm504, %v1130, 0
          %v1205 = vsel %vm504, %v1133, 0
          %v1207 = vsel %vm504, %v1135, 0
          %v1209 = vsel %vm504, %v1138, 0
          %v1211 = vsel %vm504, %v1140, 0
          %v1213 = vsel %vm504, %v1143, 0
          %v1215 = vsel %vm504, %v1145, 0
          %v1217 = vsel %vm504, %v1148, 0
          %v1219 = vsel %vm504, %v1150, 0
          %v1221 = vsel %vm504, %v1153, 0
          %v1223 = vsel %vm504, %v1155, 0
          %v1225 = vsel %vm504, %v1158, 0
          %v1227 = vsel %vm504, %v1160, 0
          %v1229 = vsel %vm504, %v1163, 0
          %v1231 = vsel %vm504, %v1165, 0
          %v1233 = vsel %vm504, %v1168, 0
          %v1235 = vsel %vm504, %v1170, 0
          %v1238 = vsel %vm569, %v1172, 0
          %1240 = vmatprep.subr.mxu0 0.0
          %1241 = vmatpush1.msra.mxu0 %v1238
          %1242 = vmatprep.subr.mxu0 0.0
          %1243 = vmatpush1.msra.mxu0 0.0
          %1244 = vmatprep.subr.mxu0 0.0
          %1245 = vmatpush1.msra.mxu0 0.0
          %1246 = vmatprep.subr.mxu0 0.0
          %1247 = vmatpush1.msra.mxu0 0.0
          %1248 = vmatprep.subr.mxu0 0.0
          %1249 = vmatpush1.msra.mxu0 0.0
          %1250 = vmatprep.subr.mxu0 0.0
          %1251 = vmatpush1.msra.mxu0 0.0
          %1252 = vmatprep.subr.mxu0 0.0
          %1253 = vmatpush1.msra.mxu0 0.0
          %1254 = vmatprep.subr.mxu0 0.0
          %1255 = vmatpush1.msra.mxu0 0.0
          %1256 = vmatprep.subr.mxu0 0.0
          %1257 = vmatpush1.msra.mxu0 0.0
          %1258 = vmatprep.subr.mxu0 0.0
          %1259 = vmatpush1.msra.mxu0 0.0
          %1260 = vmatprep.subr.mxu0 0.0
          %1261 = vmatpush1.msra.mxu0 0.0
          %1262 = vmatprep.subr.mxu0 0.0
          %1263 = vmatpush1.msra.mxu0 0.0
          %1264 = vmatprep.subr.mxu0 0.0
          %1265 = vmatpush1.msra.mxu0 0.0
          %1266 = vmatprep.subr.mxu0 0.0
          %1267 = vmatpush1.msra.mxu0 0.0
          %1268 = vmatprep.subr.mxu0 0.0
          %1269 = vmatpush1.msra.mxu0 0.0
          %1270 = vmatprep.subr.mxu0 0.0
          %1271 = vmatpush1.msra.mxu0 0.0
          %1272 = vmatprep.subr.mxu0 0.0
          %1273 = vmatpush1.msra.mxu0 0.0
          %1274 = vmatprep.subr.mxu0 0.0
          %1275 = vmatpush1.msra.mxu0 0.0
          %1276 = vmatprep.subr.mxu0 0.0
          %1277 = vmatpush1.msra.mxu0 0.0
          %1278 = vmatprep.subr.mxu0 0.0
          %1279 = vmatpush1.msra.mxu0 0.0
          %1280 = vmatprep.subr.mxu0 0.0
          %1281 = vmatpush1.msra.mxu0 0.0
          %1282 = vmatprep.subr.mxu0 0.0
          %1283 = vmatpush1.msra.mxu0 0.0
          %1284 = vmatprep.subr.mxu0 0.0
          %1285 = vmatpush1.msra.mxu0 0.0
          %1286 = vmatprep.subr.mxu0 0.0
          %1287 = vmatpush1.msra.mxu0 0.0
          %1288 = vmatprep.subr.mxu0 0.0
          %1289 = vmatpush1.msra.mxu0 0.0
          %1290 = vmatprep.subr.mxu0 0.0
          %1291 = vmatpush1.msra.mxu0 0.0
          %1292 = vmatprep.subr.mxu0 0.0
          %1293 = vmatpush1.msra.mxu0 0.0
          %1294 = vmatprep.subr.mxu0 0.0
          %1295 = vmatpush1.msra.mxu0 0.0
          %1296 = vmatprep.subr.mxu0 0.0
          %1297 = vmatpush1.msra.mxu0 0.0
          %1298 = vmatprep.subr.mxu0 0.0
          %1299 = vmatpush1.msra.mxu0 0.0
          %1300 = vmatprep.subr.mxu0 0.0
          %1301 = vmatpush1.msra.mxu0 0.0
          %1302 = vmatprep.subr.mxu0 0.0
          %1303 = vmatpush1.msra.mxu0 0.0
          %1304 = vmatprep.mubr.f32.mxu0 0.0
          %1305 = vmatmul.mubr.f32.gmra.mrb[0].mxu0 %v1173
          %v1306 = vpop.f32.mrb[0].mxu0
          %v1307 = vadd.f32 0.0, %v1306
          %v1308 = vpop.f32.mrb[0].mxu0
          %1309 = vmatprep.mubr.f32.mxu0 0.0
          %1310 = vmatmul.mubr.f32.gmra.mrb[0].mxu0 %v1175
          %v1311 = vpop.f32.mrb[0].mxu0
          %v1312 = vadd.f32 0.0, %v1311
          %v1313 = vpop.f32.mrb[0].mxu0
          %1314 = vmatprep.mubr.f32.mxu0 0.0
          %1315 = vmatmul.mubr.f32.gmra.mrb[0].mxu0 %v1177
          %v1316 = vpop.f32.mrb[0].mxu0
          %v1317 = vadd.f32 0.0, %v1316
          %v1318 = vpop.f32.mrb[0].mxu0
          %1319 = vmatprep.mubr.f32.mxu0 0.0
          %1320 = vmatmul.mubr.f32.gmra.mrb[0].mxu0 %v1179
          %v1321 = vpop.f32.mrb[0].mxu0
          %v1322 = vadd.f32 0.0, %v1321
          %v1323 = vpop.f32.mrb[0].mxu0
          %1324 = vmatprep.mubr.f32.mxu0 0.0
          %1325 = vmatmul.mubr.f32.gmra.mrb[0].mxu0 %v1181
          %v1326 = vpop.f32.mrb[0].mxu0
          %v1327 = vadd.f32 0.0, %v1326
          %v1328 = vpop.f32.mrb[0].mxu0
          %1329 = vmatprep.mubr.f32.mxu0 0.0
          %1330 = vmatmul.mubr.f32.gmra.mrb[0].mxu0 %v1183
          %v1331 = vpop.f32.mrb[0].mxu0
          %v1332 = vadd.f32 0.0, %v1331
          %v1333 = vpop.f32.mrb[0].mxu0
          %1334 = vmatprep.mubr.f32.mxu0 0.0
          %1335 = vmatmul.mubr.f32.gmra.mrb[0].mxu0 %v1185
          %v1336 = vpop.f32.mrb[0].mxu0
          %v1337 = vadd.f32 0.0, %v1336
          %v1338 = vpop.f32.mrb[0].mxu0
          %1339 = vmatprep.mubr.f32.mxu0 0.0
          %1340 = vmatmul.mubr.f32.gmra.mrb[0].mxu0 %v1187
          %v1341 = vpop.f32.mrb[0].mxu0
          %v1342 = vadd.f32 0.0, %v1341
          %v1343 = vpop.f32.mrb[0].mxu0
          %1344 = vmatprep.mubr.f32.mxu0 0.0
          %1345 = vmatmul.mubr.f32.gmra.mrb[0].mxu0 %v1189
          %v1346 = vpop.f32.mrb[0].mxu0
          %v1347 = vadd.f32 0.0, %v1346
          %v1348 = vpop.f32.mrb[0].mxu0
          %1349 = vmatprep.mubr.f32.mxu0 0.0
          %1350 = vmatmul.mubr.f32.gmra.mrb[0].mxu0 %v1191
          %v1351 = vpop.f32.mrb[0].mxu0
          %v1352 = vadd.f32 0.0, %v1351
          %v1353 = vpop.f32.mrb[0].mxu0
          %1354 = vmatprep.mubr.f32.mxu0 0.0
          %1355 = vmatmul.mubr.f32.gmra.mrb[0].mxu0 %v1193
          %v1356 = vpop.f32.mrb[0].mxu0
          %v1357 = vadd.f32 0.0, %v1356
          %v1358 = vpop.f32.mrb[0].mxu0
          %1359 = vmatprep.mubr.f32.mxu0 0.0
          %1360 = vmatmul.mubr.f32.gmra.mrb[0].mxu0 %v1195
          %v1361 = vpop.f32.mrb[0].mxu0
          %v1362 = vadd.f32 0.0, %v1361
          %v1363 = vpop.f32.mrb[0].mxu0
          %1364 = vmatprep.mubr.f32.mxu0 0.0
          %1365 = vmatmul.mubr.f32.gmra.mrb[0].mxu0 %v1197
          %v1366 = vpop.f32.mrb[0].mxu0
          %v1367 = vadd.f32 0.0, %v1366
          %v1368 = vpop.f32.mrb[0].mxu0
          %1369 = vmatprep.mubr.f32.mxu0 0.0
          %1370 = vmatmul.mubr.f32.gmra.mrb[0].mxu0 %v1199
          %v1371 = vpop.f32.mrb[0].mxu0
          %v1372 = vadd.f32 0.0, %v1371
          %v1373 = vpop.f32.mrb[0].mxu0
          %1374 = vmatprep.mubr.f32.mxu0 0.0
          %1375 = vmatmul.mubr.f32.gmra.mrb[0].mxu0 %v1201
          %v1376 = vpop.f32.mrb[0].mxu0
          %v1377 = vadd.f32 0.0, %v1376
          %v1378 = vpop.f32.mrb[0].mxu0
          %1379 = vmatprep.mubr.f32.mxu0 0.0
          %1380 = vmatmul.mubr.f32.gmra.mrb[0].mxu0 %v1203
          %v1381 = vpop.f32.mrb[0].mxu0
          %v1382 = vadd.f32 0.0, %v1381
          %v1383 = vpop.f32.mrb[0].mxu0
          %1384 = vmatprep.mubr.f32.mxu0 0.0
          %1385 = vmatmul.mubr.f32.gmra.mrb[0].mxu0 %v1205
          %v1386 = vpop.f32.mrb[0].mxu0
          %v1387 = vadd.f32 0.0, %v1386
          %v1388 = vpop.f32.mrb[0].mxu0
          %1389 = vmatprep.mubr.f32.mxu0 0.0
          %1390 = vmatmul.mubr.f32.gmra.mrb[0].mxu0 %v1207
          %v1391 = vpop.f32.mrb[0].mxu0
          %v1392 = vadd.f32 0.0, %v1391
          %v1393 = vpop.f32.mrb[0].mxu0
          %1394 = vmatprep.mubr.f32.mxu0 0.0
          %1395 = vmatmul.mubr.f32.gmra.mrb[0].mxu0 %v1209
          %v1396 = vpop.f32.mrb[0].mxu0
          %v1397 = vadd.f32 0.0, %v1396
          %v1398 = vpop.f32.mrb[0].mxu0
          %1399 = vmatprep.mubr.f32.mxu0 0.0
          %1400 = vmatmul.mubr.f32.gmra.mrb[0].mxu0 %v1211
          %v1401 = vpop.f32.mrb[0].mxu0
          %v1402 = vadd.f32 0.0, %v1401
          %v1403 = vpop.f32.mrb[0].mxu0
          %1404 = vmatprep.mubr.f32.mxu0 0.0
          %1405 = vmatmul.mubr.f32.gmra.mrb[0].mxu0 %v1213
          %v1406 = vpop.f32.mrb[0].mxu0
          %v1407 = vadd.f32 0.0, %v1406
          %v1408 = vpop.f32.mrb[0].mxu0
          %1409 = vmatprep.mubr.f32.mxu0 0.0
          %1410 = vmatmul.mubr.f32.gmra.mrb[0].mxu0 %v1215
          %v1411 = vpop.f32.mrb[0].mxu0
          %v1412 = vadd.f32 0.0, %v1411
          %v1413 = vpop.f32.mrb[0].mxu0
          %1414 = vmatprep.mubr.f32.mxu0 0.0
          %1415 = vmatmul.mubr.f32.gmra.mrb[0].mxu0 %v1217
          %v1416 = vpop.f32.mrb[0].mxu0
          %v1417 = vadd.f32 0.0, %v1416
          %v1418 = vpop.f32.mrb[0].mxu0
          %1419 = vmatprep.mubr.f32.mxu0 0.0
          %1420 = vmatmul.mubr.f32.gmra.mrb[0].mxu0 %v1219
          %v1421 = vpop.f32.mrb[0].mxu0
          %v1422 = vadd.f32 0.0, %v1421
          %v1423 = vpop.f32.mrb[0].mxu0
          %1424 = vmatprep.mubr.f32.mxu0 0.0
          %1425 = vmatmul.mubr.f32.gmra.mrb[0].mxu0 %v1221
          %v1426 = vpop.f32.mrb[0].mxu0
          %v1427 = vadd.f32 0.0, %v1426
          %v1428 = vpop.f32.mrb[0].mxu0
          %1429 = vmatprep.mubr.f32.mxu0 0.0
          %1430 = vmatmul.mubr.f32.gmra.mrb[0].mxu0 %v1223
          %v1431 = vpop.f32.mrb[0].mxu0
          %v1432 = vadd.f32 0.0, %v1431
          %v1433 = vpop.f32.mrb[0].mxu0
          %1434 = vmatprep.mubr.f32.mxu0 0.0
          %1435 = vmatmul.mubr.f32.gmra.mrb[0].mxu0 %v1225
          %v1436 = vpop.f32.mrb[0].mxu0
          %v1437 = vadd.f32 0.0, %v1436
          %v1438 = vpop.f32.mrb[0].mxu0
          %1439 = vmatprep.mubr.f32.mxu0 0.0
          %1440 = vmatmul.mubr.f32.gmra.mrb[0].mxu0 %v1227
          %v1441 = vpop.f32.mrb[0].mxu0
          %v1442 = vadd.f32 0.0, %v1441
          %v1443 = vpop.f32.mrb[0].mxu0
          %1444 = vmatprep.mubr.f32.mxu0 0.0
          %1445 = vmatmul.mubr.f32.gmra.mrb[0].mxu0 %v1229
          %v1446 = vpop.f32.mrb[0].mxu0
          %v1447 = vadd.f32 0.0, %v1446
          %v1448 = vpop.f32.mrb[0].mxu0
          %1449 = vmatprep.mubr.f32.mxu0 0.0
          %1450 = vmatmul.mubr.f32.gmra.mrb[0].mxu0 %v1231
          %v1451 = vpop.f32.mrb[0].mxu0
          %v1452 = vadd.f32 0.0, %v1451
          %v1453 = vpop.f32.mrb[0].mxu0
          %1454 = vmatprep.mubr.f32.mxu0 0.0
          %1455 = vmatmul.mubr.f32.gmra.mrb[0].mxu0 %v1233
          %v1456 = vpop.f32.mrb[0].mxu0
          %v1457 = vadd.f32 0.0, %v1456
          %v1458 = vpop.f32.mrb[0].mxu0
          %1459 = vmatprep.mubr.f32.mxu0 0.0
          %1460 = vmatmul.mubr.f32.gmra.mrb[0].mxu0 %v1235
          %v1461 = vpop.f32.mrb[0].mxu0
          %v1462 = vadd.f32 0.0, %v1461
          %v1463 = vpop.f32.mrb[0].mxu0
          %1464 = vdwg.mxu0
          %v1465 = vadd.f32 %v932, %v1307
          %v1466 = vadd.f32 %v937, %v1312
          %v1467 = vadd.f32 %v942, %v1317
          %v1468 = vadd.f32 %v947, %v1322
          %v1469 = vadd.f32 %v952, %v1327
          %v1470 = vadd.f32 %v957, %v1332
          %v1471 = vadd.f32 %v962, %v1337
          %v1472 = vadd.f32 %v967, %v1342
          %v1473 = vadd.f32 %v972, %v1347
          %v1474 = vadd.f32 %v977, %v1352
          %v1475 = vadd.f32 %v982, %v1357
          %v1476 = vadd.f32 %v987, %v1362
          %v1477 = vadd.f32 %v992, %v1367
          %v1478 = vadd.f32 %v997, %v1372
          %v1479 = vadd.f32 %v1002, %v1377
          %v1480 = vadd.f32 %v1007, %v1382
          %v1481 = vadd.f32 %v1012, %v1387
          %v1482 = vadd.f32 %v1017, %v1392
          %v1483 = vadd.f32 %v1022, %v1397
          %v1484 = vadd.f32 %v1027, %v1402
          %v1485 = vadd.f32 %v1032, %v1407
          %v1486 = vadd.f32 %v1037, %v1412
          %v1487 = vadd.f32 %v1042, %v1417
          %v1488 = vadd.f32 %v1047, %v1422
          %v1489 = vadd.f32 %v1052, %v1427
          %v1490 = vadd.f32 %v1057, %v1432
          %v1491 = vadd.f32 %v1062, %v1437
          %v1492 = vadd.f32 %v1067, %v1442
          %v1493 = vadd.f32 %v1072, %v1447
          %v1494 = vadd.f32 %v1077, %v1452
          %v1495 = vadd.f32 %v1082, %v1457
          %v1496 = vadd.f32 %v1087, %v1462
          %s1497 = scalar_lea.vmem %s1, 12
          %v1498 = vld [vmem:[%s1497] sm:$0xf]
          %v1500 = vsel %vm504, %v366, 0
          %v1503 = vsel %vm504, %v367, 0
          %v1506 = vsel %vm569, %v1498, 0
          %1508 = vmatprep.subr.mxu0 0.0
          %1509 = vmatpush1.msra.mxu0 %v1506
          %1510 = vmatprep.subr.mxu0 0.0
          %1511 = vmatpush1.msra.mxu0 0.0
          %1512 = vmatprep.subr.mxu0 0.0
          %1513 = vmatpush1.msra.mxu0 0.0
          %1514 = vmatprep.subr.mxu0 0.0
          %1515 = vmatpush1.msra.mxu0 0.0
          %1516 = vmatprep.subr.mxu0 0.0
          %1517 = vmatpush1.msra.mxu0 0.0
          %1518 = vmatprep.subr.mxu0 0.0
          %1519 = vmatpush1.msra.mxu0 0.0
          %1520 = vmatprep.subr.mxu0 0.0
          %1521 = vmatpush1.msra.mxu0 0.0
          %1522 = vmatprep.subr.mxu0 0.0
          %1523 = vmatpush1.msra.mxu0 0.0
          %1524 = vmatprep.subr.mxu0 0.0
          %1525 = vmatpush1.msra.mxu0 0.0
          %1526 = vmatprep.subr.mxu0 0.0
          %1527 = vmatpush1.msra.mxu0 0.0
          %1528 = vmatprep.subr.mxu0 0.0
          %1529 = vmatpush1.msra.mxu0 0.0
          %1530 = vmatprep.subr.mxu0 0.0
          %1531 = vmatpush1.msra.mxu0 0.0
          %1532 = vmatprep.subr.mxu0 0.0
          %1533 = vmatpush1.msra.mxu0 0.0
          %1534 = vmatprep.subr.mxu0 0.0
          %1535 = vmatpush1.msra.mxu0 0.0
          %1536 = vmatprep.subr.mxu0 0.0
          %1537 = vmatpush1.msra.mxu0 0.0
          %1538 = vmatprep.subr.mxu0 0.0
          %1539 = vmatpush1.msra.mxu0 0.0
          %1540 = vmatprep.subr.mxu0 0.0
          %1541 = vmatpush1.msra.mxu0 0.0
          %1542 = vmatprep.subr.mxu0 0.0
          %1543 = vmatpush1.msra.mxu0 0.0
          %1544 = vmatprep.subr.mxu0 0.0
          %1545 = vmatpush1.msra.mxu0 0.0
          %1546 = vmatprep.subr.mxu0 0.0
          %1547 = vmatpush1.msra.mxu0 0.0
          %1548 = vmatprep.subr.mxu0 0.0
          %1549 = vmatpush1.msra.mxu0 0.0
          %1550 = vmatprep.subr.mxu0 0.0
          %1551 = vmatpush1.msra.mxu0 0.0
          %1552 = vmatprep.subr.mxu0 0.0
          %1553 = vmatpush1.msra.mxu0 0.0
          %1554 = vmatprep.subr.mxu0 0.0
          %1555 = vmatpush1.msra.mxu0 0.0
          %1556 = vmatprep.subr.mxu0 0.0
          %1557 = vmatpush1.msra.mxu0 0.0
          %1558 = vmatprep.subr.mxu0 0.0
          %1559 = vmatpush1.msra.mxu0 0.0
          %1560 = vmatprep.subr.mxu0 0.0
          %1561 = vmatpush1.msra.mxu0 0.0
          %1562 = vmatprep.subr.mxu0 0.0
          %1563 = vmatpush1.msra.mxu0 0.0
          %1564 = vmatprep.subr.mxu0 0.0
          %1565 = vmatpush1.msra.mxu0 0.0
          %1566 = vmatprep.subr.mxu0 0.0
          %1567 = vmatpush1.msra.mxu0 0.0
          %1568 = vmatprep.subr.mxu0 0.0
          %1569 = vmatpush1.msra.mxu0 0.0
          %1570 = vmatprep.subr.mxu0 0.0
          %1571 = vmatpush1.msra.mxu0 0.0
          %1572 = vmatprep.mubr.f32.mxu0 0.0
          %1573 = vmatmul.mubr.f32.gmra.mrb[0].mxu0 %v802
          %v1574 = vpop.f32.mrb[0].mxu0
          %v1575 = vadd.f32 0.0, %v1574
          %v1576 = vpop.f32.mrb[0].mxu0
          %1577 = vmatprep.mubr.f32.mxu0 0.0
          %1578 = vmatmul.mubr.f32.gmra.mrb[0].mxu0 %v804
          %v1579 = vpop.f32.mrb[0].mxu0
          %v1580 = vadd.f32 0.0, %v1579
          %v1581 = vpop.f32.mrb[0].mxu0
          %1582 = vmatprep.mubr.f32.mxu0 0.0
          %1583 = vmatmul.mubr.f32.gmra.mrb[0].mxu0 %v806
          %v1584 = vpop.f32.mrb[0].mxu0
          %v1585 = vadd.f32 0.0, %v1584
          %v1586 = vpop.f32.mrb[0].mxu0
          %1587 = vmatprep.mubr.f32.mxu0 0.0
          %1588 = vmatmul.mubr.f32.gmra.mrb[0].mxu0 %v808
          %v1589 = vpop.f32.mrb[0].mxu0
          %v1590 = vadd.f32 0.0, %v1589
          %v1591 = vpop.f32.mrb[0].mxu0
          %1592 = vmatprep.mubr.f32.mxu0 0.0
          %1593 = vmatmul.mubr.f32.gmra.mrb[0].mxu0 %v810
          %v1594 = vpop.f32.mrb[0].mxu0
          %v1595 = vadd.f32 0.0, %v1594
          %v1596 = vpop.f32.mrb[0].mxu0
          %1597 = vmatprep.mubr.f32.mxu0 0.0
          %1598 = vmatmul.mubr.f32.gmra.mrb[0].mxu0 %v812
          %v1599 = vpop.f32.mrb[0].mxu0
          %v1600 = vadd.f32 0.0, %v1599
          %v1601 = vpop.f32.mrb[0].mxu0
          %1602 = vmatprep.mubr.f32.mxu0 0.0
          %1603 = vmatmul.mubr.f32.gmra.mrb[0].mxu0 %v814
          %v1604 = vpop.f32.mrb[0].mxu0
          %v1605 = vadd.f32 0.0, %v1604
          %v1606 = vpop.f32.mrb[0].mxu0
          %1607 = vmatprep.mubr.f32.mxu0 0.0
          %1608 = vmatmul.mubr.f32.gmra.mrb[0].mxu0 %v816
          %v1609 = vpop.f32.mrb[0].mxu0
          %v1610 = vadd.f32 0.0, %v1609
          %v1611 = vpop.f32.mrb[0].mxu0
          %1612 = vmatprep.mubr.f32.mxu0 0.0
          %1613 = vmatmul.mubr.f32.gmra.mrb[0].mxu0 %v818
          %v1614 = vpop.f32.mrb[0].mxu0
          %v1615 = vadd.f32 0.0, %v1614
          %v1616 = vpop.f32.mrb[0].mxu0
          %1617 = vmatprep.mubr.f32.mxu0 0.0
          %1618 = vmatmul.mubr.f32.gmra.mrb[0].mxu0 %v820
          %v1619 = vpop.f32.mrb[0].mxu0
          %v1620 = vadd.f32 0.0, %v1619
          %v1621 = vpop.f32.mrb[0].mxu0
          %1622 = vmatprep.mubr.f32.mxu0 0.0
          %1623 = vmatmul.mubr.f32.gmra.mrb[0].mxu0 %v822
          %v1624 = vpop.f32.mrb[0].mxu0
          %v1625 = vadd.f32 0.0, %v1624
          %v1626 = vpop.f32.mrb[0].mxu0
          %1627 = vmatprep.mubr.f32.mxu0 0.0
          %1628 = vmatmul.mubr.f32.gmra.mrb[0].mxu0 %v824
          %v1629 = vpop.f32.mrb[0].mxu0
          %v1630 = vadd.f32 0.0, %v1629
          %v1631 = vpop.f32.mrb[0].mxu0
          %1632 = vmatprep.mubr.f32.mxu0 0.0
          %1633 = vmatmul.mubr.f32.gmra.mrb[0].mxu0 %v826
          %v1634 = vpop.f32.mrb[0].mxu0
          %v1635 = vadd.f32 0.0, %v1634
          %v1636 = vpop.f32.mrb[0].mxu0
          %1637 = vmatprep.mubr.f32.mxu0 0.0
          %1638 = vmatmul.mubr.f32.gmra.mrb[0].mxu0 %v828
          %v1639 = vpop.f32.mrb[0].mxu0
          %v1640 = vadd.f32 0.0, %v1639
          %v1641 = vpop.f32.mrb[0].mxu0
          %1642 = vmatprep.mubr.f32.mxu0 0.0
          %1643 = vmatmul.mubr.f32.gmra.mrb[0].mxu0 %v830
          %v1644 = vpop.f32.mrb[0].mxu0
          %v1645 = vadd.f32 0.0, %v1644
          %v1646 = vpop.f32.mrb[0].mxu0
          %1647 = vmatprep.mubr.f32.mxu0 0.0
          %1648 = vmatmul.mubr.f32.gmra.mrb[0].mxu0 %v832
          %v1649 = vpop.f32.mrb[0].mxu0
          %v1650 = vadd.f32 0.0, %v1649
          %v1651 = vpop.f32.mrb[0].mxu0
          %1652 = vmatprep.mubr.f32.mxu0 0.0
          %1653 = vmatmul.mubr.f32.gmra.mrb[0].mxu0 %v834
          %v1654 = vpop.f32.mrb[0].mxu0
          %v1655 = vadd.f32 0.0, %v1654
          %v1656 = vpop.f32.mrb[0].mxu0
          %1657 = vmatprep.mubr.f32.mxu0 0.0
          %1658 = vmatmul.mubr.f32.gmra.mrb[0].mxu0 %v836
          %v1659 = vpop.f32.mrb[0].mxu0
          %v1660 = vadd.f32 0.0, %v1659
          %v1661 = vpop.f32.mrb[0].mxu0
          %1662 = vmatprep.mubr.f32.mxu0 0.0
          %1663 = vmatmul.mubr.f32.gmra.mrb[0].mxu0 %v838
          %v1664 = vpop.f32.mrb[0].mxu0
          %v1665 = vadd.f32 0.0, %v1664
          %v1666 = vpop.f32.mrb[0].mxu0
          %1667 = vmatprep.mubr.f32.mxu0 0.0
          %1668 = vmatmul.mubr.f32.gmra.mrb[0].mxu0 %v840
          %v1669 = vpop.f32.mrb[0].mxu0
          %v1670 = vadd.f32 0.0, %v1669
          %v1671 = vpop.f32.mrb[0].mxu0
          %1672 = vmatprep.mubr.f32.mxu0 0.0
          %1673 = vmatmul.mubr.f32.gmra.mrb[0].mxu0 %v842
          %v1674 = vpop.f32.mrb[0].mxu0
          %v1675 = vadd.f32 0.0, %v1674
          %v1676 = vpop.f32.mrb[0].mxu0
          %1677 = vmatprep.mubr.f32.mxu0 0.0
          %1678 = vmatmul.mubr.f32.gmra.mrb[0].mxu0 %v844
          %v1679 = vpop.f32.mrb[0].mxu0
          %v1680 = vadd.f32 0.0, %v1679
          %v1681 = vpop.f32.mrb[0].mxu0
          %1682 = vmatprep.mubr.f32.mxu0 0.0
          %1683 = vmatmul.mubr.f32.gmra.mrb[0].mxu0 %v846
          %v1684 = vpop.f32.mrb[0].mxu0
          %v1685 = vadd.f32 0.0, %v1684
          %v1686 = vpop.f32.mrb[0].mxu0
          %1687 = vmatprep.mubr.f32.mxu0 0.0
          %1688 = vmatmul.mubr.f32.gmra.mrb[0].mxu0 %v848
          %v1689 = vpop.f32.mrb[0].mxu0
          %v1690 = vadd.f32 0.0, %v1689
          %v1691 = vpop.f32.mrb[0].mxu0
          %1692 = vmatprep.mubr.f32.mxu0 0.0
          %1693 = vmatmul.mubr.f32.gmra.mrb[0].mxu0 %v850
          %v1694 = vpop.f32.mrb[0].mxu0
          %v1695 = vadd.f32 0.0, %v1694
          %v1696 = vpop.f32.mrb[0].mxu0
          %1697 = vmatprep.mubr.f32.mxu0 0.0
          %1698 = vmatmul.mubr.f32.gmra.mrb[0].mxu0 %v852
          %v1699 = vpop.f32.mrb[0].mxu0
          %v1700 = vadd.f32 0.0, %v1699
          %v1701 = vpop.f32.mrb[0].mxu0
          %1702 = vmatprep.mubr.f32.mxu0 0.0
          %1703 = vmatmul.mubr.f32.gmra.mrb[0].mxu0 %v854
          %v1704 = vpop.f32.mrb[0].mxu0
          %v1705 = vadd.f32 0.0, %v1704
          %v1706 = vpop.f32.mrb[0].mxu0
          %1707 = vmatprep.mubr.f32.mxu0 0.0
          %1708 = vmatmul.mubr.f32.gmra.mrb[0].mxu0 %v856
          %v1709 = vpop.f32.mrb[0].mxu0
          %v1710 = vadd.f32 0.0, %v1709
          %v1711 = vpop.f32.mrb[0].mxu0
          %1712 = vmatprep.mubr.f32.mxu0 0.0
          %1713 = vmatmul.mubr.f32.gmra.mrb[0].mxu0 %v858
          %v1714 = vpop.f32.mrb[0].mxu0
          %v1715 = vadd.f32 0.0, %v1714
          %v1716 = vpop.f32.mrb[0].mxu0
          %1717 = vmatprep.mubr.f32.mxu0 0.0
          %1718 = vmatmul.mubr.f32.gmra.mrb[0].mxu0 %v860
          %v1719 = vpop.f32.mrb[0].mxu0
          %v1720 = vadd.f32 0.0, %v1719
          %v1721 = vpop.f32.mrb[0].mxu0
          %1722 = vmatprep.mubr.f32.mxu0 0.0
          %1723 = vmatmul.mubr.f32.gmra.mrb[0].mxu0 %v1500
          %v1724 = vpop.f32.mrb[0].mxu0
          %v1725 = vadd.f32 0.0, %v1724
          %v1726 = vpop.f32.mrb[0].mxu0
          %1727 = vmatprep.mubr.f32.mxu0 0.0
          %1728 = vmatmul.mubr.f32.gmra.mrb[0].mxu0 %v1503
          %v1729 = vpop.f32.mrb[0].mxu0
          %v1730 = vadd.f32 0.0, %v1729
          %v1731 = vpop.f32.mrb[0].mxu0
          %1732 = vdwg.mxu0
          %v1733 = vadd.f32 %v1465, %v1575
          %v1734 = vadd.f32 %v1466, %v1580
          %v1735 = vadd.f32 %v1467, %v1585
          %v1736 = vadd.f32 %v1468, %v1590
          %v1737 = vadd.f32 %v1469, %v1595
          %v1738 = vadd.f32 %v1470, %v1600
          %v1739 = vadd.f32 %v1471, %v1605
          %v1740 = vadd.f32 %v1472, %v1610
          %v1741 = vadd.f32 %v1473, %v1615
          %v1742 = vadd.f32 %v1474, %v1620
          %v1743 = vadd.f32 %v1475, %v1625
          %v1744 = vadd.f32 %v1476, %v1630
          %v1745 = vadd.f32 %v1477, %v1635
          %v1746 = vadd.f32 %v1478, %v1640
          %v1747 = vadd.f32 %v1479, %v1645
          %v1748 = vadd.f32 %v1480, %v1650
          %v1749 = vadd.f32 %v1481, %v1655
          %v1750 = vadd.f32 %v1482, %v1660
          %v1751 = vadd.f32 %v1483, %v1665
          %v1752 = vadd.f32 %v1484, %v1670
          %v1753 = vadd.f32 %v1485, %v1675
          %v1754 = vadd.f32 %v1486, %v1680
          %v1755 = vadd.f32 %v1487, %v1685
          %v1756 = vadd.f32 %v1488, %v1690
          %v1757 = vadd.f32 %v1489, %v1695
          %v1758 = vadd.f32 %v1490, %v1700
          %v1759 = vadd.f32 %v1491, %v1705
          %v1760 = vadd.f32 %v1492, %v1710
          %v1761 = vadd.f32 %v1493, %v1715
          %v1762 = vadd.f32 %v1494, %v1720
          %v1763 = vadd.f32 %v1495, %v1725
          %v1764 = vadd.f32 %v1496, %v1730
          %v1766 = vrot.slane %v366, 1
          %v1767 = vrot.slane %v367, 1
          %v1768 = vsel %vm421, %v1766, %v1767
          %v1769 = vrot.slane %v368, 1
          %v1770 = vsel %vm421, %v1767, %v1769
          %s1771 = scalar_lea.vmem %s1, 16
          %v1772 = vld [vmem:[%s1771] sm:$0xf]
          %v1773 = vsel %vm504, %v1768, 0
          %v1775 = vsel %vm504, %v1770, 0
          %v1778 = vsel %vm569, %v1772, 0
          %1780 = vmatprep.subr.mxu0 0.0
          %1781 = vmatpush1.msra.mxu0 %v1778
          %1782 = vmatprep.subr.mxu0 0.0
          %1783 = vmatpush1.msra.mxu0 0.0
          %1784 = vmatprep.subr.mxu0 0.0
          %1785 = vmatpush1.msra.mxu0 0.0
          %1786 = vmatprep.subr.mxu0 0.0
          %1787 = vmatpush1.msra.mxu0 0.0
          %1788 = vmatprep.subr.mxu0 0.0
          %1789 = vmatpush1.msra.mxu0 0.0
          %1790 = vmatprep.subr.mxu0 0.0
          %1791 = vmatpush1.msra.mxu0 0.0
          %1792 = vmatprep.subr.mxu0 0.0
          %1793 = vmatpush1.msra.mxu0 0.0
          %1794 = vmatprep.subr.mxu0 0.0
          %1795 = vmatpush1.msra.mxu0 0.0
          %1796 = vmatprep.subr.mxu0 0.0
          %1797 = vmatpush1.msra.mxu0 0.0
          %1798 = vmatprep.subr.mxu0 0.0
          %1799 = vmatpush1.msra.mxu0 0.0
          %1800 = vmatprep.subr.mxu0 0.0
          %1801 = vmatpush1.msra.mxu0 0.0
          %1802 = vmatprep.subr.mxu0 0.0
          %1803 = vmatpush1.msra.mxu0 0.0
          %1804 = vmatprep.subr.mxu0 0.0
          %1805 = vmatpush1.msra.mxu0 0.0
          %1806 = vmatprep.subr.mxu0 0.0
          %1807 = vmatpush1.msra.mxu0 0.0
          %1808 = vmatprep.subr.mxu0 0.0
          %1809 = vmatpush1.msra.mxu0 0.0
          %1810 = vmatprep.subr.mxu0 0.0
          %1811 = vmatpush1.msra.mxu0 0.0
          %1812 = vmatprep.subr.mxu0 0.0
          %1813 = vmatpush1.msra.mxu0 0.0
          %1814 = vmatprep.subr.mxu0 0.0
          %1815 = vmatpush1.msra.mxu0 0.0
          %1816 = vmatprep.subr.mxu0 0.0
          %1817 = vmatpush1.msra.mxu0 0.0
          %1818 = vmatprep.subr.mxu0 0.0
          %1819 = vmatpush1.msra.mxu0 0.0
          %1820 = vmatprep.subr.mxu0 0.0
          %1821 = vmatpush1.msra.mxu0 0.0
          %1822 = vmatprep.subr.mxu0 0.0
          %1823 = vmatpush1.msra.mxu0 0.0
          %1824 = vmatprep.subr.mxu0 0.0
          %1825 = vmatpush1.msra.mxu0 0.0
          %1826 = vmatprep.subr.mxu0 0.0
          %1827 = vmatpush1.msra.mxu0 0.0
          %1828 = vmatprep.subr.mxu0 0.0
          %1829 = vmatpush1.msra.mxu0 0.0
          %1830 = vmatprep.subr.mxu0 0.0
          %1831 = vmatpush1.msra.mxu0 0.0
          %1832 = vmatprep.subr.mxu0 0.0
          %1833 = vmatpush1.msra.mxu0 0.0
          %1834 = vmatprep.subr.mxu0 0.0
          %1835 = vmatpush1.msra.mxu0 0.0
          %1836 = vmatprep.subr.mxu0 0.0
          %1837 = vmatpush1.msra.mxu0 0.0
          %1838 = vmatprep.subr.mxu0 0.0
          %1839 = vmatpush1.msra.mxu0 0.0
          %1840 = vmatprep.subr.mxu0 0.0
          %1841 = vmatpush1.msra.mxu0 0.0
          %1842 = vmatprep.subr.mxu0 0.0
          %1843 = vmatpush1.msra.mxu0 0.0
          %1844 = vmatprep.mubr.f32.mxu0 0.0
          %1845 = vmatmul.mubr.f32.gmra.mrb[0].mxu0 %v509
          %v1846 = vpop.f32.mrb[0].mxu0
          %v1847 = vadd.f32 0.0, %v1846
          %v1848 = vpop.f32.mrb[0].mxu0
          %1849 = vmatprep.mubr.f32.mxu0 0.0
          %1850 = vmatmul.mubr.f32.gmra.mrb[0].mxu0 %v511
          %v1851 = vpop.f32.mrb[0].mxu0
          %v1852 = vadd.f32 0.0, %v1851
          %v1853 = vpop.f32.mrb[0].mxu0
          %1854 = vmatprep.mubr.f32.mxu0 0.0
          %1855 = vmatmul.mubr.f32.gmra.mrb[0].mxu0 %v513
          %v1856 = vpop.f32.mrb[0].mxu0
          %v1857 = vadd.f32 0.0, %v1856
          %v1858 = vpop.f32.mrb[0].mxu0
          %1859 = vmatprep.mubr.f32.mxu0 0.0
          %1860 = vmatmul.mubr.f32.gmra.mrb[0].mxu0 %v515
          %v1861 = vpop.f32.mrb[0].mxu0
          %v1862 = vadd.f32 0.0, %v1861
          %v1863 = vpop.f32.mrb[0].mxu0
          %1864 = vmatprep.mubr.f32.mxu0 0.0
          %1865 = vmatmul.mubr.f32.gmra.mrb[0].mxu0 %v517
          %v1866 = vpop.f32.mrb[0].mxu0
          %v1867 = vadd.f32 0.0, %v1866
          %v1868 = vpop.f32.mrb[0].mxu0
          %1869 = vmatprep.mubr.f32.mxu0 0.0
          %1870 = vmatmul.mubr.f32.gmra.mrb[0].mxu0 %v519
          %v1871 = vpop.f32.mrb[0].mxu0
          %v1872 = vadd.f32 0.0, %v1871
          %v1873 = vpop.f32.mrb[0].mxu0
          %1874 = vmatprep.mubr.f32.mxu0 0.0
          %1875 = vmatmul.mubr.f32.gmra.mrb[0].mxu0 %v521
          %v1876 = vpop.f32.mrb[0].mxu0
          %v1877 = vadd.f32 0.0, %v1876
          %v1878 = vpop.f32.mrb[0].mxu0
          %1879 = vmatprep.mubr.f32.mxu0 0.0
          %1880 = vmatmul.mubr.f32.gmra.mrb[0].mxu0 %v523
          %v1881 = vpop.f32.mrb[0].mxu0
          %v1882 = vadd.f32 0.0, %v1881
          %v1883 = vpop.f32.mrb[0].mxu0
          %1884 = vmatprep.mubr.f32.mxu0 0.0
          %1885 = vmatmul.mubr.f32.gmra.mrb[0].mxu0 %v525
          %v1886 = vpop.f32.mrb[0].mxu0
          %v1887 = vadd.f32 0.0, %v1886
          %v1888 = vpop.f32.mrb[0].mxu0
          %1889 = vmatprep.mubr.f32.mxu0 0.0
          %1890 = vmatmul.mubr.f32.gmra.mrb[0].mxu0 %v527
          %v1891 = vpop.f32.mrb[0].mxu0
          %v1892 = vadd.f32 0.0, %v1891
          %v1893 = vpop.f32.mrb[0].mxu0
          %1894 = vmatprep.mubr.f32.mxu0 0.0
          %1895 = vmatmul.mubr.f32.gmra.mrb[0].mxu0 %v529
          %v1896 = vpop.f32.mrb[0].mxu0
          %v1897 = vadd.f32 0.0, %v1896
          %v1898 = vpop.f32.mrb[0].mxu0
          %1899 = vmatprep.mubr.f32.mxu0 0.0
          %1900 = vmatmul.mubr.f32.gmra.mrb[0].mxu0 %v531
          %v1901 = vpop.f32.mrb[0].mxu0
          %v1902 = vadd.f32 0.0, %v1901
          %v1903 = vpop.f32.mrb[0].mxu0
          %1904 = vmatprep.mubr.f32.mxu0 0.0
          %1905 = vmatmul.mubr.f32.gmra.mrb[0].mxu0 %v533
          %v1906 = vpop.f32.mrb[0].mxu0
          %v1907 = vadd.f32 0.0, %v1906
          %v1908 = vpop.f32.mrb[0].mxu0
          %1909 = vmatprep.mubr.f32.mxu0 0.0
          %1910 = vmatmul.mubr.f32.gmra.mrb[0].mxu0 %v535
          %v1911 = vpop.f32.mrb[0].mxu0
          %v1912 = vadd.f32 0.0, %v1911
          %v1913 = vpop.f32.mrb[0].mxu0
          %1914 = vmatprep.mubr.f32.mxu0 0.0
          %1915 = vmatmul.mubr.f32.gmra.mrb[0].mxu0 %v537
          %v1916 = vpop.f32.mrb[0].mxu0
          %v1917 = vadd.f32 0.0, %v1916
          %v1918 = vpop.f32.mrb[0].mxu0
          %1919 = vmatprep.mubr.f32.mxu0 0.0
          %1920 = vmatmul.mubr.f32.gmra.mrb[0].mxu0 %v539
          %v1921 = vpop.f32.mrb[0].mxu0
          %v1922 = vadd.f32 0.0, %v1921
          %v1923 = vpop.f32.mrb[0].mxu0
          %1924 = vmatprep.mubr.f32.mxu0 0.0
          %1925 = vmatmul.mubr.f32.gmra.mrb[0].mxu0 %v541
          %v1926 = vpop.f32.mrb[0].mxu0
          %v1927 = vadd.f32 0.0, %v1926
          %v1928 = vpop.f32.mrb[0].mxu0
          %1929 = vmatprep.mubr.f32.mxu0 0.0
          %1930 = vmatmul.mubr.f32.gmra.mrb[0].mxu0 %v543
          %v1931 = vpop.f32.mrb[0].mxu0
          %v1932 = vadd.f32 0.0, %v1931
          %v1933 = vpop.f32.mrb[0].mxu0
          %1934 = vmatprep.mubr.f32.mxu0 0.0
          %1935 = vmatmul.mubr.f32.gmra.mrb[0].mxu0 %v545
          %v1936 = vpop.f32.mrb[0].mxu0
          %v1937 = vadd.f32 0.0, %v1936
          %v1938 = vpop.f32.mrb[0].mxu0
          %1939 = vmatprep.mubr.f32.mxu0 0.0
          %1940 = vmatmul.mubr.f32.gmra.mrb[0].mxu0 %v547
          %v1941 = vpop.f32.mrb[0].mxu0
          %v1942 = vadd.f32 0.0, %v1941
          %v1943 = vpop.f32.mrb[0].mxu0
          %1944 = vmatprep.mubr.f32.mxu0 0.0
          %1945 = vmatmul.mubr.f32.gmra.mrb[0].mxu0 %v549
          %v1946 = vpop.f32.mrb[0].mxu0
          %v1947 = vadd.f32 0.0, %v1946
          %v1948 = vpop.f32.mrb[0].mxu0
          %1949 = vmatprep.mubr.f32.mxu0 0.0
          %1950 = vmatmul.mubr.f32.gmra.mrb[0].mxu0 %v551
          %v1951 = vpop.f32.mrb[0].mxu0
          %v1952 = vadd.f32 0.0, %v1951
          %v1953 = vpop.f32.mrb[0].mxu0
          %1954 = vmatprep.mubr.f32.mxu0 0.0
          %1955 = vmatmul.mubr.f32.gmra.mrb[0].mxu0 %v553
          %v1956 = vpop.f32.mrb[0].mxu0
          %v1957 = vadd.f32 0.0, %v1956
          %v1958 = vpop.f32.mrb[0].mxu0
          %1959 = vmatprep.mubr.f32.mxu0 0.0
          %1960 = vmatmul.mubr.f32.gmra.mrb[0].mxu0 %v555
          %v1961 = vpop.f32.mrb[0].mxu0
          %v1962 = vadd.f32 0.0, %v1961
          %v1963 = vpop.f32.mrb[0].mxu0
          %1964 = vmatprep.mubr.f32.mxu0 0.0
          %1965 = vmatmul.mubr.f32.gmra.mrb[0].mxu0 %v557
          %v1966 = vpop.f32.mrb[0].mxu0
          %v1967 = vadd.f32 0.0, %v1966
          %v1968 = vpop.f32.mrb[0].mxu0
          %1969 = vmatprep.mubr.f32.mxu0 0.0
          %1970 = vmatmul.mubr.f32.gmra.mrb[0].mxu0 %v559
          %v1971 = vpop.f32.mrb[0].mxu0
          %v1972 = vadd.f32 0.0, %v1971
          %v1973 = vpop.f32.mrb[0].mxu0
          %1974 = vmatprep.mubr.f32.mxu0 0.0
          %1975 = vmatmul.mubr.f32.gmra.mrb[0].mxu0 %v561
          %v1976 = vpop.f32.mrb[0].mxu0
          %v1977 = vadd.f32 0.0, %v1976
          %v1978 = vpop.f32.mrb[0].mxu0
          %1979 = vmatprep.mubr.f32.mxu0 0.0
          %1980 = vmatmul.mubr.f32.gmra.mrb[0].mxu0 %v563
          %v1981 = vpop.f32.mrb[0].mxu0
          %v1982 = vadd.f32 0.0, %v1981
          %v1983 = vpop.f32.mrb[0].mxu0
          %1984 = vmatprep.mubr.f32.mxu0 0.0
          %1985 = vmatmul.mubr.f32.gmra.mrb[0].mxu0 %v565
          %v1986 = vpop.f32.mrb[0].mxu0
          %v1987 = vadd.f32 0.0, %v1986
          %v1988 = vpop.f32.mrb[0].mxu0
          %1989 = vmatprep.mubr.f32.mxu0 0.0
          %1990 = vmatmul.mubr.f32.gmra.mrb[0].mxu0 %v567
          %v1991 = vpop.f32.mrb[0].mxu0
          %v1992 = vadd.f32 0.0, %v1991
          %v1993 = vpop.f32.mrb[0].mxu0
          %1994 = vmatprep.mubr.f32.mxu0 0.0
          %1995 = vmatmul.mubr.f32.gmra.mrb[0].mxu0 %v1773
          %v1996 = vpop.f32.mrb[0].mxu0
          %v1997 = vadd.f32 0.0, %v1996
          %v1998 = vpop.f32.mrb[0].mxu0
          %1999 = vmatprep.mubr.f32.mxu0 0.0
          %2000 = vmatmul.mubr.f32.gmra.mrb[0].mxu0 %v1775
          %v2001 = vpop.f32.mrb[0].mxu0
          %v2002 = vadd.f32 0.0, %v2001
          %v2003 = vpop.f32.mrb[0].mxu0
          %2004 = vdwg.mxu0
          %v2005 = vadd.f32 %v1733, %v1847
          %v2006 = vadd.f32 %v1734, %v1852
          %v2007 = vadd.f32 %v1735, %v1857
          %v2008 = vadd.f32 %v1736, %v1862
          %v2009 = vadd.f32 %v1737, %v1867
          %v2010 = vadd.f32 %v1738, %v1872
          %v2011 = vadd.f32 %v1739, %v1877
          %v2012 = vadd.f32 %v1740, %v1882
          %v2013 = vadd.f32 %v1741, %v1887
          %v2014 = vadd.f32 %v1742, %v1892
          %v2015 = vadd.f32 %v1743, %v1897
          %v2016 = vadd.f32 %v1744, %v1902
          %v2017 = vadd.f32 %v1745, %v1907
          %v2018 = vadd.f32 %v1746, %v1912
          %v2019 = vadd.f32 %v1747, %v1917
          %v2020 = vadd.f32 %v1748, %v1922
          %v2021 = vadd.f32 %v1749, %v1927
          %v2022 = vadd.f32 %v1750, %v1932
          %v2023 = vadd.f32 %v1751, %v1937
          %v2024 = vadd.f32 %v1752, %v1942
          %v2025 = vadd.f32 %v1753, %v1947
          %v2026 = vadd.f32 %v1754, %v1952
          %v2027 = vadd.f32 %v1755, %v1957
          %v2028 = vadd.f32 %v1756, %v1962
          %v2029 = vadd.f32 %v1757, %v1967
          %v2030 = vadd.f32 %v1758, %v1972
          %v2031 = vadd.f32 %v1759, %v1977
          %v2032 = vadd.f32 %v1760, %v1982
          %v2033 = vadd.f32 %v1761, %v1987
          %v2034 = vadd.f32 %v1762, %v1992
          %v2035 = vadd.f32 %v1763, %v1997
          %v2036 = vadd.f32 %v1764, %v2002
          %v2037 = vrot.slane %v366, 2
          %v2038 = vrot.slane %v367, 2
          %v2039 = vsel %vm1090, %v2037, %v2038
          %v2040 = vrot.slane %v368, 2
          %v2041 = vsel %vm1090, %v2038, %v2040
          %s2042 = scalar_lea.vmem %s1, 20
          %v2043 = vld [vmem:[%s2042] sm:$0xf]
          %v2044 = vsel %vm504, %v2039, 0
          %v2046 = vsel %vm504, %v2041, 0
          %v2049 = vsel %vm569, %v2043, 0
          %2051 = vmatprep.subr.mxu0 0.0
          %2052 = vmatpush1.msra.mxu0 %v2049
          %2053 = vmatprep.subr.mxu0 0.0
          %2054 = vmatpush1.msra.mxu0 0.0
          %2055 = vmatprep.subr.mxu0 0.0
          %2056 = vmatpush1.msra.mxu0 0.0
          %2057 = vmatprep.subr.mxu0 0.0
          %2058 = vmatpush1.msra.mxu0 0.0
          %2059 = vmatprep.subr.mxu0 0.0
          %2060 = vmatpush1.msra.mxu0 0.0
          %2061 = vmatprep.subr.mxu0 0.0
          %2062 = vmatpush1.msra.mxu0 0.0
          %2063 = vmatprep.subr.mxu0 0.0
          %2064 = vmatpush1.msra.mxu0 0.0
          %2065 = vmatprep.subr.mxu0 0.0
          %2066 = vmatpush1.msra.mxu0 0.0
          %2067 = vmatprep.subr.mxu0 0.0
          %2068 = vmatpush1.msra.mxu0 0.0
          %2069 = vmatprep.subr.mxu0 0.0
          %2070 = vmatpush1.msra.mxu0 0.0
          %2071 = vmatprep.subr.mxu0 0.0
          %2072 = vmatpush1.msra.mxu0 0.0
          %2073 = vmatprep.subr.mxu0 0.0
          %2074 = vmatpush1.msra.mxu0 0.0
          %2075 = vmatprep.subr.mxu0 0.0
          %2076 = vmatpush1.msra.mxu0 0.0
          %2077 = vmatprep.subr.mxu0 0.0
          %2078 = vmatpush1.msra.mxu0 0.0
          %2079 = vmatprep.subr.mxu0 0.0
          %2080 = vmatpush1.msra.mxu0 0.0
          %2081 = vmatprep.subr.mxu0 0.0
          %2082 = vmatpush1.msra.mxu0 0.0
          %2083 = vmatprep.subr.mxu0 0.0
          %2084 = vmatpush1.msra.mxu0 0.0
          %2085 = vmatprep.subr.mxu0 0.0
          %2086 = vmatpush1.msra.mxu0 0.0
          %2087 = vmatprep.subr.mxu0 0.0
          %2088 = vmatpush1.msra.mxu0 0.0
          %2089 = vmatprep.subr.mxu0 0.0
          %2090 = vmatpush1.msra.mxu0 0.0
          %2091 = vmatprep.subr.mxu0 0.0
          %2092 = vmatpush1.msra.mxu0 0.0
          %2093 = vmatprep.subr.mxu0 0.0
          %2094 = vmatpush1.msra.mxu0 0.0
          %2095 = vmatprep.subr.mxu0 0.0
          %2096 = vmatpush1.msra.mxu0 0.0
          %2097 = vmatprep.subr.mxu0 0.0
          %2098 = vmatpush1.msra.mxu0 0.0
          %2099 = vmatprep.subr.mxu0 0.0
          %2100 = vmatpush1.msra.mxu0 0.0
          %2101 = vmatprep.subr.mxu0 0.0
          %2102 = vmatpush1.msra.mxu0 0.0
          %2103 = vmatprep.subr.mxu0 0.0
          %2104 = vmatpush1.msra.mxu0 0.0
          %2105 = vmatprep.subr.mxu0 0.0
          %2106 = vmatpush1.msra.mxu0 0.0
          %2107 = vmatprep.subr.mxu0 0.0
          %2108 = vmatpush1.msra.mxu0 0.0
          %2109 = vmatprep.subr.mxu0 0.0
          %2110 = vmatpush1.msra.mxu0 0.0
          %2111 = vmatprep.subr.mxu0 0.0
          %2112 = vmatpush1.msra.mxu0 0.0
          %2113 = vmatprep.subr.mxu0 0.0
          %2114 = vmatpush1.msra.mxu0 0.0
          %2115 = vmatprep.mubr.f32.mxu0 0.0
          %2116 = vmatmul.mubr.f32.gmra.mrb[0].mxu0 %v1177
          %v2117 = vpop.f32.mrb[0].mxu0
          %v2118 = vadd.f32 0.0, %v2117
          %v2119 = vpop.f32.mrb[0].mxu0
          %2120 = vmatprep.mubr.f32.mxu0 0.0
          %2121 = vmatmul.mubr.f32.gmra.mrb[0].mxu0 %v1179
          %v2122 = vpop.f32.mrb[0].mxu0
          %v2123 = vadd.f32 0.0, %v2122
          %v2124 = vpop.f32.mrb[0].mxu0
          %2125 = vmatprep.mubr.f32.mxu0 0.0
          %2126 = vmatmul.mubr.f32.gmra.mrb[0].mxu0 %v1181
          %v2127 = vpop.f32.mrb[0].mxu0
          %v2128 = vadd.f32 0.0, %v2127
          %v2129 = vpop.f32.mrb[0].mxu0
          %2130 = vmatprep.mubr.f32.mxu0 0.0
          %2131 = vmatmul.mubr.f32.gmra.mrb[0].mxu0 %v1183
          %v2132 = vpop.f32.mrb[0].mxu0
          %v2133 = vadd.f32 0.0, %v2132
          %v2134 = vpop.f32.mrb[0].mxu0
          %2135 = vmatprep.mubr.f32.mxu0 0.0
          %2136 = vmatmul.mubr.f32.gmra.mrb[0].mxu0 %v1185
          %v2137 = vpop.f32.mrb[0].mxu0
          %v2138 = vadd.f32 0.0, %v2137
          %v2139 = vpop.f32.mrb[0].mxu0
          %2140 = vmatprep.mubr.f32.mxu0 0.0
          %2141 = vmatmul.mubr.f32.gmra.mrb[0].mxu0 %v1187
          %v2142 = vpop.f32.mrb[0].mxu0
          %v2143 = vadd.f32 0.0, %v2142
          %v2144 = vpop.f32.mrb[0].mxu0
          %2145 = vmatprep.mubr.f32.mxu0 0.0
          %2146 = vmatmul.mubr.f32.gmra.mrb[0].mxu0 %v1189
          %v2147 = vpop.f32.mrb[0].mxu0
          %v2148 = vadd.f32 0.0, %v2147
          %v2149 = vpop.f32.mrb[0].mxu0
          %2150 = vmatprep.mubr.f32.mxu0 0.0
          %2151 = vmatmul.mubr.f32.gmra.mrb[0].mxu0 %v1191
          %v2152 = vpop.f32.mrb[0].mxu0
          %v2153 = vadd.f32 0.0, %v2152
          %v2154 = vpop.f32.mrb[0].mxu0
          %2155 = vmatprep.mubr.f32.mxu0 0.0
          %2156 = vmatmul.mubr.f32.gmra.mrb[0].mxu0 %v1193
          %v2157 = vpop.f32.mrb[0].mxu0
          %v2158 = vadd.f32 0.0, %v2157
          %v2159 = vpop.f32.mrb[0].mxu0
          %2160 = vmatprep.mubr.f32.mxu0 0.0
          %2161 = vmatmul.mubr.f32.gmra.mrb[0].mxu0 %v1195
          %v2162 = vpop.f32.mrb[0].mxu0
          %v2163 = vadd.f32 0.0, %v2162
          %v2164 = vpop.f32.mrb[0].mxu0
          %2165 = vmatprep.mubr.f32.mxu0 0.0
          %2166 = vmatmul.mubr.f32.gmra.mrb[0].mxu0 %v1197
          %v2167 = vpop.f32.mrb[0].mxu0
          %v2168 = vadd.f32 0.0, %v2167
          %v2169 = vpop.f32.mrb[0].mxu0
          %2170 = vmatprep.mubr.f32.mxu0 0.0
          %2171 = vmatmul.mubr.f32.gmra.mrb[0].mxu0 %v1199
          %v2172 = vpop.f32.mrb[0].mxu0
          %v2173 = vadd.f32 0.0, %v2172
          %v2174 = vpop.f32.mrb[0].mxu0
          %2175 = vmatprep.mubr.f32.mxu0 0.0
          %2176 = vmatmul.mubr.f32.gmra.mrb[0].mxu0 %v1201
          %v2177 = vpop.f32.mrb[0].mxu0
          %v2178 = vadd.f32 0.0, %v2177
          %v2179 = vpop.f32.mrb[0].mxu0
          %2180 = vmatprep.mubr.f32.mxu0 0.0
          %2181 = vmatmul.mubr.f32.gmra.mrb[0].mxu0 %v1203
          %v2182 = vpop.f32.mrb[0].mxu0
          %v2183 = vadd.f32 0.0, %v2182
          %v2184 = vpop.f32.mrb[0].mxu0
          %2185 = vmatprep.mubr.f32.mxu0 0.0
          %2186 = vmatmul.mubr.f32.gmra.mrb[0].mxu0 %v1205
          %v2187 = vpop.f32.mrb[0].mxu0
          %v2188 = vadd.f32 0.0, %v2187
          %v2189 = vpop.f32.mrb[0].mxu0
          %2190 = vmatprep.mubr.f32.mxu0 0.0
          %2191 = vmatmul.mubr.f32.gmra.mrb[0].mxu0 %v1207
          %v2192 = vpop.f32.mrb[0].mxu0
          %v2193 = vadd.f32 0.0, %v2192
          %v2194 = vpop.f32.mrb[0].mxu0
          %2195 = vmatprep.mubr.f32.mxu0 0.0
          %2196 = vmatmul.mubr.f32.gmra.mrb[0].mxu0 %v1209
          %v2197 = vpop.f32.mrb[0].mxu0
          %v2198 = vadd.f32 0.0, %v2197
          %v2199 = vpop.f32.mrb[0].mxu0
          %2200 = vmatprep.mubr.f32.mxu0 0.0
          %2201 = vmatmul.mubr.f32.gmra.mrb[0].mxu0 %v1211
          %v2202 = vpop.f32.mrb[0].mxu0
          %v2203 = vadd.f32 0.0, %v2202
          %v2204 = vpop.f32.mrb[0].mxu0
          %2205 = vmatprep.mubr.f32.mxu0 0.0
          %2206 = vmatmul.mubr.f32.gmra.mrb[0].mxu0 %v1213
          %v2207 = vpop.f32.mrb[0].mxu0
          %v2208 = vadd.f32 0.0, %v2207
          %v2209 = vpop.f32.mrb[0].mxu0
          %2210 = vmatprep.mubr.f32.mxu0 0.0
          %2211 = vmatmul.mubr.f32.gmra.mrb[0].mxu0 %v1215
          %v2212 = vpop.f32.mrb[0].mxu0
          %v2213 = vadd.f32 0.0, %v2212
          %v2214 = vpop.f32.mrb[0].mxu0
          %2215 = vmatprep.mubr.f32.mxu0 0.0
          %2216 = vmatmul.mubr.f32.gmra.mrb[0].mxu0 %v1217
          %v2217 = vpop.f32.mrb[0].mxu0
          %v2218 = vadd.f32 0.0, %v2217
          %v2219 = vpop.f32.mrb[0].mxu0
          %2220 = vmatprep.mubr.f32.mxu0 0.0
          %2221 = vmatmul.mubr.f32.gmra.mrb[0].mxu0 %v1219
          %v2222 = vpop.f32.mrb[0].mxu0
          %v2223 = vadd.f32 0.0, %v2222
          %v2224 = vpop.f32.mrb[0].mxu0
          %2225 = vmatprep.mubr.f32.mxu0 0.0
          %2226 = vmatmul.mubr.f32.gmra.mrb[0].mxu0 %v1221
          %v2227 = vpop.f32.mrb[0].mxu0
          %v2228 = vadd.f32 0.0, %v2227
          %v2229 = vpop.f32.mrb[0].mxu0
          %2230 = vmatprep.mubr.f32.mxu0 0.0
          %2231 = vmatmul.mubr.f32.gmra.mrb[0].mxu0 %v1223
          %v2232 = vpop.f32.mrb[0].mxu0
          %v2233 = vadd.f32 0.0, %v2232
          %v2234 = vpop.f32.mrb[0].mxu0
          %2235 = vmatprep.mubr.f32.mxu0 0.0
          %2236 = vmatmul.mubr.f32.gmra.mrb[0].mxu0 %v1225
          %v2237 = vpop.f32.mrb[0].mxu0
          %v2238 = vadd.f32 0.0, %v2237
          %v2239 = vpop.f32.mrb[0].mxu0
          %2240 = vmatprep.mubr.f32.mxu0 0.0
          %2241 = vmatmul.mubr.f32.gmra.mrb[0].mxu0 %v1227
          %v2242 = vpop.f32.mrb[0].mxu0
          %v2243 = vadd.f32 0.0, %v2242
          %v2244 = vpop.f32.mrb[0].mxu0
          %2245 = vmatprep.mubr.f32.mxu0 0.0
          %2246 = vmatmul.mubr.f32.gmra.mrb[0].mxu0 %v1229
          %v2247 = vpop.f32.mrb[0].mxu0
          %v2248 = vadd.f32 0.0, %v2247
          %v2249 = vpop.f32.mrb[0].mxu0
          %2250 = vmatprep.mubr.f32.mxu0 0.0
          %2251 = vmatmul.mubr.f32.gmra.mrb[0].mxu0 %v1231
          %v2252 = vpop.f32.mrb[0].mxu0
          %v2253 = vadd.f32 0.0, %v2252
          %v2254 = vpop.f32.mrb[0].mxu0
          %2255 = vmatprep.mubr.f32.mxu0 0.0
          %2256 = vmatmul.mubr.f32.gmra.mrb[0].mxu0 %v1233
          %v2257 = vpop.f32.mrb[0].mxu0
          %v2258 = vadd.f32 0.0, %v2257
          %v2259 = vpop.f32.mrb[0].mxu0
          %2260 = vmatprep.mubr.f32.mxu0 0.0
          %2261 = vmatmul.mubr.f32.gmra.mrb[0].mxu0 %v1235
          %v2262 = vpop.f32.mrb[0].mxu0
          %v2263 = vadd.f32 0.0, %v2262
          %v2264 = vpop.f32.mrb[0].mxu0
          %2265 = vmatprep.mubr.f32.mxu0 0.0
          %2266 = vmatmul.mubr.f32.gmra.mrb[0].mxu0 %v2044
          %v2267 = vpop.f32.mrb[0].mxu0
          %v2268 = vadd.f32 0.0, %v2267
          %v2269 = vpop.f32.mrb[0].mxu0
          %2270 = vmatprep.mubr.f32.mxu0 0.0
          %2271 = vmatmul.mubr.f32.gmra.mrb[0].mxu0 %v2046
          %v2272 = vpop.f32.mrb[0].mxu0
          %v2273 = vadd.f32 0.0, %v2272
          %v2274 = vpop.f32.mrb[0].mxu0
          %2275 = vdwg.mxu0
          %v2276 = vadd.f32 %v2005, %v2118
          %v2277 = vadd.f32 %v2006, %v2123
          %v2278 = vadd.f32 %v2007, %v2128
          %v2279 = vadd.f32 %v2008, %v2133
          %v2280 = vadd.f32 %v2009, %v2138
          %v2281 = vadd.f32 %v2010, %v2143
          %v2282 = vadd.f32 %v2011, %v2148
          %v2283 = vadd.f32 %v2012, %v2153
          %v2284 = vadd.f32 %v2013, %v2158
          %v2285 = vadd.f32 %v2014, %v2163
          %v2286 = vadd.f32 %v2015, %v2168
          %v2287 = vadd.f32 %v2016, %v2173
          %v2288 = vadd.f32 %v2017, %v2178
          %v2289 = vadd.f32 %v2018, %v2183
          %v2290 = vadd.f32 %v2019, %v2188
          %v2291 = vadd.f32 %v2020, %v2193
          %v2292 = vadd.f32 %v2021, %v2198
          %v2293 = vadd.f32 %v2022, %v2203
          %v2294 = vadd.f32 %v2023, %v2208
          %v2295 = vadd.f32 %v2024, %v2213
          %v2296 = vadd.f32 %v2025, %v2218
          %v2297 = vadd.f32 %v2026, %v2223
          %v2298 = vadd.f32 %v2027, %v2228
          %v2299 = vadd.f32 %v2028, %v2233
          %v2300 = vadd.f32 %v2029, %v2238
          %v2301 = vadd.f32 %v2030, %v2243
          %v2302 = vadd.f32 %v2031, %v2248
          %v2303 = vadd.f32 %v2032, %v2253
          %v2304 = vadd.f32 %v2033, %v2258
          %v2305 = vadd.f32 %v2034, %v2263
          %v2306 = vadd.f32 %v2035, %v2268
          %v2307 = vadd.f32 %v2036, %v2273
          %s2308 = scalar_lea.vmem %s1, 24
          %v2309 = vld [vmem:[%s2308] sm:$0xf]
          %v2311 = vsel %vm504, %v369, 0
          %v2314 = vsel %vm504, %v370, 0
          %v2317 = vsel %vm569, %v2309, 0
          %2319 = vmatprep.subr.mxu0 0.0
          %2320 = vmatpush1.msra.mxu0 %v2317
          %2321 = vmatprep.subr.mxu0 0.0
          %2322 = vmatpush1.msra.mxu0 0.0
          %2323 = vmatprep.subr.mxu0 0.0
          %2324 = vmatpush1.msra.mxu0 0.0
          %2325 = vmatprep.subr.mxu0 0.0
          %2326 = vmatpush1.msra.mxu0 0.0
          %2327 = vmatprep.subr.mxu0 0.0
          %2328 = vmatpush1.msra.mxu0 0.0
          %2329 = vmatprep.subr.mxu0 0.0
          %2330 = vmatpush1.msra.mxu0 0.0
          %2331 = vmatprep.subr.mxu0 0.0
          %2332 = vmatpush1.msra.mxu0 0.0
          %2333 = vmatprep.subr.mxu0 0.0
          %2334 = vmatpush1.msra.mxu0 0.0
          %2335 = vmatprep.subr.mxu0 0.0
          %2336 = vmatpush1.msra.mxu0 0.0
          %2337 = vmatprep.subr.mxu0 0.0
          %2338 = vmatpush1.msra.mxu0 0.0
          %2339 = vmatprep.subr.mxu0 0.0
          %2340 = vmatpush1.msra.mxu0 0.0
          %2341 = vmatprep.subr.mxu0 0.0
          %2342 = vmatpush1.msra.mxu0 0.0
          %2343 = vmatprep.subr.mxu0 0.0
          %2344 = vmatpush1.msra.mxu0 0.0
          %2345 = vmatprep.subr.mxu0 0.0
          %2346 = vmatpush1.msra.mxu0 0.0
          %2347 = vmatprep.subr.mxu0 0.0
          %2348 = vmatpush1.msra.mxu0 0.0
          %2349 = vmatprep.subr.mxu0 0.0
          %2350 = vmatpush1.msra.mxu0 0.0
          %2351 = vmatprep.subr.mxu0 0.0
          %2352 = vmatpush1.msra.mxu0 0.0
          %2353 = vmatprep.subr.mxu0 0.0
          %2354 = vmatpush1.msra.mxu0 0.0
          %2355 = vmatprep.subr.mxu0 0.0
          %2356 = vmatpush1.msra.mxu0 0.0
          %2357 = vmatprep.subr.mxu0 0.0
          %2358 = vmatpush1.msra.mxu0 0.0
          %2359 = vmatprep.subr.mxu0 0.0
          %2360 = vmatpush1.msra.mxu0 0.0
          %2361 = vmatprep.subr.mxu0 0.0
          %2362 = vmatpush1.msra.mxu0 0.0
          %2363 = vmatprep.subr.mxu0 0.0
          %2364 = vmatpush1.msra.mxu0 0.0
          %2365 = vmatprep.subr.mxu0 0.0
          %2366 = vmatpush1.msra.mxu0 0.0
          %2367 = vmatprep.subr.mxu0 0.0
          %2368 = vmatpush1.msra.mxu0 0.0
          %2369 = vmatprep.subr.mxu0 0.0
          %2370 = vmatpush1.msra.mxu0 0.0
          %2371 = vmatprep.subr.mxu0 0.0
          %2372 = vmatpush1.msra.mxu0 0.0
          %2373 = vmatprep.subr.mxu0 0.0
          %2374 = vmatpush1.msra.mxu0 0.0
          %2375 = vmatprep.subr.mxu0 0.0
          %2376 = vmatpush1.msra.mxu0 0.0
          %2377 = vmatprep.subr.mxu0 0.0
          %2378 = vmatpush1.msra.mxu0 0.0
          %2379 = vmatprep.subr.mxu0 0.0
          %2380 = vmatpush1.msra.mxu0 0.0
          %2381 = vmatprep.subr.mxu0 0.0
          %2382 = vmatpush1.msra.mxu0 0.0
          %2383 = vmatprep.mubr.f32.mxu0 0.0
          %2384 = vmatmul.mubr.f32.gmra.mrb[0].mxu0 %v806
          %v2385 = vpop.f32.mrb[0].mxu0
          %v2386 = vadd.f32 0.0, %v2385
          %v2387 = vpop.f32.mrb[0].mxu0
          %2388 = vmatprep.mubr.f32.mxu0 0.0
          %2389 = vmatmul.mubr.f32.gmra.mrb[0].mxu0 %v808
          %v2390 = vpop.f32.mrb[0].mxu0
          %v2391 = vadd.f32 0.0, %v2390
          %v2392 = vpop.f32.mrb[0].mxu0
          %2393 = vmatprep.mubr.f32.mxu0 0.0
          %2394 = vmatmul.mubr.f32.gmra.mrb[0].mxu0 %v810
          %v2395 = vpop.f32.mrb[0].mxu0
          %v2396 = vadd.f32 0.0, %v2395
          %v2397 = vpop.f32.mrb[0].mxu0
          %2398 = vmatprep.mubr.f32.mxu0 0.0
          %2399 = vmatmul.mubr.f32.gmra.mrb[0].mxu0 %v812
          %v2400 = vpop.f32.mrb[0].mxu0
          %v2401 = vadd.f32 0.0, %v2400
          %v2402 = vpop.f32.mrb[0].mxu0
          %2403 = vmatprep.mubr.f32.mxu0 0.0
          %2404 = vmatmul.mubr.f32.gmra.mrb[0].mxu0 %v814
          %v2405 = vpop.f32.mrb[0].mxu0
          %v2406 = vadd.f32 0.0, %v2405
          %v2407 = vpop.f32.mrb[0].mxu0
          %2408 = vmatprep.mubr.f32.mxu0 0.0
          %2409 = vmatmul.mubr.f32.gmra.mrb[0].mxu0 %v816
          %v2410 = vpop.f32.mrb[0].mxu0
          %v2411 = vadd.f32 0.0, %v2410
          %v2412 = vpop.f32.mrb[0].mxu0
          %2413 = vmatprep.mubr.f32.mxu0 0.0
          %2414 = vmatmul.mubr.f32.gmra.mrb[0].mxu0 %v818
          %v2415 = vpop.f32.mrb[0].mxu0
          %v2416 = vadd.f32 0.0, %v2415
          %v2417 = vpop.f32.mrb[0].mxu0
          %2418 = vmatprep.mubr.f32.mxu0 0.0
          %2419 = vmatmul.mubr.f32.gmra.mrb[0].mxu0 %v820
          %v2420 = vpop.f32.mrb[0].mxu0
          %v2421 = vadd.f32 0.0, %v2420
          %v2422 = vpop.f32.mrb[0].mxu0
          %2423 = vmatprep.mubr.f32.mxu0 0.0
          %2424 = vmatmul.mubr.f32.gmra.mrb[0].mxu0 %v822
          %v2425 = vpop.f32.mrb[0].mxu0
          %v2426 = vadd.f32 0.0, %v2425
          %v2427 = vpop.f32.mrb[0].mxu0
          %2428 = vmatprep.mubr.f32.mxu0 0.0
          %2429 = vmatmul.mubr.f32.gmra.mrb[0].mxu0 %v824
          %v2430 = vpop.f32.mrb[0].mxu0
          %v2431 = vadd.f32 0.0, %v2430
          %v2432 = vpop.f32.mrb[0].mxu0
          %2433 = vmatprep.mubr.f32.mxu0 0.0
          %2434 = vmatmul.mubr.f32.gmra.mrb[0].mxu0 %v826
          %v2435 = vpop.f32.mrb[0].mxu0
          %v2436 = vadd.f32 0.0, %v2435
          %v2437 = vpop.f32.mrb[0].mxu0
          %2438 = vmatprep.mubr.f32.mxu0 0.0
          %2439 = vmatmul.mubr.f32.gmra.mrb[0].mxu0 %v828
          %v2440 = vpop.f32.mrb[0].mxu0
          %v2441 = vadd.f32 0.0, %v2440
          %v2442 = vpop.f32.mrb[0].mxu0
          %2443 = vmatprep.mubr.f32.mxu0 0.0
          %2444 = vmatmul.mubr.f32.gmra.mrb[0].mxu0 %v830
          %v2445 = vpop.f32.mrb[0].mxu0
          %v2446 = vadd.f32 0.0, %v2445
          %v2447 = vpop.f32.mrb[0].mxu0
          %2448 = vmatprep.mubr.f32.mxu0 0.0
          %2449 = vmatmul.mubr.f32.gmra.mrb[0].mxu0 %v832
          %v2450 = vpop.f32.mrb[0].mxu0
          %v2451 = vadd.f32 0.0, %v2450
          %v2452 = vpop.f32.mrb[0].mxu0
          %2453 = vmatprep.mubr.f32.mxu0 0.0
          %2454 = vmatmul.mubr.f32.gmra.mrb[0].mxu0 %v834
          %v2455 = vpop.f32.mrb[0].mxu0
          %v2456 = vadd.f32 0.0, %v2455
          %v2457 = vpop.f32.mrb[0].mxu0
          %2458 = vmatprep.mubr.f32.mxu0 0.0
          %2459 = vmatmul.mubr.f32.gmra.mrb[0].mxu0 %v836
          %v2460 = vpop.f32.mrb[0].mxu0
          %v2461 = vadd.f32 0.0, %v2460
          %v2462 = vpop.f32.mrb[0].mxu0
          %2463 = vmatprep.mubr.f32.mxu0 0.0
          %2464 = vmatmul.mubr.f32.gmra.mrb[0].mxu0 %v838
          %v2465 = vpop.f32.mrb[0].mxu0
          %v2466 = vadd.f32 0.0, %v2465
          %v2467 = vpop.f32.mrb[0].mxu0
          %2468 = vmatprep.mubr.f32.mxu0 0.0
          %2469 = vmatmul.mubr.f32.gmra.mrb[0].mxu0 %v840
          %v2470 = vpop.f32.mrb[0].mxu0
          %v2471 = vadd.f32 0.0, %v2470
          %v2472 = vpop.f32.mrb[0].mxu0
          %2473 = vmatprep.mubr.f32.mxu0 0.0
          %2474 = vmatmul.mubr.f32.gmra.mrb[0].mxu0 %v842
          %v2475 = vpop.f32.mrb[0].mxu0
          %v2476 = vadd.f32 0.0, %v2475
          %v2477 = vpop.f32.mrb[0].mxu0
          %2478 = vmatprep.mubr.f32.mxu0 0.0
          %2479 = vmatmul.mubr.f32.gmra.mrb[0].mxu0 %v844
          %v2480 = vpop.f32.mrb[0].mxu0
          %v2481 = vadd.f32 0.0, %v2480
          %v2482 = vpop.f32.mrb[0].mxu0
          %2483 = vmatprep.mubr.f32.mxu0 0.0
          %2484 = vmatmul.mubr.f32.gmra.mrb[0].mxu0 %v846
          %v2485 = vpop.f32.mrb[0].mxu0
          %v2486 = vadd.f32 0.0, %v2485
          %v2487 = vpop.f32.mrb[0].mxu0
          %2488 = vmatprep.mubr.f32.mxu0 0.0
          %2489 = vmatmul.mubr.f32.gmra.mrb[0].mxu0 %v848
          %v2490 = vpop.f32.mrb[0].mxu0
          %v2491 = vadd.f32 0.0, %v2490
          %v2492 = vpop.f32.mrb[0].mxu0
          %2493 = vmatprep.mubr.f32.mxu0 0.0
          %2494 = vmatmul.mubr.f32.gmra.mrb[0].mxu0 %v850
          %v2495 = vpop.f32.mrb[0].mxu0
          %v2496 = vadd.f32 0.0, %v2495
          %v2497 = vpop.f32.mrb[0].mxu0
          %2498 = vmatprep.mubr.f32.mxu0 0.0
          %2499 = vmatmul.mubr.f32.gmra.mrb[0].mxu0 %v852
          %v2500 = vpop.f32.mrb[0].mxu0
          %v2501 = vadd.f32 0.0, %v2500
          %v2502 = vpop.f32.mrb[0].mxu0
          %2503 = vmatprep.mubr.f32.mxu0 0.0
          %2504 = vmatmul.mubr.f32.gmra.mrb[0].mxu0 %v854
          %v2505 = vpop.f32.mrb[0].mxu0
          %v2506 = vadd.f32 0.0, %v2505
          %v2507 = vpop.f32.mrb[0].mxu0
          %2508 = vmatprep.mubr.f32.mxu0 0.0
          %2509 = vmatmul.mubr.f32.gmra.mrb[0].mxu0 %v856
          %v2510 = vpop.f32.mrb[0].mxu0
          %v2511 = vadd.f32 0.0, %v2510
          %v2512 = vpop.f32.mrb[0].mxu0
          %2513 = vmatprep.mubr.f32.mxu0 0.0
          %2514 = vmatmul.mubr.f32.gmra.mrb[0].mxu0 %v858
          %v2515 = vpop.f32.mrb[0].mxu0
          %v2516 = vadd.f32 0.0, %v2515
          %v2517 = vpop.f32.mrb[0].mxu0
          %2518 = vmatprep.mubr.f32.mxu0 0.0
          %2519 = vmatmul.mubr.f32.gmra.mrb[0].mxu0 %v860
          %v2520 = vpop.f32.mrb[0].mxu0
          %v2521 = vadd.f32 0.0, %v2520
          %v2522 = vpop.f32.mrb[0].mxu0
          %2523 = vmatprep.mubr.f32.mxu0 0.0
          %2524 = vmatmul.mubr.f32.gmra.mrb[0].mxu0 %v1500
          %v2525 = vpop.f32.mrb[0].mxu0
          %v2526 = vadd.f32 0.0, %v2525
          %v2527 = vpop.f32.mrb[0].mxu0
          %2528 = vmatprep.mubr.f32.mxu0 0.0
          %2529 = vmatmul.mubr.f32.gmra.mrb[0].mxu0 %v1503
          %v2530 = vpop.f32.mrb[0].mxu0
          %v2531 = vadd.f32 0.0, %v2530
          %v2532 = vpop.f32.mrb[0].mxu0
          %2533 = vmatprep.mubr.f32.mxu0 0.0
          %2534 = vmatmul.mubr.f32.gmra.mrb[0].mxu0 %v2311
          %v2535 = vpop.f32.mrb[0].mxu0
          %v2536 = vadd.f32 0.0, %v2535
          %v2537 = vpop.f32.mrb[0].mxu0
          %2538 = vmatprep.mubr.f32.mxu0 0.0
          %2539 = vmatmul.mubr.f32.gmra.mrb[0].mxu0 %v2314
          %v2540 = vpop.f32.mrb[0].mxu0
          %v2541 = vadd.f32 0.0, %v2540
          %v2542 = vpop.f32.mrb[0].mxu0
          %2543 = vdwg.mxu0
          %v2544 = vadd.f32 %v2276, %v2386
          %v2545 = vadd.f32 %v2277, %v2391
          %v2546 = vadd.f32 %v2278, %v2396
          %v2547 = vadd.f32 %v2279, %v2401
          %v2548 = vadd.f32 %v2280, %v2406
          %v2549 = vadd.f32 %v2281, %v2411
          %v2550 = vadd.f32 %v2282, %v2416
          %v2551 = vadd.f32 %v2283, %v2421
          %v2552 = vadd.f32 %v2284, %v2426
          %v2553 = vadd.f32 %v2285, %v2431
          %v2554 = vadd.f32 %v2286, %v2436
          %v2555 = vadd.f32 %v2287, %v2441
          %v2556 = vadd.f32 %v2288, %v2446
          %v2557 = vadd.f32 %v2289, %v2451
          %v2558 = vadd.f32 %v2290, %v2456
          %v2559 = vadd.f32 %v2291, %v2461
          %v2560 = vadd.f32 %v2292, %v2466
          %v2561 = vadd.f32 %v2293, %v2471
          %v2562 = vadd.f32 %v2294, %v2476
          %v2563 = vadd.f32 %v2295, %v2481
          %v2564 = vadd.f32 %v2296, %v2486
          %v2565 = vadd.f32 %v2297, %v2491
          %v2566 = vadd.f32 %v2298, %v2496
          %v2567 = vadd.f32 %v2299, %v2501
          %v2568 = vadd.f32 %v2300, %v2506
          %v2569 = vadd.f32 %v2301, %v2511
          %v2570 = vadd.f32 %v2302, %v2516
          %v2571 = vadd.f32 %v2303, %v2521
          %v2572 = vadd.f32 %v2304, %v2526
          %v2573 = vadd.f32 %v2305, %v2531
          %v2574 = vadd.f32 %v2306, %v2536
          %v2575 = vadd.f32 %v2307, %v2541
          %v2577 = vrot.slane %v369, 1
          %v2578 = vrot.slane %v370, 1
          %v2579 = vsel %vm421, %v2577, %v2578
          %v2580 = vrot.slane %v371, 1
          %v2581 = vsel %vm421, %v2578, %v2580
          %s2582 = scalar_lea.vmem %s1, 28
          %v2583 = vld [vmem:[%s2582] sm:$0xf]
          %v2584 = vsel %vm504, %v2579, 0
          %v2586 = vsel %vm504, %v2581, 0
          %v2589 = vsel %vm569, %v2583, 0
          %2591 = vmatprep.subr.mxu0 0.0
          %2592 = vmatpush1.msra.mxu0 %v2589
          %2593 = vmatprep.subr.mxu0 0.0
          %2594 = vmatpush1.msra.mxu0 0.0
          %2595 = vmatprep.subr.mxu0 0.0
          %2596 = vmatpush1.msra.mxu0 0.0
          %2597 = vmatprep.subr.mxu0 0.0
          %2598 = vmatpush1.msra.mxu0 0.0
          %2599 = vmatprep.subr.mxu0 0.0
          %2600 = vmatpush1.msra.mxu0 0.0
          %2601 = vmatprep.subr.mxu0 0.0
          %2602 = vmatpush1.msra.mxu0 0.0
          %2603 = vmatprep.subr.mxu0 0.0
          %2604 = vmatpush1.msra.mxu0 0.0
          %2605 = vmatprep.subr.mxu0 0.0
          %2606 = vmatpush1.msra.mxu0 0.0
          %2607 = vmatprep.subr.mxu0 0.0
          %2608 = vmatpush1.msra.mxu0 0.0
          %2609 = vmatprep.subr.mxu0 0.0
          %2610 = vmatpush1.msra.mxu0 0.0
          %2611 = vmatprep.subr.mxu0 0.0
          %2612 = vmatpush1.msra.mxu0 0.0
          %2613 = vmatprep.subr.mxu0 0.0
          %2614 = vmatpush1.msra.mxu0 0.0
          %2615 = vmatprep.subr.mxu0 0.0
          %2616 = vmatpush1.msra.mxu0 0.0
          %2617 = vmatprep.subr.mxu0 0.0
          %2618 = vmatpush1.msra.mxu0 0.0
          %2619 = vmatprep.subr.mxu0 0.0
          %2620 = vmatpush1.msra.mxu0 0.0
          %2621 = vmatprep.subr.mxu0 0.0
          %2622 = vmatpush1.msra.mxu0 0.0
          %2623 = vmatprep.subr.mxu0 0.0
          %2624 = vmatpush1.msra.mxu0 0.0
          %2625 = vmatprep.subr.mxu0 0.0
          %2626 = vmatpush1.msra.mxu0 0.0
          %2627 = vmatprep.subr.mxu0 0.0
          %2628 = vmatpush1.msra.mxu0 0.0
          %2629 = vmatprep.subr.mxu0 0.0
          %2630 = vmatpush1.msra.mxu0 0.0
          %2631 = vmatprep.subr.mxu0 0.0
          %2632 = vmatpush1.msra.mxu0 0.0
          %2633 = vmatprep.subr.mxu0 0.0
          %2634 = vmatpush1.msra.mxu0 0.0
          %2635 = vmatprep.subr.mxu0 0.0
          %2636 = vmatpush1.msra.mxu0 0.0
          %2637 = vmatprep.subr.mxu0 0.0
          %2638 = vmatpush1.msra.mxu0 0.0
          %2639 = vmatprep.subr.mxu0 0.0
          %2640 = vmatpush1.msra.mxu0 0.0
          %2641 = vmatprep.subr.mxu0 0.0
          %2642 = vmatpush1.msra.mxu0 0.0
          %2643 = vmatprep.subr.mxu0 0.0
          %2644 = vmatpush1.msra.mxu0 0.0
          %2645 = vmatprep.subr.mxu0 0.0
          %2646 = vmatpush1.msra.mxu0 0.0
          %2647 = vmatprep.subr.mxu0 0.0
          %2648 = vmatpush1.msra.mxu0 0.0
          %2649 = vmatprep.subr.mxu0 0.0
          %2650 = vmatpush1.msra.mxu0 0.0
          %2651 = vmatprep.subr.mxu0 0.0
          %2652 = vmatpush1.msra.mxu0 0.0
          %2653 = vmatprep.subr.mxu0 0.0
          %2654 = vmatpush1.msra.mxu0 0.0
          %2655 = vmatprep.mubr.f32.mxu0 0.0
          %2656 = vmatmul.mubr.f32.gmra.mrb[0].mxu0 %v513
          %v2657 = vpop.f32.mrb[0].mxu0
          %v2658 = vadd.f32 0.0, %v2657
          %v2659 = vpop.f32.mrb[0].mxu0
          %2660 = vmatprep.mubr.f32.mxu0 0.0
          %2661 = vmatmul.mubr.f32.gmra.mrb[0].mxu0 %v515
          %v2662 = vpop.f32.mrb[0].mxu0
          %v2663 = vadd.f32 0.0, %v2662
          %v2664 = vpop.f32.mrb[0].mxu0
          %2665 = vmatprep.mubr.f32.mxu0 0.0
          %2666 = vmatmul.mubr.f32.gmra.mrb[0].mxu0 %v517
          %v2667 = vpop.f32.mrb[0].mxu0
          %v2668 = vadd.f32 0.0, %v2667
          %v2669 = vpop.f32.mrb[0].mxu0
          %2670 = vmatprep.mubr.f32.mxu0 0.0
          %2671 = vmatmul.mubr.f32.gmra.mrb[0].mxu0 %v519
          %v2672 = vpop.f32.mrb[0].mxu0
          %v2673 = vadd.f32 0.0, %v2672
          %v2674 = vpop.f32.mrb[0].mxu0
          %2675 = vmatprep.mubr.f32.mxu0 0.0
          %2676 = vmatmul.mubr.f32.gmra.mrb[0].mxu0 %v521
          %v2677 = vpop.f32.mrb[0].mxu0
          %v2678 = vadd.f32 0.0, %v2677
          %v2679 = vpop.f32.mrb[0].mxu0
          %2680 = vmatprep.mubr.f32.mxu0 0.0
          %2681 = vmatmul.mubr.f32.gmra.mrb[0].mxu0 %v523
          %v2682 = vpop.f32.mrb[0].mxu0
          %v2683 = vadd.f32 0.0, %v2682
          %v2684 = vpop.f32.mrb[0].mxu0
          %2685 = vmatprep.mubr.f32.mxu0 0.0
          %2686 = vmatmul.mubr.f32.gmra.mrb[0].mxu0 %v525
          %v2687 = vpop.f32.mrb[0].mxu0
          %v2688 = vadd.f32 0.0, %v2687
          %v2689 = vpop.f32.mrb[0].mxu0
          %2690 = vmatprep.mubr.f32.mxu0 0.0
          %2691 = vmatmul.mubr.f32.gmra.mrb[0].mxu0 %v527
          %v2692 = vpop.f32.mrb[0].mxu0
          %v2693 = vadd.f32 0.0, %v2692
          %v2694 = vpop.f32.mrb[0].mxu0
          %2695 = vmatprep.mubr.f32.mxu0 0.0
          %2696 = vmatmul.mubr.f32.gmra.mrb[0].mxu0 %v529
          %v2697 = vpop.f32.mrb[0].mxu0
          %v2698 = vadd.f32 0.0, %v2697
          %v2699 = vpop.f32.mrb[0].mxu0
          %2700 = vmatprep.mubr.f32.mxu0 0.0
          %2701 = vmatmul.mubr.f32.gmra.mrb[0].mxu0 %v531
          %v2702 = vpop.f32.mrb[0].mxu0
          %v2703 = vadd.f32 0.0, %v2702
          %v2704 = vpop.f32.mrb[0].mxu0
          %2705 = vmatprep.mubr.f32.mxu0 0.0
          %2706 = vmatmul.mubr.f32.gmra.mrb[0].mxu0 %v533
          %v2707 = vpop.f32.mrb[0].mxu0
          %v2708 = vadd.f32 0.0, %v2707
          %v2709 = vpop.f32.mrb[0].mxu0
          %2710 = vmatprep.mubr.f32.mxu0 0.0
          %2711 = vmatmul.mubr.f32.gmra.mrb[0].mxu0 %v535
          %v2712 = vpop.f32.mrb[0].mxu0
          %v2713 = vadd.f32 0.0, %v2712
          %v2714 = vpop.f32.mrb[0].mxu0
          %2715 = vmatprep.mubr.f32.mxu0 0.0
          %2716 = vmatmul.mubr.f32.gmra.mrb[0].mxu0 %v537
          %v2717 = vpop.f32.mrb[0].mxu0
          %v2718 = vadd.f32 0.0, %v2717
          %v2719 = vpop.f32.mrb[0].mxu0
          %2720 = vmatprep.mubr.f32.mxu0 0.0
          %2721 = vmatmul.mubr.f32.gmra.mrb[0].mxu0 %v539
          %v2722 = vpop.f32.mrb[0].mxu0
          %v2723 = vadd.f32 0.0, %v2722
          %v2724 = vpop.f32.mrb[0].mxu0
          %2725 = vmatprep.mubr.f32.mxu0 0.0
          %2726 = vmatmul.mubr.f32.gmra.mrb[0].mxu0 %v541
          %v2727 = vpop.f32.mrb[0].mxu0
          %v2728 = vadd.f32 0.0, %v2727
          %v2729 = vpop.f32.mrb[0].mxu0
          %2730 = vmatprep.mubr.f32.mxu0 0.0
          %2731 = vmatmul.mubr.f32.gmra.mrb[0].mxu0 %v543
          %v2732 = vpop.f32.mrb[0].mxu0
          %v2733 = vadd.f32 0.0, %v2732
          %v2734 = vpop.f32.mrb[0].mxu0
          %2735 = vmatprep.mubr.f32.mxu0 0.0
          %2736 = vmatmul.mubr.f32.gmra.mrb[0].mxu0 %v545
          %v2737 = vpop.f32.mrb[0].mxu0
          %v2738 = vadd.f32 0.0, %v2737
          %v2739 = vpop.f32.mrb[0].mxu0
          %2740 = vmatprep.mubr.f32.mxu0 0.0
          %2741 = vmatmul.mubr.f32.gmra.mrb[0].mxu0 %v547
          %v2742 = vpop.f32.mrb[0].mxu0
          %v2743 = vadd.f32 0.0, %v2742
          %v2744 = vpop.f32.mrb[0].mxu0
          %2745 = vmatprep.mubr.f32.mxu0 0.0
          %2746 = vmatmul.mubr.f32.gmra.mrb[0].mxu0 %v549
          %v2747 = vpop.f32.mrb[0].mxu0
          %v2748 = vadd.f32 0.0, %v2747
          %v2749 = vpop.f32.mrb[0].mxu0
          %2750 = vmatprep.mubr.f32.mxu0 0.0
          %2751 = vmatmul.mubr.f32.gmra.mrb[0].mxu0 %v551
          %v2752 = vpop.f32.mrb[0].mxu0
          %v2753 = vadd.f32 0.0, %v2752
          %v2754 = vpop.f32.mrb[0].mxu0
          %2755 = vmatprep.mubr.f32.mxu0 0.0
          %2756 = vmatmul.mubr.f32.gmra.mrb[0].mxu0 %v553
          %v2757 = vpop.f32.mrb[0].mxu0
          %v2758 = vadd.f32 0.0, %v2757
          %v2759 = vpop.f32.mrb[0].mxu0
          %2760 = vmatprep.mubr.f32.mxu0 0.0
          %2761 = vmatmul.mubr.f32.gmra.mrb[0].mxu0 %v555
          %v2762 = vpop.f32.mrb[0].mxu0
          %v2763 = vadd.f32 0.0, %v2762
          %v2764 = vpop.f32.mrb[0].mxu0
          %2765 = vmatprep.mubr.f32.mxu0 0.0
          %2766 = vmatmul.mubr.f32.gmra.mrb[0].mxu0 %v557
          %v2767 = vpop.f32.mrb[0].mxu0
          %v2768 = vadd.f32 0.0, %v2767
          %v2769 = vpop.f32.mrb[0].mxu0
          %2770 = vmatprep.mubr.f32.mxu0 0.0
          %2771 = vmatmul.mubr.f32.gmra.mrb[0].mxu0 %v559
          %v2772 = vpop.f32.mrb[0].mxu0
          %v2773 = vadd.f32 0.0, %v2772
          %v2774 = vpop.f32.mrb[0].mxu0
          %2775 = vmatprep.mubr.f32.mxu0 0.0
          %2776 = vmatmul.mubr.f32.gmra.mrb[0].mxu0 %v561
          %v2777 = vpop.f32.mrb[0].mxu0
          %v2778 = vadd.f32 0.0, %v2777
          %v2779 = vpop.f32.mrb[0].mxu0
          %2780 = vmatprep.mubr.f32.mxu0 0.0
          %2781 = vmatmul.mubr.f32.gmra.mrb[0].mxu0 %v563
          %v2782 = vpop.f32.mrb[0].mxu0
          %v2783 = vadd.f32 0.0, %v2782
          %v2784 = vpop.f32.mrb[0].mxu0
          %2785 = vmatprep.mubr.f32.mxu0 0.0
          %2786 = vmatmul.mubr.f32.gmra.mrb[0].mxu0 %v565
          %v2787 = vpop.f32.mrb[0].mxu0
          %v2788 = vadd.f32 0.0, %v2787
          %v2789 = vpop.f32.mrb[0].mxu0
          %2790 = vmatprep.mubr.f32.mxu0 0.0
          %2791 = vmatmul.mubr.f32.gmra.mrb[0].mxu0 %v567
          %v2792 = vpop.f32.mrb[0].mxu0
          %v2793 = vadd.f32 0.0, %v2792
          %v2794 = vpop.f32.mrb[0].mxu0
          %2795 = vmatprep.mubr.f32.mxu0 0.0
          %2796 = vmatmul.mubr.f32.gmra.mrb[0].mxu0 %v1773
          %v2797 = vpop.f32.mrb[0].mxu0
          %v2798 = vadd.f32 0.0, %v2797
          %v2799 = vpop.f32.mrb[0].mxu0
          %2800 = vmatprep.mubr.f32.mxu0 0.0
          %2801 = vmatmul.mubr.f32.gmra.mrb[0].mxu0 %v1775
          %v2802 = vpop.f32.mrb[0].mxu0
          %v2803 = vadd.f32 0.0, %v2802
          %v2804 = vpop.f32.mrb[0].mxu0
          %2805 = vmatprep.mubr.f32.mxu0 0.0
          %2806 = vmatmul.mubr.f32.gmra.mrb[0].mxu0 %v2584
          %v2807 = vpop.f32.mrb[0].mxu0
          %v2808 = vadd.f32 0.0, %v2807
          %v2809 = vpop.f32.mrb[0].mxu0
          %2810 = vmatprep.mubr.f32.mxu0 0.0
          %2811 = vmatmul.mubr.f32.gmra.mrb[0].mxu0 %v2586
          %v2812 = vpop.f32.mrb[0].mxu0
          %v2813 = vadd.f32 0.0, %v2812
          %v2814 = vpop.f32.mrb[0].mxu0
          %2815 = vdwg.mxu0
          %v2816 = vadd.f32 %v2544, %v2658
          %v2817 = vadd.f32 %v2545, %v2663
          %v2818 = vadd.f32 %v2546, %v2668
          %v2819 = vadd.f32 %v2547, %v2673
          %v2820 = vadd.f32 %v2548, %v2678
          %v2821 = vadd.f32 %v2549, %v2683
          %v2822 = vadd.f32 %v2550, %v2688
          %v2823 = vadd.f32 %v2551, %v2693
          %v2824 = vadd.f32 %v2552, %v2698
          %v2825 = vadd.f32 %v2553, %v2703
          %v2826 = vadd.f32 %v2554, %v2708
          %v2827 = vadd.f32 %v2555, %v2713
          %v2828 = vadd.f32 %v2556, %v2718
          %v2829 = vadd.f32 %v2557, %v2723
          %v2830 = vadd.f32 %v2558, %v2728
          %v2831 = vadd.f32 %v2559, %v2733
          %v2832 = vadd.f32 %v2560, %v2738
          %v2833 = vadd.f32 %v2561, %v2743
          %v2834 = vadd.f32 %v2562, %v2748
          %v2835 = vadd.f32 %v2563, %v2753
          %v2836 = vadd.f32 %v2564, %v2758
          %v2837 = vadd.f32 %v2565, %v2763
          %v2838 = vadd.f32 %v2566, %v2768
          %v2839 = vadd.f32 %v2567, %v2773
          %v2840 = vadd.f32 %v2568, %v2778
          %v2841 = vadd.f32 %v2569, %v2783
          %v2842 = vadd.f32 %v2570, %v2788
          %v2843 = vadd.f32 %v2571, %v2793
          %v2844 = vadd.f32 %v2572, %v2798
          %v2845 = vadd.f32 %v2573, %v2803
          %v2846 = vadd.f32 %v2574, %v2808
          %v2847 = vadd.f32 %v2575, %v2813
          %v2848 = vrot.slane %v369, 2
          %v2849 = vrot.slane %v370, 2
          %v2850 = vsel %vm1090, %v2848, %v2849
          %v2851 = vrot.slane %v371, 2
          %v2852 = vsel %vm1090, %v2849, %v2851
          %s2853 = scalar_lea.vmem %s1, 32
          %v2854 = vld [vmem:[%s2853] sm:$0xf]
          %v2855 = vsel %vm504, %v2850, 0
          %v2857 = vsel %vm504, %v2852, 0
          %v2860 = vsel %vm569, %v2854, 0
          %2862 = vmatprep.subr.mxu0 0.0
          %2863 = vmatpush1.msra.mxu0 %v2860
          %2864 = vmatprep.subr.mxu0 0.0
          %2865 = vmatpush1.msra.mxu0 0.0
          %2866 = vmatprep.subr.mxu0 0.0
          %2867 = vmatpush1.msra.mxu0 0.0
          %2868 = vmatprep.subr.mxu0 0.0
          %2869 = vmatpush1.msra.mxu0 0.0
          %2870 = vmatprep.subr.mxu0 0.0
          %2871 = vmatpush1.msra.mxu0 0.0
          %2872 = vmatprep.subr.mxu0 0.0
          %2873 = vmatpush1.msra.mxu0 0.0
          %2874 = vmatprep.subr.mxu0 0.0
          %2875 = vmatpush1.msra.mxu0 0.0
          %2876 = vmatprep.subr.mxu0 0.0
          %2877 = vmatpush1.msra.mxu0 0.0
          %2878 = vmatprep.subr.mxu0 0.0
          %2879 = vmatpush1.msra.mxu0 0.0
          %2880 = vmatprep.subr.mxu0 0.0
          %2881 = vmatpush1.msra.mxu0 0.0
          %2882 = vmatprep.subr.mxu0 0.0
          %2883 = vmatpush1.msra.mxu0 0.0
          %2884 = vmatprep.subr.mxu0 0.0
          %2885 = vmatpush1.msra.mxu0 0.0
          %2886 = vmatprep.subr.mxu0 0.0
          %2887 = vmatpush1.msra.mxu0 0.0
          %2888 = vmatprep.subr.mxu0 0.0
          %2889 = vmatpush1.msra.mxu0 0.0
          %2890 = vmatprep.subr.mxu0 0.0
          %2891 = vmatpush1.msra.mxu0 0.0
          %2892 = vmatprep.subr.mxu0 0.0
          %2893 = vmatpush1.msra.mxu0 0.0
          %2894 = vmatprep.subr.mxu0 0.0
          %2895 = vmatpush1.msra.mxu0 0.0
          %2896 = vmatprep.subr.mxu0 0.0
          %2897 = vmatpush1.msra.mxu0 0.0
          %2898 = vmatprep.subr.mxu0 0.0
          %2899 = vmatpush1.msra.mxu0 0.0
          %2900 = vmatprep.subr.mxu0 0.0
          %2901 = vmatpush1.msra.mxu0 0.0
          %2902 = vmatprep.subr.mxu0 0.0
          %2903 = vmatpush1.msra.mxu0 0.0
          %2904 = vmatprep.subr.mxu0 0.0
          %2905 = vmatpush1.msra.mxu0 0.0
          %2906 = vmatprep.subr.mxu0 0.0
          %2907 = vmatpush1.msra.mxu0 0.0
          %2908 = vmatprep.subr.mxu0 0.0
          %2909 = vmatpush1.msra.mxu0 0.0
          %2910 = vmatprep.subr.mxu0 0.0
          %2911 = vmatpush1.msra.mxu0 0.0
          %2912 = vmatprep.subr.mxu0 0.0
          %2913 = vmatpush1.msra.mxu0 0.0
          %2914 = vmatprep.subr.mxu0 0.0
          %2915 = vmatpush1.msra.mxu0 0.0
          %2916 = vmatprep.subr.mxu0 0.0
          %2917 = vmatpush1.msra.mxu0 0.0
          %2918 = vmatprep.subr.mxu0 0.0
          %2919 = vmatpush1.msra.mxu0 0.0
          %2920 = vmatprep.subr.mxu0 0.0
          %2921 = vmatpush1.msra.mxu0 0.0
          %2922 = vmatprep.subr.mxu0 0.0
          %2923 = vmatpush1.msra.mxu0 0.0
          %2924 = vmatprep.subr.mxu0 0.0
          %2925 = vmatpush1.msra.mxu0 0.0
          %2926 = vmatprep.mubr.f32.mxu0 0.0
          %2927 = vmatmul.mubr.f32.gmra.mrb[0].mxu0 %v1181
          %v2928 = vpop.f32.mrb[0].mxu0
          %v2929 = vadd.f32 0.0, %v2928
          %v2930 = vpop.f32.mrb[0].mxu0
          %2931 = vmatprep.mubr.f32.mxu0 0.0
          %2932 = vmatmul.mubr.f32.gmra.mrb[0].mxu0 %v1183
          %v2933 = vpop.f32.mrb[0].mxu0
          %v2934 = vadd.f32 0.0, %v2933
          %v2935 = vpop.f32.mrb[0].mxu0
          %2936 = vmatprep.mubr.f32.mxu0 0.0
          %2937 = vmatmul.mubr.f32.gmra.mrb[0].mxu0 %v1185
          %v2938 = vpop.f32.mrb[0].mxu0
          %v2939 = vadd.f32 0.0, %v2938
          %v2940 = vpop.f32.mrb[0].mxu0
          %2941 = vmatprep.mubr.f32.mxu0 0.0
          %2942 = vmatmul.mubr.f32.gmra.mrb[0].mxu0 %v1187
          %v2943 = vpop.f32.mrb[0].mxu0
          %v2944 = vadd.f32 0.0, %v2943
          %v2945 = vpop.f32.mrb[0].mxu0
          %2946 = vmatprep.mubr.f32.mxu0 0.0
          %2947 = vmatmul.mubr.f32.gmra.mrb[0].mxu0 %v1189
          %v2948 = vpop.f32.mrb[0].mxu0
          %v2949 = vadd.f32 0.0, %v2948
          %v2950 = vpop.f32.mrb[0].mxu0
          %2951 = vmatprep.mubr.f32.mxu0 0.0
          %2952 = vmatmul.mubr.f32.gmra.mrb[0].mxu0 %v1191
          %v2953 = vpop.f32.mrb[0].mxu0
          %v2954 = vadd.f32 0.0, %v2953
          %v2955 = vpop.f32.mrb[0].mxu0
          %2956 = vmatprep.mubr.f32.mxu0 0.0
          %2957 = vmatmul.mubr.f32.gmra.mrb[0].mxu0 %v1193
          %v2958 = vpop.f32.mrb[0].mxu0
          %v2959 = vadd.f32 0.0, %v2958
          %v2960 = vpop.f32.mrb[0].mxu0
          %2961 = vmatprep.mubr.f32.mxu0 0.0
          %2962 = vmatmul.mubr.f32.gmra.mrb[0].mxu0 %v1195
          %v2963 = vpop.f32.mrb[0].mxu0
          %v2964 = vadd.f32 0.0, %v2963
          %v2965 = vpop.f32.mrb[0].mxu0
          %2966 = vmatprep.mubr.f32.mxu0 0.0
          %2967 = vmatmul.mubr.f32.gmra.mrb[0].mxu0 %v1197
          %v2968 = vpop.f32.mrb[0].mxu0
          %v2969 = vadd.f32 0.0, %v2968
          %v2970 = vpop.f32.mrb[0].mxu0
          %2971 = vmatprep.mubr.f32.mxu0 0.0
          %2972 = vmatmul.mubr.f32.gmra.mrb[0].mxu0 %v1199
          %v2973 = vpop.f32.mrb[0].mxu0
          %v2974 = vadd.f32 0.0, %v2973
          %v2975 = vpop.f32.mrb[0].mxu0
          %2976 = vmatprep.mubr.f32.mxu0 0.0
          %2977 = vmatmul.mubr.f32.gmra.mrb[0].mxu0 %v1201
          %v2978 = vpop.f32.mrb[0].mxu0
          %v2979 = vadd.f32 0.0, %v2978
          %v2980 = vpop.f32.mrb[0].mxu0
          %2981 = vmatprep.mubr.f32.mxu0 0.0
          %2982 = vmatmul.mubr.f32.gmra.mrb[0].mxu0 %v1203
          %v2983 = vpop.f32.mrb[0].mxu0
          %v2984 = vadd.f32 0.0, %v2983
          %v2985 = vpop.f32.mrb[0].mxu0
          %2986 = vmatprep.mubr.f32.mxu0 0.0
          %2987 = vmatmul.mubr.f32.gmra.mrb[0].mxu0 %v1205
          %v2988 = vpop.f32.mrb[0].mxu0
          %v2989 = vadd.f32 0.0, %v2988
          %v2990 = vpop.f32.mrb[0].mxu0
          %2991 = vmatprep.mubr.f32.mxu0 0.0
          %2992 = vmatmul.mubr.f32.gmra.mrb[0].mxu0 %v1207
          %v2993 = vpop.f32.mrb[0].mxu0
          %v2994 = vadd.f32 0.0, %v2993
          %v2995 = vpop.f32.mrb[0].mxu0
          %2996 = vmatprep.mubr.f32.mxu0 0.0
          %2997 = vmatmul.mubr.f32.gmra.mrb[0].mxu0 %v1209
          %v2998 = vpop.f32.mrb[0].mxu0
          %v2999 = vadd.f32 0.0, %v2998
          %v3000 = vpop.f32.mrb[0].mxu0
          %3001 = vmatprep.mubr.f32.mxu0 0.0
          %3002 = vmatmul.mubr.f32.gmra.mrb[0].mxu0 %v1211
          %v3003 = vpop.f32.mrb[0].mxu0
          %v3004 = vadd.f32 0.0, %v3003
          %v3005 = vpop.f32.mrb[0].mxu0
          %3006 = vmatprep.mubr.f32.mxu0 0.0
          %3007 = vmatmul.mubr.f32.gmra.mrb[0].mxu0 %v1213
          %v3008 = vpop.f32.mrb[0].mxu0
          %v3009 = vadd.f32 0.0, %v3008
          %v3010 = vpop.f32.mrb[0].mxu0
          %3011 = vmatprep.mubr.f32.mxu0 0.0
          %3012 = vmatmul.mubr.f32.gmra.mrb[0].mxu0 %v1215
          %v3013 = vpop.f32.mrb[0].mxu0
          %v3014 = vadd.f32 0.0, %v3013
          %v3015 = vpop.f32.mrb[0].mxu0
          %3016 = vmatprep.mubr.f32.mxu0 0.0
          %3017 = vmatmul.mubr.f32.gmra.mrb[0].mxu0 %v1217
          %v3018 = vpop.f32.mrb[0].mxu0
          %v3019 = vadd.f32 0.0, %v3018
          %v3020 = vpop.f32.mrb[0].mxu0
          %3021 = vmatprep.mubr.f32.mxu0 0.0
          %3022 = vmatmul.mubr.f32.gmra.mrb[0].mxu0 %v1219
          %v3023 = vpop.f32.mrb[0].mxu0
          %v3024 = vadd.f32 0.0, %v3023
          %v3025 = vpop.f32.mrb[0].mxu0
          %3026 = vmatprep.mubr.f32.mxu0 0.0
          %3027 = vmatmul.mubr.f32.gmra.mrb[0].mxu0 %v1221
          %v3028 = vpop.f32.mrb[0].mxu0
          %v3029 = vadd.f32 0.0, %v3028
          %v3030 = vpop.f32.mrb[0].mxu0
          %3031 = vmatprep.mubr.f32.mxu0 0.0
          %3032 = vmatmul.mubr.f32.gmra.mrb[0].mxu0 %v1223
          %v3033 = vpop.f32.mrb[0].mxu0
          %v3034 = vadd.f32 0.0, %v3033
          %v3035 = vpop.f32.mrb[0].mxu0
          %3036 = vmatprep.mubr.f32.mxu0 0.0
          %3037 = vmatmul.mubr.f32.gmra.mrb[0].mxu0 %v1225
          %v3038 = vpop.f32.mrb[0].mxu0
          %v3039 = vadd.f32 0.0, %v3038
          %v3040 = vpop.f32.mrb[0].mxu0
          %3041 = vmatprep.mubr.f32.mxu0 0.0
          %3042 = vmatmul.mubr.f32.gmra.mrb[0].mxu0 %v1227
          %v3043 = vpop.f32.mrb[0].mxu0
          %v3044 = vadd.f32 0.0, %v3043
          %v3045 = vpop.f32.mrb[0].mxu0
          %3046 = vmatprep.mubr.f32.mxu0 0.0
          %3047 = vmatmul.mubr.f32.gmra.mrb[0].mxu0 %v1229
          %v3048 = vpop.f32.mrb[0].mxu0
          %v3049 = vadd.f32 0.0, %v3048
          %v3050 = vpop.f32.mrb[0].mxu0
          %3051 = vmatprep.mubr.f32.mxu0 0.0
          %3052 = vmatmul.mubr.f32.gmra.mrb[0].mxu0 %v1231
          %v3053 = vpop.f32.mrb[0].mxu0
          %v3054 = vadd.f32 0.0, %v3053
          %v3055 = vpop.f32.mrb[0].mxu0
          %3056 = vmatprep.mubr.f32.mxu0 0.0
          %3057 = vmatmul.mubr.f32.gmra.mrb[0].mxu0 %v1233
          %v3058 = vpop.f32.mrb[0].mxu0
          %v3059 = vadd.f32 0.0, %v3058
          %v3060 = vpop.f32.mrb[0].mxu0
          %3061 = vmatprep.mubr.f32.mxu0 0.0
          %3062 = vmatmul.mubr.f32.gmra.mrb[0].mxu0 %v1235
          %v3063 = vpop.f32.mrb[0].mxu0
          %v3064 = vadd.f32 0.0, %v3063
          %v3065 = vpop.f32.mrb[0].mxu0
          %3066 = vmatprep.mubr.f32.mxu0 0.0
          %3067 = vmatmul.mubr.f32.gmra.mrb[0].mxu0 %v2044
          %v3068 = vpop.f32.mrb[0].mxu0
          %v3069 = vadd.f32 0.0, %v3068
          %v3070 = vpop.f32.mrb[0].mxu0
          %3071 = vmatprep.mubr.f32.mxu0 0.0
          %3072 = vmatmul.mubr.f32.gmra.mrb[0].mxu0 %v2046
          %v3073 = vpop.f32.mrb[0].mxu0
          %v3074 = vadd.f32 0.0, %v3073
          %v3075 = vpop.f32.mrb[0].mxu0
          %3076 = vmatprep.mubr.f32.mxu0 0.0
          %3077 = vmatmul.mubr.f32.gmra.mrb[0].mxu0 %v2855
          %v3078 = vpop.f32.mrb[0].mxu0
          %v3079 = vadd.f32 0.0, %v3078
          %v3080 = vpop.f32.mrb[0].mxu0
          %3081 = vmatprep.mubr.f32.mxu0 0.0
          %3082 = vmatmul.mubr.f32.gmra.mrb[0].mxu0 %v2857
          %v3083 = vpop.f32.mrb[0].mxu0
          %v3084 = vadd.f32 0.0, %v3083
          %v3085 = vpop.f32.mrb[0].mxu0
          %3086 = vdwg.mxu0
          %v3087 = vadd.f32 %v2816, %v2929
          %v3088 = vadd.f32 %v2817, %v2934
          %v3089 = vadd.f32 %v2818, %v2939
          %v3090 = vadd.f32 %v2819, %v2944
          %v3091 = vadd.f32 %v2820, %v2949
          %v3092 = vadd.f32 %v2821, %v2954
          %v3093 = vadd.f32 %v2822, %v2959
          %v3094 = vadd.f32 %v2823, %v2964
          %v3095 = vadd.f32 %v2824, %v2969
          %v3096 = vadd.f32 %v2825, %v2974
          %v3097 = vadd.f32 %v2826, %v2979
          %v3098 = vadd.f32 %v2827, %v2984
          %v3099 = vadd.f32 %v2828, %v2989
          %v3100 = vadd.f32 %v2829, %v2994
          %v3101 = vadd.f32 %v2830, %v2999
          %v3102 = vadd.f32 %v2831, %v3004
          %v3103 = vadd.f32 %v2832, %v3009
          %v3104 = vadd.f32 %v2833, %v3014
          %v3105 = vadd.f32 %v2834, %v3019
          %v3106 = vadd.f32 %v2835, %v3024
          %v3107 = vadd.f32 %v2836, %v3029
          %v3108 = vadd.f32 %v2837, %v3034
          %v3109 = vadd.f32 %v2838, %v3039
          %v3110 = vadd.f32 %v2839, %v3044
          %v3111 = vadd.f32 %v2840, %v3049
          %v3112 = vadd.f32 %v2841, %v3054
          %v3113 = vadd.f32 %v2842, %v3059
          %v3114 = vadd.f32 %v2843, %v3064
          %v3115 = vadd.f32 %v2844, %v3069
          %v3116 = vadd.f32 %v2845, %v3074
          %v3117 = vadd.f32 %v2846, %v3079
          %v3118 = vadd.f32 %v2847, %v3084
          %v3119 = vld [vmem:[%s2] sm:$0x1]
          %v3121 = vlaneseq
          %v3122 = vshrl.u32 %v3121, 7
          %v3123 = vsub.s32 0, %v3122
          %v3124 = vrot.slane %v3119, %v3123
          %v3126 = vadd.f32 %v3087, %v3124
          %v3127 = vadd.f32 %v3088, %v3124
          %v3128 = vadd.f32 %v3089, %v3124
          %v3129 = vadd.f32 %v3090, %v3124
          %v3130 = vadd.f32 %v3091, %v3124
          %v3131 = vadd.f32 %v3092, %v3124
          %v3132 = vadd.f32 %v3093, %v3124
          %v3133 = vadd.f32 %v3094, %v3124
          %v3134 = vadd.f32 %v3095, %v3124
          %v3135 = vadd.f32 %v3096, %v3124
          %v3136 = vadd.f32 %v3097, %v3124
          %v3137 = vadd.f32 %v3098, %v3124
          %v3138 = vadd.f32 %v3099, %v3124
          %v3139 = vadd.f32 %v3100, %v3124
          %v3140 = vadd.f32 %v3101, %v3124
          %v3141 = vadd.f32 %v3102, %v3124
          %v3142 = vadd.f32 %v3103, %v3124
          %v3143 = vadd.f32 %v3104, %v3124
          %v3144 = vadd.f32 %v3105, %v3124
          %v3145 = vadd.f32 %v3106, %v3124
          %v3146 = vadd.f32 %v3107, %v3124
          %v3147 = vadd.f32 %v3108, %v3124
          %v3148 = vadd.f32 %v3109, %v3124
          %v3149 = vadd.f32 %v3110, %v3124
          %v3150 = vadd.f32 %v3111, %v3124
          %v3151 = vadd.f32 %v3112, %v3124
          %v3152 = vadd.f32 %v3113, %v3124
          %v3153 = vadd.f32 %v3114, %v3124
          %v3154 = vadd.f32 %v3115, %v3124
          %v3155 = vadd.f32 %v3116, %v3124
          %v3156 = vadd.f32 %v3117, %v3124
          %v3157 = vadd.f32 %v3118, %v3124
          %v3158 = vmax.f32 %v3126, 0.0
          %v3159 = vmax.f32 %v3127, 0.0
          %v3160 = vmax.f32 %v3128, 0.0
          %v3161 = vmax.f32 %v3129, 0.0
          %v3162 = vmax.f32 %v3130, 0.0
          %v3163 = vmax.f32 %v3131, 0.0
          %v3164 = vmax.f32 %v3132, 0.0
          %v3165 = vmax.f32 %v3133, 0.0
          %v3166 = vmax.f32 %v3134, 0.0
          %v3167 = vmax.f32 %v3135, 0.0
          %v3168 = vmax.f32 %v3136, 0.0
          %v3169 = vmax.f32 %v3137, 0.0
          %v3170 = vmax.f32 %v3138, 0.0
          %v3171 = vmax.f32 %v3139, 0.0
          %v3172 = vmax.f32 %v3140, 0.0
          %v3173 = vmax.f32 %v3141, 0.0
          %v3174 = vmax.f32 %v3142, 0.0
          %v3175 = vmax.f32 %v3143, 0.0
          %v3176 = vmax.f32 %v3144, 0.0
          %v3177 = vmax.f32 %v3145, 0.0
          %v3178 = vmax.f32 %v3146, 0.0
          %v3179 = vmax.f32 %v3147, 0.0
          %v3180 = vmax.f32 %v3148, 0.0
          %v3181 = vmax.f32 %v3149, 0.0
          %v3182 = vmax.f32 %v3150, 0.0
          %v3183 = vmax.f32 %v3151, 0.0
          %v3184 = vmax.f32 %v3152, 0.0
          %v3185 = vmax.f32 %v3153, 0.0
          %v3186 = vmax.f32 %v3154, 0.0
          %v3187 = vmax.f32 %v3155, 0.0
          %v3188 = vmax.f32 %v3156, 0.0
          %v3189 = vmax.f32 %v3157, 0.0
          %v3190 = vld [vmem:[%s3] sm:$0xff]
          %v3191 = vld [vmem:[%s4] sm:$0x1]
          %v3193 = vlaneseq
          %v3194 = vshrl.u32 %v3193, 7
          %v3195 = vsub.s32 0, %v3194
          %v3196 = vrot.slane %v3191, %v3195
          %vm3198 = vcmask 64512
          %v3200 = vsel %vm3198, %v3158, 0
          %v3203 = vsel %vm3198, %v3159, 0
          %v3206 = vsel %vm3198, %v3160, 0
          %v3209 = vsel %vm3198, %v3161, 0
          %v3212 = vsel %vm3198, %v3162, 0
          %v3215 = vsel %vm3198, %v3163, 0
          %v3218 = vsel %vm3198, %v3164, 0
          %v3221 = vsel %vm3198, %v3165, 0
          %v3224 = vsel %vm3198, %v3166, 0
          %v3227 = vsel %vm3198, %v3167, 0
          %v3230 = vsel %vm3198, %v3168, 0
          %v3233 = vsel %vm3198, %v3169, 0
          %v3236 = vsel %vm3198, %v3170, 0
          %v3239 = vsel %vm3198, %v3171, 0
          %v3242 = vsel %vm3198, %v3172, 0
          %v3245 = vsel %vm3198, %v3173, 0
          %v3248 = vsel %vm3198, %v3174, 0
          %v3251 = vsel %vm3198, %v3175, 0
          %v3254 = vsel %vm3198, %v3176, 0
          %v3257 = vsel %vm3198, %v3177, 0
          %v3260 = vsel %vm3198, %v3178, 0
          %v3263 = vsel %vm3198, %v3179, 0
          %v3266 = vsel %vm3198, %v3180, 0
          %v3269 = vsel %vm3198, %v3181, 0
          %v3272 = vsel %vm3198, %v3182, 0
          %v3275 = vsel %vm3198, %v3183, 0
          %v3278 = vsel %vm3198, %v3184, 0
          %v3281 = vsel %vm3198, %v3185, 0
          %v3284 = vsel %vm3198, %v3186, 0
          %v3287 = vsel %vm3198, %v3187, 0
          %v3290 = vsel %vm3198, %v3188, 0
          %v3293 = vsel %vm3198, %v3189, 0
          %3295 = vmatprep.subr.mxu0 0.0
          %3296 = vmatpush1.msra.mxu0 %v3190
          %3297 = vmatprep.subr.mxu0 0.0
          %3298 = vmatpush1.msra.mxu0 0.0
          %3299 = vmatprep.subr.mxu0 0.0
          %3300 = vmatpush1.msra.mxu0 0.0
          %3301 = vmatprep.subr.mxu0 0.0
          %3302 = vmatpush1.msra.mxu0 0.0
          %3303 = vmatprep.subr.mxu0 0.0
          %3304 = vmatpush1.msra.mxu0 0.0
          %3305 = vmatprep.subr.mxu0 0.0
          %3306 = vmatpush1.msra.mxu0 0.0
          %3307 = vmatprep.subr.mxu0 0.0
          %3308 = vmatpush1.msra.mxu0 0.0
          %3309 = vmatprep.subr.mxu0 0.0
          %3310 = vmatpush1.msra.mxu0 0.0
          %3311 = vmatprep.subr.mxu0 0.0
          %3312 = vmatpush1.msra.mxu0 0.0
          %3313 = vmatprep.subr.mxu0 0.0
          %3314 = vmatpush1.msra.mxu0 0.0
          %3315 = vmatprep.subr.mxu0 0.0
          %3316 = vmatpush1.msra.mxu0 0.0
          %3317 = vmatprep.subr.mxu0 0.0
          %3318 = vmatpush1.msra.mxu0 0.0
          %3319 = vmatprep.subr.mxu0 0.0
          %3320 = vmatpush1.msra.mxu0 0.0
          %3321 = vmatprep.subr.mxu0 0.0
          %3322 = vmatpush1.msra.mxu0 0.0
          %3323 = vmatprep.subr.mxu0 0.0
          %3324 = vmatpush1.msra.mxu0 0.0
          %3325 = vmatprep.subr.mxu0 0.0
          %3326 = vmatpush1.msra.mxu0 0.0
          %3327 = vmatprep.subr.mxu0 0.0
          %3328 = vmatpush1.msra.mxu0 0.0
          %3329 = vmatprep.subr.mxu0 0.0
          %3330 = vmatpush1.msra.mxu0 0.0
          %3331 = vmatprep.subr.mxu0 0.0
          %3332 = vmatpush1.msra.mxu0 0.0
          %3333 = vmatprep.subr.mxu0 0.0
          %3334 = vmatpush1.msra.mxu0 0.0
          %3335 = vmatprep.subr.mxu0 0.0
          %3336 = vmatpush1.msra.mxu0 0.0
          %3337 = vmatprep.subr.mxu0 0.0
          %3338 = vmatpush1.msra.mxu0 0.0
          %3339 = vmatprep.subr.mxu0 0.0
          %3340 = vmatpush1.msra.mxu0 0.0
          %3341 = vmatprep.subr.mxu0 0.0
          %3342 = vmatpush1.msra.mxu0 0.0
          %3343 = vmatprep.subr.mxu0 0.0
          %3344 = vmatpush1.msra.mxu0 0.0
          %3345 = vmatprep.subr.mxu0 0.0
          %3346 = vmatpush1.msra.mxu0 0.0
          %3347 = vmatprep.subr.mxu0 0.0
          %3348 = vmatpush1.msra.mxu0 0.0
          %3349 = vmatprep.subr.mxu0 0.0
          %3350 = vmatpush1.msra.mxu0 0.0
          %3351 = vmatprep.subr.mxu0 0.0
          %3352 = vmatpush1.msra.mxu0 0.0
          %3353 = vmatprep.subr.mxu0 0.0
          %3354 = vmatpush1.msra.mxu0 0.0
          %3355 = vmatprep.subr.mxu0 0.0
          %3356 = vmatpush1.msra.mxu0 0.0
          %3357 = vmatprep.subr.mxu0 0.0
          %3358 = vmatpush1.msra.mxu0 0.0
          %3359 = vmatprep.mubr.f32.mxu0 0.0
          %3360 = vmatmul.mubr.f32.gmra.mrb[0].mxu0 %v3200
          %v3361 = vpop.f32.mrb[0].mxu0
          %v3362 = vadd.f32 %v3196, %v3361
          %v3363 = vpop.f32.mrb[0].mxu0
          %3364 = vmatprep.mubr.f32.mxu0 0.0
          %3365 = vmatmul.mubr.f32.gmra.mrb[0].mxu0 %v3203
          %v3366 = vpop.f32.mrb[0].mxu0
          %v3367 = vadd.f32 %v3196, %v3366
          %v3368 = vpop.f32.mrb[0].mxu0
          %3369 = vmatprep.mubr.f32.mxu0 0.0
          %3370 = vmatmul.mubr.f32.gmra.mrb[0].mxu0 %v3206
          %v3371 = vpop.f32.mrb[0].mxu0
          %v3372 = vadd.f32 %v3196, %v3371
          %v3373 = vpop.f32.mrb[0].mxu0
          %3374 = vmatprep.mubr.f32.mxu0 0.0
          %3375 = vmatmul.mubr.f32.gmra.mrb[0].mxu0 %v3209
          %v3376 = vpop.f32.mrb[0].mxu0
          %v3377 = vadd.f32 %v3196, %v3376
          %v3378 = vpop.f32.mrb[0].mxu0
          %3379 = vmatprep.mubr.f32.mxu0 0.0
          %3380 = vmatmul.mubr.f32.gmra.mrb[0].mxu0 %v3212
          %v3381 = vpop.f32.mrb[0].mxu0
          %v3382 = vadd.f32 %v3196, %v3381
          %v3383 = vpop.f32.mrb[0].mxu0
          %3384 = vmatprep.mubr.f32.mxu0 0.0
          %3385 = vmatmul.mubr.f32.gmra.mrb[0].mxu0 %v3215
          %v3386 = vpop.f32.mrb[0].mxu0
          %v3387 = vadd.f32 %v3196, %v3386
          %v3388 = vpop.f32.mrb[0].mxu0
          %3389 = vmatprep.mubr.f32.mxu0 0.0
          %3390 = vmatmul.mubr.f32.gmra.mrb[0].mxu0 %v3218
          %v3391 = vpop.f32.mrb[0].mxu0
          %v3392 = vadd.f32 %v3196, %v3391
          %v3393 = vpop.f32.mrb[0].mxu0
          %3394 = vmatprep.mubr.f32.mxu0 0.0
          %3395 = vmatmul.mubr.f32.gmra.mrb[0].mxu0 %v3221
          %v3396 = vpop.f32.mrb[0].mxu0
          %v3397 = vadd.f32 %v3196, %v3396
          %v3398 = vpop.f32.mrb[0].mxu0
          %3399 = vmatprep.mubr.f32.mxu0 0.0
          %3400 = vmatmul.mubr.f32.gmra.mrb[0].mxu0 %v3224
          %v3401 = vpop.f32.mrb[0].mxu0
          %v3402 = vadd.f32 %v3196, %v3401
          %v3403 = vpop.f32.mrb[0].mxu0
          %3404 = vmatprep.mubr.f32.mxu0 0.0
          %3405 = vmatmul.mubr.f32.gmra.mrb[0].mxu0 %v3227
          %v3406 = vpop.f32.mrb[0].mxu0
          %v3407 = vadd.f32 %v3196, %v3406
          %v3408 = vpop.f32.mrb[0].mxu0
          %3409 = vmatprep.mubr.f32.mxu0 0.0
          %3410 = vmatmul.mubr.f32.gmra.mrb[0].mxu0 %v3230
          %v3411 = vpop.f32.mrb[0].mxu0
          %v3412 = vadd.f32 %v3196, %v3411
          %v3413 = vpop.f32.mrb[0].mxu0
          %3414 = vmatprep.mubr.f32.mxu0 0.0
          %3415 = vmatmul.mubr.f32.gmra.mrb[0].mxu0 %v3233
          %v3416 = vpop.f32.mrb[0].mxu0
          %v3417 = vadd.f32 %v3196, %v3416
          %v3418 = vpop.f32.mrb[0].mxu0
          %3419 = vmatprep.mubr.f32.mxu0 0.0
          %3420 = vmatmul.mubr.f32.gmra.mrb[0].mxu0 %v3236
          %v3421 = vpop.f32.mrb[0].mxu0
          %v3422 = vadd.f32 %v3196, %v3421
          %v3423 = vpop.f32.mrb[0].mxu0
          %3424 = vmatprep.mubr.f32.mxu0 0.0
          %3425 = vmatmul.mubr.f32.gmra.mrb[0].mxu0 %v3239
          %v3426 = vpop.f32.mrb[0].mxu0
          %v3427 = vadd.f32 %v3196, %v3426
          %v3428 = vpop.f32.mrb[0].mxu0
          %3429 = vmatprep.mubr.f32.mxu0 0.0
          %3430 = vmatmul.mubr.f32.gmra.mrb[0].mxu0 %v3242
          %v3431 = vpop.f32.mrb[0].mxu0
          %v3432 = vadd.f32 %v3196, %v3431
          %v3433 = vpop.f32.mrb[0].mxu0
          %3434 = vmatprep.mubr.f32.mxu0 0.0
          %3435 = vmatmul.mubr.f32.gmra.mrb[0].mxu0 %v3245
          %v3436 = vpop.f32.mrb[0].mxu0
          %v3437 = vadd.f32 %v3196, %v3436
          %v3438 = vpop.f32.mrb[0].mxu0
          %3439 = vmatprep.mubr.f32.mxu0 0.0
          %3440 = vmatmul.mubr.f32.gmra.mrb[0].mxu0 %v3248
          %v3441 = vpop.f32.mrb[0].mxu0
          %v3442 = vadd.f32 %v3196, %v3441
          %v3443 = vpop.f32.mrb[0].mxu0
          %3444 = vmatprep.mubr.f32.mxu0 0.0
          %3445 = vmatmul.mubr.f32.gmra.mrb[0].mxu0 %v3251
          %v3446 = vpop.f32.mrb[0].mxu0
          %v3447 = vadd.f32 %v3196, %v3446
          %v3448 = vpop.f32.mrb[0].mxu0
          %3449 = vmatprep.mubr.f32.mxu0 0.0
          %3450 = vmatmul.mubr.f32.gmra.mrb[0].mxu0 %v3254
          %v3451 = vpop.f32.mrb[0].mxu0
          %v3452 = vadd.f32 %v3196, %v3451
          %v3453 = vpop.f32.mrb[0].mxu0
          %3454 = vmatprep.mubr.f32.mxu0 0.0
          %3455 = vmatmul.mubr.f32.gmra.mrb[0].mxu0 %v3257
          %v3456 = vpop.f32.mrb[0].mxu0
          %v3457 = vadd.f32 %v3196, %v3456
          %v3458 = vpop.f32.mrb[0].mxu0
          %3459 = vmatprep.mubr.f32.mxu0 0.0
          %3460 = vmatmul.mubr.f32.gmra.mrb[0].mxu0 %v3260
          %v3461 = vpop.f32.mrb[0].mxu0
          %v3462 = vadd.f32 %v3196, %v3461
          %v3463 = vpop.f32.mrb[0].mxu0
          %3464 = vmatprep.mubr.f32.mxu0 0.0
          %3465 = vmatmul.mubr.f32.gmra.mrb[0].mxu0 %v3263
          %v3466 = vpop.f32.mrb[0].mxu0
          %v3467 = vadd.f32 %v3196, %v3466
          %v3468 = vpop.f32.mrb[0].mxu0
          %3469 = vmatprep.mubr.f32.mxu0 0.0
          %3470 = vmatmul.mubr.f32.gmra.mrb[0].mxu0 %v3266
          %v3471 = vpop.f32.mrb[0].mxu0
          %v3472 = vadd.f32 %v3196, %v3471
          %v3473 = vpop.f32.mrb[0].mxu0
          %3474 = vmatprep.mubr.f32.mxu0 0.0
          %3475 = vmatmul.mubr.f32.gmra.mrb[0].mxu0 %v3269
          %v3476 = vpop.f32.mrb[0].mxu0
          %v3477 = vadd.f32 %v3196, %v3476
          %v3478 = vpop.f32.mrb[0].mxu0
          %3479 = vmatprep.mubr.f32.mxu0 0.0
          %3480 = vmatmul.mubr.f32.gmra.mrb[0].mxu0 %v3272
          %v3481 = vpop.f32.mrb[0].mxu0
          %v3482 = vadd.f32 %v3196, %v3481
          %v3483 = vpop.f32.mrb[0].mxu0
          %3484 = vmatprep.mubr.f32.mxu0 0.0
          %3485 = vmatmul.mubr.f32.gmra.mrb[0].mxu0 %v3275
          %v3486 = vpop.f32.mrb[0].mxu0
          %v3487 = vadd.f32 %v3196, %v3486
          %v3488 = vpop.f32.mrb[0].mxu0
          %3489 = vmatprep.mubr.f32.mxu0 0.0
          %3490 = vmatmul.mubr.f32.gmra.mrb[0].mxu0 %v3278
          %v3491 = vpop.f32.mrb[0].mxu0
          %v3492 = vadd.f32 %v3196, %v3491
          %v3493 = vpop.f32.mrb[0].mxu0
          %3494 = vmatprep.mubr.f32.mxu0 0.0
          %3495 = vmatmul.mubr.f32.gmra.mrb[0].mxu0 %v3281
          %v3496 = vpop.f32.mrb[0].mxu0
          %v3497 = vadd.f32 %v3196, %v3496
          %v3498 = vpop.f32.mrb[0].mxu0
          %3499 = vmatprep.mubr.f32.mxu0 0.0
          %3500 = vmatmul.mubr.f32.gmra.mrb[0].mxu0 %v3284
          %v3501 = vpop.f32.mrb[0].mxu0
          %v3502 = vadd.f32 %v3196, %v3501
          %v3503 = vpop.f32.mrb[0].mxu0
          %3504 = vmatprep.mubr.f32.mxu0 0.0
          %3505 = vmatmul.mubr.f32.gmra.mrb[0].mxu0 %v3287
          %v3506 = vpop.f32.mrb[0].mxu0
          %v3507 = vadd.f32 %v3196, %v3506
          %v3508 = vpop.f32.mrb[0].mxu0
          %3509 = vmatprep.mubr.f32.mxu0 0.0
          %3510 = vmatmul.mubr.f32.gmra.mrb[0].mxu0 %v3290
          %v3511 = vpop.f32.mrb[0].mxu0
          %v3512 = vadd.f32 %v3196, %v3511
          %v3513 = vpop.f32.mrb[0].mxu0
          %3514 = vmatprep.mubr.f32.mxu0 0.0
          %3515 = vmatmul.mubr.f32.gmra.mrb[0].mxu0 %v3293
          %v3516 = vpop.f32.mrb[0].mxu0
          %v3517 = vadd.f32 %v3196, %v3516
          %v3518 = vpop.f32.mrb[0].mxu0
          %3519 = vdwg.mxu0
          %3520 = vxpose.xlu0.b32.start [1/16] %v3362, 128
          %3521 = vxpose.xlu0.b32.cont [2/16] %v3367, 128
          %3522 = vxpose.xlu0.b32.cont [3/16] 0.0, 128
          %3523 = vxpose.xlu0.b32.cont [4/16] 0.0, 128
          %3524 = vxpose.xlu0.b32.cont [5/16] 0.0, 128
          %3525 = vxpose.xlu0.b32.cont [6/16] 0.0, 128
          %3526 = vxpose.xlu0.b32.cont [7/16] 0.0, 128
          %3527 = vxpose.xlu0.b32.cont [8/16] 0.0, 128
          %3528 = vxpose.xlu0.b32.cont [9/16] 0.0, 128
          %3529 = vxpose.xlu0.b32.cont [10/16] 0.0, 128
          %3530 = vxpose.xlu0.b32.cont [11/16] 0.0, 128
          %3531 = vxpose.xlu0.b32.cont [12/16] 0.0, 128
          %3532 = vxpose.xlu0.b32.cont [13/16] 0.0, 128
          %3533 = vxpose.xlu0.b32.cont [14/16] 0.0, 128
          %3534 = vxpose.xlu0.b32.cont [15/16] 0.0, 128
          %3535 = vxpose.xlu0.b32.end [16/16] 0.0, 128
          %v3536 = vpop.trf.xlu0
          %v3537 = vpop.trf.xlu0
          %v3538 = vpop.trf.xlu0
          %v3539 = vpop.trf.xlu0
          %v3540 = vpop.trf.xlu0
          %v3541 = vpop.trf.xlu0
          %v3542 = vpop.trf.xlu0
          %v3543 = vpop.trf.xlu0
          %v3544 = vpop.trf.xlu0
          %v3545 = vpop.trf.xlu0
          %v3546 = vpop.trf.xlu0
          %v3547 = vpop.trf.xlu0
          %v3548 = vpop.trf.xlu0
          %v3549 = vpop.trf.xlu0
          %v3550 = vpop.trf.xlu0
          %v3551 = vpop.trf.xlu0
          %v3554 = vunpack.c.l.s4 1966171168
          %v3555 = vunpack.c.0.s8 %v3554
          %v3556 = vlaneseq
          %v3557 = vshrl.u32 %v3556, 7
          %v3558 = vsub.s32 %v3555, %v3557
          %v3559 = vrot.slane %v3536, %v3558
          %v3560 = vcombine.high %v3559, %v3559
          %v3562 = vunpack.c.l.s4 1966171168
          %v3563 = vunpack.c.0.s8 %v3562
          %v3564 = vlaneseq
          %v3565 = vshrl.u32 %v3564, 7
          %v3566 = vsub.s32 %v3563, %v3565
          %v3567 = vrot.slane %v3559, %v3566
          %v3569 = vunpack.c.l.s4 1966171168
          %v3570 = vunpack.c.0.s8 %v3569
          %v3571 = vlaneseq
          %v3572 = vshrl.u32 %v3571, 7
          %v3573 = vsub.s32 %v3570, %v3572
          %v3574 = vrot.slane %v3560, %v3573
          %v3575 = vcombine.high %v3567, %v3567
          %v3576 = vcombine.high %v3574, %v3574
          %vm3581 = vcmask 122880
          %3582 = vst.msk [vmem:[#allocation2] sm:$0x1] %vm3581, %v3567
          %3583 = vst.msk [vmem:[#allocation2 + $0x10] sm:$0x1] %vm3581, %v3574
          %3584 = vst.msk [vmem:[#allocation2 + $0x20] sm:$0x1] %vm3581, %v3575
          %3585 = vst.msk [vmem:[#allocation2 + $0x30] sm:$0x1] %vm3581, %v3576
          %3586 = vxpose.xlu0.b32.start [1/16] %v3372, 128
          %3587 = vxpose.xlu0.b32.cont [2/16] %v3377, 128
          %3588 = vxpose.xlu0.b32.cont [3/16] 0.0, 128
          %3589 = vxpose.xlu0.b32.cont [4/16] 0.0, 128
          %3590 = vxpose.xlu0.b32.cont [5/16] 0.0, 128
          %3591 = vxpose.xlu0.b32.cont [6/16] 0.0, 128
          %3592 = vxpose.xlu0.b32.cont [7/16] 0.0, 128
          %3593 = vxpose.xlu0.b32.cont [8/16] 0.0, 128
          %3594 = vxpose.xlu0.b32.cont [9/16] 0.0, 128
          %3595 = vxpose.xlu0.b32.cont [10/16] 0.0, 128
          %3596 = vxpose.xlu0.b32.cont [11/16] 0.0, 128
          %3597 = vxpose.xlu0.b32.cont [12/16] 0.0, 128
          %3598 = vxpose.xlu0.b32.cont [13/16] 0.0, 128
          %3599 = vxpose.xlu0.b32.cont [14/16] 0.0, 128
          %3600 = vxpose.xlu0.b32.cont [15/16] 0.0, 128
          %3601 = vxpose.xlu0.b32.end [16/16] 0.0, 128
          %v3602 = vpop.trf.xlu0
          %v3603 = vpop.trf.xlu0
          %v3604 = vpop.trf.xlu0
          %v3605 = vpop.trf.xlu0
          %v3606 = vpop.trf.xlu0
          %v3607 = vpop.trf.xlu0
          %v3608 = vpop.trf.xlu0
          %v3609 = vpop.trf.xlu0
          %v3610 = vpop.trf.xlu0
          %v3611 = vpop.trf.xlu0
          %v3612 = vpop.trf.xlu0
          %v3613 = vpop.trf.xlu0
          %v3614 = vpop.trf.xlu0
          %v3615 = vpop.trf.xlu0
          %v3616 = vpop.trf.xlu0
          %v3617 = vpop.trf.xlu0
          %v3620 = vunpack.c.l.s4 1966171168
          %v3621 = vunpack.c.0.s8 %v3620
          %v3622 = vlaneseq
          %v3623 = vshrl.u32 %v3622, 7
          %v3624 = vsub.s32 %v3621, %v3623
          %v3625 = vrot.slane %v3602, %v3624
          %v3626 = vcombine.high %v3625, %v3625
          %v3628 = vunpack.c.l.s4 1966171168
          %v3629 = vunpack.c.0.s8 %v3628
          %v3630 = vlaneseq
          %v3631 = vshrl.u32 %v3630, 7
          %v3632 = vsub.s32 %v3629, %v3631
          %v3633 = vrot.slane %v3625, %v3632
          %v3635 = vunpack.c.l.s4 1966171168
          %v3636 = vunpack.c.0.s8 %v3635
          %v3637 = vlaneseq
          %v3638 = vshrl.u32 %v3637, 7
          %v3639 = vsub.s32 %v3636, %v3638
          %v3640 = vrot.slane %v3626, %v3639
          %v3641 = vcombine.high %v3633, %v3633
          %v3642 = vcombine.high %v3640, %v3640
          %3647 = vst.msk [vmem:[#allocation2 + $0x1] sm:$0x1] %vm3581, %v3633
          %3648 = vst.msk [vmem:[#allocation2 + $0x11] sm:$0x1] %vm3581, %v3640
          %3649 = vst.msk [vmem:[#allocation2 + $0x21] sm:$0x1] %vm3581, %v3641
          %3650 = vst.msk [vmem:[#allocation2 + $0x31] sm:$0x1] %vm3581, %v3642
          %3651 = vxpose.xlu0.b32.start [1/16] %v3382, 128
          %3652 = vxpose.xlu0.b32.cont [2/16] %v3387, 128
          %3653 = vxpose.xlu0.b32.cont [3/16] 0.0, 128
          %3654 = vxpose.xlu0.b32.cont [4/16] 0.0, 128
          %3655 = vxpose.xlu0.b32.cont [5/16] 0.0, 128
          %3656 = vxpose.xlu0.b32.cont [6/16] 0.0, 128
          %3657 = vxpose.xlu0.b32.cont [7/16] 0.0, 128
          %3658 = vxpose.xlu0.b32.cont [8/16] 0.0, 128
          %3659 = vxpose.xlu0.b32.cont [9/16] 0.0, 128
          %3660 = vxpose.xlu0.b32.cont [10/16] 0.0, 128
          %3661 = vxpose.xlu0.b32.cont [11/16] 0.0, 128
          %3662 = vxpose.xlu0.b32.cont [12/16] 0.0, 128
          %3663 = vxpose.xlu0.b32.cont [13/16] 0.0, 128
          %3664 = vxpose.xlu0.b32.cont [14/16] 0.0, 128
          %3665 = vxpose.xlu0.b32.cont [15/16] 0.0, 128
          %3666 = vxpose.xlu0.b32.end [16/16] 0.0, 128
          %v3667 = vpop.trf.xlu0
          %v3668 = vpop.trf.xlu0
          %v3669 = vpop.trf.xlu0
          %v3670 = vpop.trf.xlu0
          %v3671 = vpop.trf.xlu0
          %v3672 = vpop.trf.xlu0
          %v3673 = vpop.trf.xlu0
          %v3674 = vpop.trf.xlu0
          %v3675 = vpop.trf.xlu0
          %v3676 = vpop.trf.xlu0
          %v3677 = vpop.trf.xlu0
          %v3678 = vpop.trf.xlu0
          %v3679 = vpop.trf.xlu0
          %v3680 = vpop.trf.xlu0
          %v3681 = vpop.trf.xlu0
          %v3682 = vpop.trf.xlu0
          %v3685 = vunpack.c.l.s4 1966171168
          %v3686 = vunpack.c.0.s8 %v3685
          %v3687 = vlaneseq
          %v3688 = vshrl.u32 %v3687, 7
          %v3689 = vsub.s32 %v3686, %v3688
          %v3690 = vrot.slane %v3667, %v3689
          %v3691 = vcombine.high %v3690, %v3690
          %v3693 = vunpack.c.l.s4 1966171168
          %v3694 = vunpack.c.0.s8 %v3693
          %v3695 = vlaneseq
          %v3696 = vshrl.u32 %v3695, 7
          %v3697 = vsub.s32 %v3694, %v3696
          %v3698 = vrot.slane %v3690, %v3697
          %v3700 = vunpack.c.l.s4 1966171168
          %v3701 = vunpack.c.0.s8 %v3700
          %v3702 = vlaneseq
          %v3703 = vshrl.u32 %v3702, 7
          %v3704 = vsub.s32 %v3701, %v3703
          %v3705 = vrot.slane %v3691, %v3704
          %v3706 = vcombine.high %v3698, %v3698
          %v3707 = vcombine.high %v3705, %v3705
          %3712 = vst.msk [vmem:[#allocation2 + $0x2] sm:$0x1] %vm3581, %v3698
          %3713 = vst.msk [vmem:[#allocation2 + $0x12] sm:$0x1] %vm3581, %v3705
          %3714 = vst.msk [vmem:[#allocation2 + $0x22] sm:$0x1] %vm3581, %v3706
          %3715 = vst.msk [vmem:[#allocation2 + $0x32] sm:$0x1] %vm3581, %v3707
          %3716 = vxpose.xlu0.b32.start [1/16] %v3392, 128
          %3717 = vxpose.xlu0.b32.cont [2/16] %v3397, 128
          %3718 = vxpose.xlu0.b32.cont [3/16] 0.0, 128
          %3719 = vxpose.xlu0.b32.cont [4/16] 0.0, 128
          %3720 = vxpose.xlu0.b32.cont [5/16] 0.0, 128
          %3721 = vxpose.xlu0.b32.cont [6/16] 0.0, 128
          %3722 = vxpose.xlu0.b32.cont [7/16] 0.0, 128
          %3723 = vxpose.xlu0.b32.cont [8/16] 0.0, 128
          %3724 = vxpose.xlu0.b32.cont [9/16] 0.0, 128
          %3725 = vxpose.xlu0.b32.cont [10/16] 0.0, 128
          %3726 = vxpose.xlu0.b32.cont [11/16] 0.0, 128
          %3727 = vxpose.xlu0.b32.cont [12/16] 0.0, 128
          %3728 = vxpose.xlu0.b32.cont [13/16] 0.0, 128
          %3729 = vxpose.xlu0.b32.cont [14/16] 0.0, 128
          %3730 = vxpose.xlu0.b32.cont [15/16] 0.0, 128
          %3731 = vxpose.xlu0.b32.end [16/16] 0.0, 128
          %v3732 = vpop.trf.xlu0
          %v3733 = vpop.trf.xlu0
          %v3734 = vpop.trf.xlu0
          %v3735 = vpop.trf.xlu0
          %v3736 = vpop.trf.xlu0
          %v3737 = vpop.trf.xlu0
          %v3738 = vpop.trf.xlu0
          %v3739 = vpop.trf.xlu0
          %v3740 = vpop.trf.xlu0
          %v3741 = vpop.trf.xlu0
          %v3742 = vpop.trf.xlu0
          %v3743 = vpop.trf.xlu0
          %v3744 = vpop.trf.xlu0
          %v3745 = vpop.trf.xlu0
          %v3746 = vpop.trf.xlu0
          %v3747 = vpop.trf.xlu0
          %v3750 = vunpack.c.l.s4 1966171168
          %v3751 = vunpack.c.0.s8 %v3750
          %v3752 = vlaneseq
          %v3753 = vshrl.u32 %v3752, 7
          %v3754 = vsub.s32 %v3751, %v3753
          %v3755 = vrot.slane %v3732, %v3754
          %v3756 = vcombine.high %v3755, %v3755
          %v3758 = vunpack.c.l.s4 1966171168
          %v3759 = vunpack.c.0.s8 %v3758
          %v3760 = vlaneseq
          %v3761 = vshrl.u32 %v3760, 7
          %v3762 = vsub.s32 %v3759, %v3761
          %v3763 = vrot.slane %v3755, %v3762
          %v3765 = vunpack.c.l.s4 1966171168
          %v3766 = vunpack.c.0.s8 %v3765
          %v3767 = vlaneseq
          %v3768 = vshrl.u32 %v3767, 7
          %v3769 = vsub.s32 %v3766, %v3768
          %v3770 = vrot.slane %v3756, %v3769
          %v3771 = vcombine.high %v3763, %v3763
          %v3772 = vcombine.high %v3770, %v3770
          %3777 = vst.msk [vmem:[#allocation2 + $0x3] sm:$0x1] %vm3581, %v3763
          %3778 = vst.msk [vmem:[#allocation2 + $0x13] sm:$0x1] %vm3581, %v3770
          %3779 = vst.msk [vmem:[#allocation2 + $0x23] sm:$0x1] %vm3581, %v3771
          %3780 = vst.msk [vmem:[#allocation2 + $0x33] sm:$0x1] %vm3581, %v3772
          %3781 = vxpose.xlu0.b32.start [1/16] %v3402, 128
          %3782 = vxpose.xlu0.b32.cont [2/16] %v3407, 128
          %3783 = vxpose.xlu0.b32.cont [3/16] 0.0, 128
          %3784 = vxpose.xlu0.b32.cont [4/16] 0.0, 128
          %3785 = vxpose.xlu0.b32.cont [5/16] 0.0, 128
          %3786 = vxpose.xlu0.b32.cont [6/16] 0.0, 128
          %3787 = vxpose.xlu0.b32.cont [7/16] 0.0, 128
          %3788 = vxpose.xlu0.b32.cont [8/16] 0.0, 128
          %3789 = vxpose.xlu0.b32.cont [9/16] 0.0, 128
          %3790 = vxpose.xlu0.b32.cont [10/16] 0.0, 128
          %3791 = vxpose.xlu0.b32.cont [11/16] 0.0, 128
          %3792 = vxpose.xlu0.b32.cont [12/16] 0.0, 128
          %3793 = vxpose.xlu0.b32.cont [13/16] 0.0, 128
          %3794 = vxpose.xlu0.b32.cont [14/16] 0.0, 128
          %3795 = vxpose.xlu0.b32.cont [15/16] 0.0, 128
          %3796 = vxpose.xlu0.b32.end [16/16] 0.0, 128
          %v3797 = vpop.trf.xlu0
          %v3798 = vpop.trf.xlu0
          %v3799 = vpop.trf.xlu0
          %v3800 = vpop.trf.xlu0
          %v3801 = vpop.trf.xlu0
          %v3802 = vpop.trf.xlu0
          %v3803 = vpop.trf.xlu0
          %v3804 = vpop.trf.xlu0
          %v3805 = vpop.trf.xlu0
          %v3806 = vpop.trf.xlu0
          %v3807 = vpop.trf.xlu0
          %v3808 = vpop.trf.xlu0
          %v3809 = vpop.trf.xlu0
          %v3810 = vpop.trf.xlu0
          %v3811 = vpop.trf.xlu0
          %v3812 = vpop.trf.xlu0
          %v3815 = vunpack.c.l.s4 1966171168
          %v3816 = vunpack.c.0.s8 %v3815
          %v3817 = vlaneseq
          %v3818 = vshrl.u32 %v3817, 7
          %v3819 = vsub.s32 %v3816, %v3818
          %v3820 = vrot.slane %v3797, %v3819
          %v3821 = vcombine.high %v3820, %v3820
          %v3823 = vunpack.c.l.s4 1966171168
          %v3824 = vunpack.c.0.s8 %v3823
          %v3825 = vlaneseq
          %v3826 = vshrl.u32 %v3825, 7
          %v3827 = vsub.s32 %v3824, %v3826
          %v3828 = vrot.slane %v3820, %v3827
          %v3830 = vunpack.c.l.s4 1966171168
          %v3831 = vunpack.c.0.s8 %v3830
          %v3832 = vlaneseq
          %v3833 = vshrl.u32 %v3832, 7
          %v3834 = vsub.s32 %v3831, %v3833
          %v3835 = vrot.slane %v3821, %v3834
          %v3836 = vcombine.high %v3828, %v3828
          %v3837 = vcombine.high %v3835, %v3835
          %3842 = vst.msk [vmem:[#allocation2 + $0x4] sm:$0x1] %vm3581, %v3828
          %3843 = vst.msk [vmem:[#allocation2 + $0x14] sm:$0x1] %vm3581, %v3835
          %3844 = vst.msk [vmem:[#allocation2 + $0x24] sm:$0x1] %vm3581, %v3836
          %3845 = vst.msk [vmem:[#allocation2 + $0x34] sm:$0x1] %vm3581, %v3837
          %3846 = vxpose.xlu0.b32.start [1/16] %v3412, 128
          %3847 = vxpose.xlu0.b32.cont [2/16] %v3417, 128
          %3848 = vxpose.xlu0.b32.cont [3/16] 0.0, 128
          %3849 = vxpose.xlu0.b32.cont [4/16] 0.0, 128
          %3850 = vxpose.xlu0.b32.cont [5/16] 0.0, 128
          %3851 = vxpose.xlu0.b32.cont [6/16] 0.0, 128
          %3852 = vxpose.xlu0.b32.cont [7/16] 0.0, 128
          %3853 = vxpose.xlu0.b32.cont [8/16] 0.0, 128
          %3854 = vxpose.xlu0.b32.cont [9/16] 0.0, 128
          %3855 = vxpose.xlu0.b32.cont [10/16] 0.0, 128
          %3856 = vxpose.xlu0.b32.cont [11/16] 0.0, 128
          %3857 = vxpose.xlu0.b32.cont [12/16] 0.0, 128
          %3858 = vxpose.xlu0.b32.cont [13/16] 0.0, 128
          %3859 = vxpose.xlu0.b32.cont [14/16] 0.0, 128
          %3860 = vxpose.xlu0.b32.cont [15/16] 0.0, 128
          %3861 = vxpose.xlu0.b32.end [16/16] 0.0, 128
          %v3862 = vpop.trf.xlu0
          %v3863 = vpop.trf.xlu0
          %v3864 = vpop.trf.xlu0
          %v3865 = vpop.trf.xlu0
          %v3866 = vpop.trf.xlu0
          %v3867 = vpop.trf.xlu0
          %v3868 = vpop.trf.xlu0
          %v3869 = vpop.trf.xlu0
          %v3870 = vpop.trf.xlu0
          %v3871 = vpop.trf.xlu0
          %v3872 = vpop.trf.xlu0
          %v3873 = vpop.trf.xlu0
          %v3874 = vpop.trf.xlu0
          %v3875 = vpop.trf.xlu0
          %v3876 = vpop.trf.xlu0
          %v3877 = vpop.trf.xlu0
          %v3880 = vunpack.c.l.s4 1966171168
          %v3881 = vunpack.c.0.s8 %v3880
          %v3882 = vlaneseq
          %v3883 = vshrl.u32 %v3882, 7
          %v3884 = vsub.s32 %v3881, %v3883
          %v3885 = vrot.slane %v3862, %v3884
          %v3886 = vcombine.high %v3885, %v3885
          %v3888 = vunpack.c.l.s4 1966171168
          %v3889 = vunpack.c.0.s8 %v3888
          %v3890 = vlaneseq
          %v3891 = vshrl.u32 %v3890, 7
          %v3892 = vsub.s32 %v3889, %v3891
          %v3893 = vrot.slane %v3885, %v3892
          %v3895 = vunpack.c.l.s4 1966171168
          %v3896 = vunpack.c.0.s8 %v3895
          %v3897 = vlaneseq
          %v3898 = vshrl.u32 %v3897, 7
          %v3899 = vsub.s32 %v3896, %v3898
          %v3900 = vrot.slane %v3886, %v3899
          %v3901 = vcombine.high %v3893, %v3893
          %v3902 = vcombine.high %v3900, %v3900
          %3907 = vst.msk [vmem:[#allocation2 + $0x5] sm:$0x1] %vm3581, %v3893
          %3908 = vst.msk [vmem:[#allocation2 + $0x15] sm:$0x1] %vm3581, %v3900
          %3909 = vst.msk [vmem:[#allocation2 + $0x25] sm:$0x1] %vm3581, %v3901
          %3910 = vst.msk [vmem:[#allocation2 + $0x35] sm:$0x1] %vm3581, %v3902
          %3911 = vxpose.xlu0.b32.start [1/16] %v3422, 128
          %3912 = vxpose.xlu0.b32.cont [2/16] %v3427, 128
          %3913 = vxpose.xlu0.b32.cont [3/16] 0.0, 128
          %3914 = vxpose.xlu0.b32.cont [4/16] 0.0, 128
          %3915 = vxpose.xlu0.b32.cont [5/16] 0.0, 128
          %3916 = vxpose.xlu0.b32.cont [6/16] 0.0, 128
          %3917 = vxpose.xlu0.b32.cont [7/16] 0.0, 128
          %3918 = vxpose.xlu0.b32.cont [8/16] 0.0, 128
          %3919 = vxpose.xlu0.b32.cont [9/16] 0.0, 128
          %3920 = vxpose.xlu0.b32.cont [10/16] 0.0, 128
          %3921 = vxpose.xlu0.b32.cont [11/16] 0.0, 128
          %3922 = vxpose.xlu0.b32.cont [12/16] 0.0, 128
          %3923 = vxpose.xlu0.b32.cont [13/16] 0.0, 128
          %3924 = vxpose.xlu0.b32.cont [14/16] 0.0, 128
          %3925 = vxpose.xlu0.b32.cont [15/16] 0.0, 128
          %3926 = vxpose.xlu0.b32.end [16/16] 0.0, 128
          %v3927 = vpop.trf.xlu0
          %v3928 = vpop.trf.xlu0
          %v3929 = vpop.trf.xlu0
          %v3930 = vpop.trf.xlu0
          %v3931 = vpop.trf.xlu0
          %v3932 = vpop.trf.xlu0
          %v3933 = vpop.trf.xlu0
          %v3934 = vpop.trf.xlu0
          %v3935 = vpop.trf.xlu0
          %v3936 = vpop.trf.xlu0
          %v3937 = vpop.trf.xlu0
          %v3938 = vpop.trf.xlu0
          %v3939 = vpop.trf.xlu0
          %v3940 = vpop.trf.xlu0
          %v3941 = vpop.trf.xlu0
          %v3942 = vpop.trf.xlu0
          %v3945 = vunpack.c.l.s4 1966171168
          %v3946 = vunpack.c.0.s8 %v3945
          %v3947 = vlaneseq
          %v3948 = vshrl.u32 %v3947, 7
          %v3949 = vsub.s32 %v3946, %v3948
          %v3950 = vrot.slane %v3927, %v3949
          %v3951 = vcombine.high %v3950, %v3950
          %v3953 = vunpack.c.l.s4 1966171168
          %v3954 = vunpack.c.0.s8 %v3953
          %v3955 = vlaneseq
          %v3956 = vshrl.u32 %v3955, 7
          %v3957 = vsub.s32 %v3954, %v3956
          %v3958 = vrot.slane %v3950, %v3957
          %v3960 = vunpack.c.l.s4 1966171168
          %v3961 = vunpack.c.0.s8 %v3960
          %v3962 = vlaneseq
          %v3963 = vshrl.u32 %v3962, 7
          %v3964 = vsub.s32 %v3961, %v3963
          %v3965 = vrot.slane %v3951, %v3964
          %v3966 = vcombine.high %v3958, %v3958
          %v3967 = vcombine.high %v3965, %v3965
          %3972 = vst.msk [vmem:[#allocation2 + $0x6] sm:$0x1] %vm3581, %v3958
          %3973 = vst.msk [vmem:[#allocation2 + $0x16] sm:$0x1] %vm3581, %v3965
          %3974 = vst.msk [vmem:[#allocation2 + $0x26] sm:$0x1] %vm3581, %v3966
          %3975 = vst.msk [vmem:[#allocation2 + $0x36] sm:$0x1] %vm3581, %v3967
          %3976 = vxpose.xlu0.b32.start [1/16] %v3432, 128
          %3977 = vxpose.xlu0.b32.cont [2/16] %v3437, 128
          %3978 = vxpose.xlu0.b32.cont [3/16] 0.0, 128
          %3979 = vxpose.xlu0.b32.cont [4/16] 0.0, 128
          %3980 = vxpose.xlu0.b32.cont [5/16] 0.0, 128
          %3981 = vxpose.xlu0.b32.cont [6/16] 0.0, 128
          %3982 = vxpose.xlu0.b32.cont [7/16] 0.0, 128
          %3983 = vxpose.xlu0.b32.cont [8/16] 0.0, 128
          %3984 = vxpose.xlu0.b32.cont [9/16] 0.0, 128
          %3985 = vxpose.xlu0.b32.cont [10/16] 0.0, 128
          %3986 = vxpose.xlu0.b32.cont [11/16] 0.0, 128
          %3987 = vxpose.xlu0.b32.cont [12/16] 0.0, 128
          %3988 = vxpose.xlu0.b32.cont [13/16] 0.0, 128
          %3989 = vxpose.xlu0.b32.cont [14/16] 0.0, 128
          %3990 = vxpose.xlu0.b32.cont [15/16] 0.0, 128
          %3991 = vxpose.xlu0.b32.end [16/16] 0.0, 128
          %v3992 = vpop.trf.xlu0
          %v3993 = vpop.trf.xlu0
          %v3994 = vpop.trf.xlu0
          %v3995 = vpop.trf.xlu0
          %v3996 = vpop.trf.xlu0
          %v3997 = vpop.trf.xlu0
          %v3998 = vpop.trf.xlu0
          %v3999 = vpop.trf.xlu0
          %v4000 = vpop.trf.xlu0
          %v4001 = vpop.trf.xlu0
          %v4002 = vpop.trf.xlu0
          %v4003 = vpop.trf.xlu0
          %v4004 = vpop.trf.xlu0
          %v4005 = vpop.trf.xlu0
          %v4006 = vpop.trf.xlu0
          %v4007 = vpop.trf.xlu0
          %v4010 = vunpack.c.l.s4 1966171168
          %v4011 = vunpack.c.0.s8 %v4010
          %v4012 = vlaneseq
          %v4013 = vshrl.u32 %v4012, 7
          %v4014 = vsub.s32 %v4011, %v4013
          %v4015 = vrot.slane %v3992, %v4014
          %v4016 = vcombine.high %v4015, %v4015
          %v4018 = vunpack.c.l.s4 1966171168
          %v4019 = vunpack.c.0.s8 %v4018
          %v4020 = vlaneseq
          %v4021 = vshrl.u32 %v4020, 7
          %v4022 = vsub.s32 %v4019, %v4021
          %v4023 = vrot.slane %v4015, %v4022
          %v4025 = vunpack.c.l.s4 1966171168
          %v4026 = vunpack.c.0.s8 %v4025
          %v4027 = vlaneseq
          %v4028 = vshrl.u32 %v4027, 7
          %v4029 = vsub.s32 %v4026, %v4028
          %v4030 = vrot.slane %v4016, %v4029
          %v4031 = vcombine.high %v4023, %v4023
          %v4032 = vcombine.high %v4030, %v4030
          %4037 = vst.msk [vmem:[#allocation2 + $0x7] sm:$0x1] %vm3581, %v4023
          %4038 = vst.msk [vmem:[#allocation2 + $0x17] sm:$0x1] %vm3581, %v4030
          %4039 = vst.msk [vmem:[#allocation2 + $0x27] sm:$0x1] %vm3581, %v4031
          %4040 = vst.msk [vmem:[#allocation2 + $0x37] sm:$0x1] %vm3581, %v4032
          %4041 = vxpose.xlu0.b32.start [1/16] %v3442, 128
          %4042 = vxpose.xlu0.b32.cont [2/16] %v3447, 128
          %4043 = vxpose.xlu0.b32.cont [3/16] 0.0, 128
          %4044 = vxpose.xlu0.b32.cont [4/16] 0.0, 128
          %4045 = vxpose.xlu0.b32.cont [5/16] 0.0, 128
          %4046 = vxpose.xlu0.b32.cont [6/16] 0.0, 128
          %4047 = vxpose.xlu0.b32.cont [7/16] 0.0, 128
          %4048 = vxpose.xlu0.b32.cont [8/16] 0.0, 128
          %4049 = vxpose.xlu0.b32.cont [9/16] 0.0, 128
          %4050 = vxpose.xlu0.b32.cont [10/16] 0.0, 128
          %4051 = vxpose.xlu0.b32.cont [11/16] 0.0, 128
          %4052 = vxpose.xlu0.b32.cont [12/16] 0.0, 128
          %4053 = vxpose.xlu0.b32.cont [13/16] 0.0, 128
          %4054 = vxpose.xlu0.b32.cont [14/16] 0.0, 128
          %4055 = vxpose.xlu0.b32.cont [15/16] 0.0, 128
          %4056 = vxpose.xlu0.b32.end [16/16] 0.0, 128
          %v4057 = vpop.trf.xlu0
          %v4058 = vpop.trf.xlu0
          %v4059 = vpop.trf.xlu0
          %v4060 = vpop.trf.xlu0
          %v4061 = vpop.trf.xlu0
          %v4062 = vpop.trf.xlu0
          %v4063 = vpop.trf.xlu0
          %v4064 = vpop.trf.xlu0
          %v4065 = vpop.trf.xlu0
          %v4066 = vpop.trf.xlu0
          %v4067 = vpop.trf.xlu0
          %v4068 = vpop.trf.xlu0
          %v4069 = vpop.trf.xlu0
          %v4070 = vpop.trf.xlu0
          %v4071 = vpop.trf.xlu0
          %v4072 = vpop.trf.xlu0
          %v4075 = vunpack.c.l.s4 1966171168
          %v4076 = vunpack.c.0.s8 %v4075
          %v4077 = vlaneseq
          %v4078 = vshrl.u32 %v4077, 7
          %v4079 = vsub.s32 %v4076, %v4078
          %v4080 = vrot.slane %v4057, %v4079
          %v4081 = vcombine.high %v4080, %v4080
          %v4083 = vunpack.c.l.s4 1966171168
          %v4084 = vunpack.c.0.s8 %v4083
          %v4085 = vlaneseq
          %v4086 = vshrl.u32 %v4085, 7
          %v4087 = vsub.s32 %v4084, %v4086
          %v4088 = vrot.slane %v4080, %v4087
          %v4090 = vunpack.c.l.s4 1966171168
          %v4091 = vunpack.c.0.s8 %v4090
          %v4092 = vlaneseq
          %v4093 = vshrl.u32 %v4092, 7
          %v4094 = vsub.s32 %v4091, %v4093
          %v4095 = vrot.slane %v4081, %v4094
          %v4096 = vcombine.high %v4088, %v4088
          %v4097 = vcombine.high %v4095, %v4095
          %4102 = vst.msk [vmem:[#allocation2 + $0x8] sm:$0x1] %vm3581, %v4088
          %4103 = vst.msk [vmem:[#allocation2 + $0x18] sm:$0x1] %vm3581, %v4095
          %4104 = vst.msk [vmem:[#allocation2 + $0x28] sm:$0x1] %vm3581, %v4096
          %4105 = vst.msk [vmem:[#allocation2 + $0x38] sm:$0x1] %vm3581, %v4097
          %4106 = vxpose.xlu0.b32.start [1/16] %v3452, 128
          %4107 = vxpose.xlu0.b32.cont [2/16] %v3457, 128
          %4108 = vxpose.xlu0.b32.cont [3/16] 0.0, 128
          %4109 = vxpose.xlu0.b32.cont [4/16] 0.0, 128
          %4110 = vxpose.xlu0.b32.cont [5/16] 0.0, 128
          %4111 = vxpose.xlu0.b32.cont [6/16] 0.0, 128
          %4112 = vxpose.xlu0.b32.cont [7/16] 0.0, 128
          %4113 = vxpose.xlu0.b32.cont [8/16] 0.0, 128
          %4114 = vxpose.xlu0.b32.cont [9/16] 0.0, 128
          %4115 = vxpose.xlu0.b32.cont [10/16] 0.0, 128
          %4116 = vxpose.xlu0.b32.cont [11/16] 0.0, 128
          %4117 = vxpose.xlu0.b32.cont [12/16] 0.0, 128
          %4118 = vxpose.xlu0.b32.cont [13/16] 0.0, 128
          %4119 = vxpose.xlu0.b32.cont [14/16] 0.0, 128
          %4120 = vxpose.xlu0.b32.cont [15/16] 0.0, 128
          %4121 = vxpose.xlu0.b32.end [16/16] 0.0, 128
          %v4122 = vpop.trf.xlu0
          %v4123 = vpop.trf.xlu0
          %v4124 = vpop.trf.xlu0
          %v4125 = vpop.trf.xlu0
          %v4126 = vpop.trf.xlu0
          %v4127 = vpop.trf.xlu0
          %v4128 = vpop.trf.xlu0
          %v4129 = vpop.trf.xlu0
          %v4130 = vpop.trf.xlu0
          %v4131 = vpop.trf.xlu0
          %v4132 = vpop.trf.xlu0
          %v4133 = vpop.trf.xlu0
          %v4134 = vpop.trf.xlu0
          %v4135 = vpop.trf.xlu0
          %v4136 = vpop.trf.xlu0
          %v4137 = vpop.trf.xlu0
          %v4140 = vunpack.c.l.s4 1966171168
          %v4141 = vunpack.c.0.s8 %v4140
          %v4142 = vlaneseq
          %v4143 = vshrl.u32 %v4142, 7
          %v4144 = vsub.s32 %v4141, %v4143
          %v4145 = vrot.slane %v4122, %v4144
          %v4146 = vcombine.high %v4145, %v4145
          %v4148 = vunpack.c.l.s4 1966171168
          %v4149 = vunpack.c.0.s8 %v4148
          %v4150 = vlaneseq
          %v4151 = vshrl.u32 %v4150, 7
          %v4152 = vsub.s32 %v4149, %v4151
          %v4153 = vrot.slane %v4145, %v4152
          %v4155 = vunpack.c.l.s4 1966171168
          %v4156 = vunpack.c.0.s8 %v4155
          %v4157 = vlaneseq
          %v4158 = vshrl.u32 %v4157, 7
          %v4159 = vsub.s32 %v4156, %v4158
          %v4160 = vrot.slane %v4146, %v4159
          %v4161 = vcombine.high %v4153, %v4153
          %v4162 = vcombine.high %v4160, %v4160
          %4167 = vst.msk [vmem:[#allocation2 + $0x9] sm:$0x1] %vm3581, %v4153
          %4168 = vst.msk [vmem:[#allocation2 + $0x19] sm:$0x1] %vm3581, %v4160
          %4169 = vst.msk [vmem:[#allocation2 + $0x29] sm:$0x1] %vm3581, %v4161
          %4170 = vst.msk [vmem:[#allocation2 + $0x39] sm:$0x1] %vm3581, %v4162
          %4171 = vxpose.xlu0.b32.start [1/16] %v3462, 128
          %4172 = vxpose.xlu0.b32.cont [2/16] %v3467, 128
          %4173 = vxpose.xlu0.b32.cont [3/16] 0.0, 128
          %4174 = vxpose.xlu0.b32.cont [4/16] 0.0, 128
          %4175 = vxpose.xlu0.b32.cont [5/16] 0.0, 128
          %4176 = vxpose.xlu0.b32.cont [6/16] 0.0, 128
          %4177 = vxpose.xlu0.b32.cont [7/16] 0.0, 128
          %4178 = vxpose.xlu0.b32.cont [8/16] 0.0, 128
          %4179 = vxpose.xlu0.b32.cont [9/16] 0.0, 128
          %4180 = vxpose.xlu0.b32.cont [10/16] 0.0, 128
          %4181 = vxpose.xlu0.b32.cont [11/16] 0.0, 128
          %4182 = vxpose.xlu0.b32.cont [12/16] 0.0, 128
          %4183 = vxpose.xlu0.b32.cont [13/16] 0.0, 128
          %4184 = vxpose.xlu0.b32.cont [14/16] 0.0, 128
          %4185 = vxpose.xlu0.b32.cont [15/16] 0.0, 128
          %4186 = vxpose.xlu0.b32.end [16/16] 0.0, 128
          %v4187 = vpop.trf.xlu0
          %v4188 = vpop.trf.xlu0
          %v4189 = vpop.trf.xlu0
          %v4190 = vpop.trf.xlu0
          %v4191 = vpop.trf.xlu0
          %v4192 = vpop.trf.xlu0
          %v4193 = vpop.trf.xlu0
          %v4194 = vpop.trf.xlu0
          %v4195 = vpop.trf.xlu0
          %v4196 = vpop.trf.xlu0
          %v4197 = vpop.trf.xlu0
          %v4198 = vpop.trf.xlu0
          %v4199 = vpop.trf.xlu0
          %v4200 = vpop.trf.xlu0
          %v4201 = vpop.trf.xlu0
          %v4202 = vpop.trf.xlu0
          %v4205 = vunpack.c.l.s4 1966171168
          %v4206 = vunpack.c.0.s8 %v4205
          %v4207 = vlaneseq
          %v4208 = vshrl.u32 %v4207, 7
          %v4209 = vsub.s32 %v4206, %v4208
          %v4210 = vrot.slane %v4187, %v4209
          %v4211 = vcombine.high %v4210, %v4210
          %v4213 = vunpack.c.l.s4 1966171168
          %v4214 = vunpack.c.0.s8 %v4213
          %v4215 = vlaneseq
          %v4216 = vshrl.u32 %v4215, 7
          %v4217 = vsub.s32 %v4214, %v4216
          %v4218 = vrot.slane %v4210, %v4217
          %v4220 = vunpack.c.l.s4 1966171168
          %v4221 = vunpack.c.0.s8 %v4220
          %v4222 = vlaneseq
          %v4223 = vshrl.u32 %v4222, 7
          %v4224 = vsub.s32 %v4221, %v4223
          %v4225 = vrot.slane %v4211, %v4224
          %v4226 = vcombine.high %v4218, %v4218
          %v4227 = vcombine.high %v4225, %v4225
          %4232 = vst.msk [vmem:[#allocation2 + $0xa] sm:$0x1] %vm3581, %v4218
          %4233 = vst.msk [vmem:[#allocation2 + $0x1a] sm:$0x1] %vm3581, %v4225
          %4234 = vst.msk [vmem:[#allocation2 + $0x2a] sm:$0x1] %vm3581, %v4226
          %4235 = vst.msk [vmem:[#allocation2 + $0x3a] sm:$0x1] %vm3581, %v4227
          %4236 = vxpose.xlu0.b32.start [1/16] %v3472, 128
          %4237 = vxpose.xlu0.b32.cont [2/16] %v3477, 128
          %4238 = vxpose.xlu0.b32.cont [3/16] 0.0, 128
          %4239 = vxpose.xlu0.b32.cont [4/16] 0.0, 128
          %4240 = vxpose.xlu0.b32.cont [5/16] 0.0, 128
          %4241 = vxpose.xlu0.b32.cont [6/16] 0.0, 128
          %4242 = vxpose.xlu0.b32.cont [7/16] 0.0, 128
          %4243 = vxpose.xlu0.b32.cont [8/16] 0.0, 128
          %4244 = vxpose.xlu0.b32.cont [9/16] 0.0, 128
          %4245 = vxpose.xlu0.b32.cont [10/16] 0.0, 128
          %4246 = vxpose.xlu0.b32.cont [11/16] 0.0, 128
          %4247 = vxpose.xlu0.b32.cont [12/16] 0.0, 128
          %4248 = vxpose.xlu0.b32.cont [13/16] 0.0, 128
          %4249 = vxpose.xlu0.b32.cont [14/16] 0.0, 128
          %4250 = vxpose.xlu0.b32.cont [15/16] 0.0, 128
          %4251 = vxpose.xlu0.b32.end [16/16] 0.0, 128
          %v4252 = vpop.trf.xlu0
          %v4253 = vpop.trf.xlu0
          %v4254 = vpop.trf.xlu0
          %v4255 = vpop.trf.xlu0
          %v4256 = vpop.trf.xlu0
          %v4257 = vpop.trf.xlu0
          %v4258 = vpop.trf.xlu0
          %v4259 = vpop.trf.xlu0
          %v4260 = vpop.trf.xlu0
          %v4261 = vpop.trf.xlu0
          %v4262 = vpop.trf.xlu0
          %v4263 = vpop.trf.xlu0
          %v4264 = vpop.trf.xlu0
          %v4265 = vpop.trf.xlu0
          %v4266 = vpop.trf.xlu0
          %v4267 = vpop.trf.xlu0
          %v4270 = vunpack.c.l.s4 1966171168
          %v4271 = vunpack.c.0.s8 %v4270
          %v4272 = vlaneseq
          %v4273 = vshrl.u32 %v4272, 7
          %v4274 = vsub.s32 %v4271, %v4273
          %v4275 = vrot.slane %v4252, %v4274
          %v4276 = vcombine.high %v4275, %v4275
          %v4278 = vunpack.c.l.s4 1966171168
          %v4279 = vunpack.c.0.s8 %v4278
          %v4280 = vlaneseq
          %v4281 = vshrl.u32 %v4280, 7
          %v4282 = vsub.s32 %v4279, %v4281
          %v4283 = vrot.slane %v4275, %v4282
          %v4285 = vunpack.c.l.s4 1966171168
          %v4286 = vunpack.c.0.s8 %v4285
          %v4287 = vlaneseq
          %v4288 = vshrl.u32 %v4287, 7
          %v4289 = vsub.s32 %v4286, %v4288
          %v4290 = vrot.slane %v4276, %v4289
          %v4291 = vcombine.high %v4283, %v4283
          %v4292 = vcombine.high %v4290, %v4290
          %4297 = vst.msk [vmem:[#allocation2 + $0xb] sm:$0x1] %vm3581, %v4283
          %4298 = vst.msk [vmem:[#allocation2 + $0x1b] sm:$0x1] %vm3581, %v4290
          %4299 = vst.msk [vmem:[#allocation2 + $0x2b] sm:$0x1] %vm3581, %v4291
          %4300 = vst.msk [vmem:[#allocation2 + $0x3b] sm:$0x1] %vm3581, %v4292
          %4301 = vxpose.xlu0.b32.start [1/16] %v3482, 128
          %4302 = vxpose.xlu0.b32.cont [2/16] %v3487, 128
          %4303 = vxpose.xlu0.b32.cont [3/16] 0.0, 128
          %4304 = vxpose.xlu0.b32.cont [4/16] 0.0, 128
          %4305 = vxpose.xlu0.b32.cont [5/16] 0.0, 128
          %4306 = vxpose.xlu0.b32.cont [6/16] 0.0, 128
          %4307 = vxpose.xlu0.b32.cont [7/16] 0.0, 128
          %4308 = vxpose.xlu0.b32.cont [8/16] 0.0, 128
          %4309 = vxpose.xlu0.b32.cont [9/16] 0.0, 128
          %4310 = vxpose.xlu0.b32.cont [10/16] 0.0, 128
          %4311 = vxpose.xlu0.b32.cont [11/16] 0.0, 128
          %4312 = vxpose.xlu0.b32.cont [12/16] 0.0, 128
          %4313 = vxpose.xlu0.b32.cont [13/16] 0.0, 128
          %4314 = vxpose.xlu0.b32.cont [14/16] 0.0, 128
          %4315 = vxpose.xlu0.b32.cont [15/16] 0.0, 128
          %4316 = vxpose.xlu0.b32.end [16/16] 0.0, 128
          %v4317 = vpop.trf.xlu0
          %v4318 = vpop.trf.xlu0
          %v4319 = vpop.trf.xlu0
          %v4320 = vpop.trf.xlu0
          %v4321 = vpop.trf.xlu0
          %v4322 = vpop.trf.xlu0
          %v4323 = vpop.trf.xlu0
          %v4324 = vpop.trf.xlu0
          %v4325 = vpop.trf.xlu0
          %v4326 = vpop.trf.xlu0
          %v4327 = vpop.trf.xlu0
          %v4328 = vpop.trf.xlu0
          %v4329 = vpop.trf.xlu0
          %v4330 = vpop.trf.xlu0
          %v4331 = vpop.trf.xlu0
          %v4332 = vpop.trf.xlu0
          %v4335 = vunpack.c.l.s4 1966171168
          %v4336 = vunpack.c.0.s8 %v4335
          %v4337 = vlaneseq
          %v4338 = vshrl.u32 %v4337, 7
          %v4339 = vsub.s32 %v4336, %v4338
          %v4340 = vrot.slane %v4317, %v4339
          %v4341 = vcombine.high %v4340, %v4340
          %v4343 = vunpack.c.l.s4 1966171168
          %v4344 = vunpack.c.0.s8 %v4343
          %v4345 = vlaneseq
          %v4346 = vshrl.u32 %v4345, 7
          %v4347 = vsub.s32 %v4344, %v4346
          %v4348 = vrot.slane %v4340, %v4347
          %v4350 = vunpack.c.l.s4 1966171168
          %v4351 = vunpack.c.0.s8 %v4350
          %v4352 = vlaneseq
          %v4353 = vshrl.u32 %v4352, 7
          %v4354 = vsub.s32 %v4351, %v4353
          %v4355 = vrot.slane %v4341, %v4354
          %v4356 = vcombine.high %v4348, %v4348
          %v4357 = vcombine.high %v4355, %v4355
          %4362 = vst.msk [vmem:[#allocation2 + $0xc] sm:$0x1] %vm3581, %v4348
          %4363 = vst.msk [vmem:[#allocation2 + $0x1c] sm:$0x1] %vm3581, %v4355
          %4364 = vst.msk [vmem:[#allocation2 + $0x2c] sm:$0x1] %vm3581, %v4356
          %4365 = vst.msk [vmem:[#allocation2 + $0x3c] sm:$0x1] %vm3581, %v4357
          %4366 = vxpose.xlu0.b32.start [1/16] %v3492, 128
          %4367 = vxpose.xlu0.b32.cont [2/16] %v3497, 128
          %4368 = vxpose.xlu0.b32.cont [3/16] 0.0, 128
          %4369 = vxpose.xlu0.b32.cont [4/16] 0.0, 128
          %4370 = vxpose.xlu0.b32.cont [5/16] 0.0, 128
          %4371 = vxpose.xlu0.b32.cont [6/16] 0.0, 128
          %4372 = vxpose.xlu0.b32.cont [7/16] 0.0, 128
          %4373 = vxpose.xlu0.b32.cont [8/16] 0.0, 128
          %4374 = vxpose.xlu0.b32.cont [9/16] 0.0, 128
          %4375 = vxpose.xlu0.b32.cont [10/16] 0.0, 128
          %4376 = vxpose.xlu0.b32.cont [11/16] 0.0, 128
          %4377 = vxpose.xlu0.b32.cont [12/16] 0.0, 128
          %4378 = vxpose.xlu0.b32.cont [13/16] 0.0, 128
          %4379 = vxpose.xlu0.b32.cont [14/16] 0.0, 128
          %4380 = vxpose.xlu0.b32.cont [15/16] 0.0, 128
          %4381 = vxpose.xlu0.b32.end [16/16] 0.0, 128
          %v4382 = vpop.trf.xlu0
          %v4383 = vpop.trf.xlu0
          %v4384 = vpop.trf.xlu0
          %v4385 = vpop.trf.xlu0
          %v4386 = vpop.trf.xlu0
          %v4387 = vpop.trf.xlu0
          %v4388 = vpop.trf.xlu0
          %v4389 = vpop.trf.xlu0
          %v4390 = vpop.trf.xlu0
          %v4391 = vpop.trf.xlu0
          %v4392 = vpop.trf.xlu0
          %v4393 = vpop.trf.xlu0
          %v4394 = vpop.trf.xlu0
          %v4395 = vpop.trf.xlu0
          %v4396 = vpop.trf.xlu0
          %v4397 = vpop.trf.xlu0
          %v4400 = vunpack.c.l.s4 1966171168
          %v4401 = vunpack.c.0.s8 %v4400
          %v4402 = vlaneseq
          %v4403 = vshrl.u32 %v4402, 7
          %v4404 = vsub.s32 %v4401, %v4403
          %v4405 = vrot.slane %v4382, %v4404
          %v4406 = vcombine.high %v4405, %v4405
          %v4408 = vunpack.c.l.s4 1966171168
          %v4409 = vunpack.c.0.s8 %v4408
          %v4410 = vlaneseq
          %v4411 = vshrl.u32 %v4410, 7
          %v4412 = vsub.s32 %v4409, %v4411
          %v4413 = vrot.slane %v4405, %v4412
          %v4415 = vunpack.c.l.s4 1966171168
          %v4416 = vunpack.c.0.s8 %v4415
          %v4417 = vlaneseq
          %v4418 = vshrl.u32 %v4417, 7
          %v4419 = vsub.s32 %v4416, %v4418
          %v4420 = vrot.slane %v4406, %v4419
          %v4421 = vcombine.high %v4413, %v4413
          %v4422 = vcombine.high %v4420, %v4420
          %4427 = vst.msk [vmem:[#allocation2 + $0xd] sm:$0x1] %vm3581, %v4413
          %4428 = vst.msk [vmem:[#allocation2 + $0x1d] sm:$0x1] %vm3581, %v4420
          %4429 = vst.msk [vmem:[#allocation2 + $0x2d] sm:$0x1] %vm3581, %v4421
          %4430 = vst.msk [vmem:[#allocation2 + $0x3d] sm:$0x1] %vm3581, %v4422
          %4431 = vxpose.xlu0.b32.start [1/16] %v3502, 128
          %4432 = vxpose.xlu0.b32.cont [2/16] %v3507, 128
          %4433 = vxpose.xlu0.b32.cont [3/16] 0.0, 128
          %4434 = vxpose.xlu0.b32.cont [4/16] 0.0, 128
          %4435 = vxpose.xlu0.b32.cont [5/16] 0.0, 128
          %4436 = vxpose.xlu0.b32.cont [6/16] 0.0, 128
          %4437 = vxpose.xlu0.b32.cont [7/16] 0.0, 128
          %4438 = vxpose.xlu0.b32.cont [8/16] 0.0, 128
          %4439 = vxpose.xlu0.b32.cont [9/16] 0.0, 128
          %4440 = vxpose.xlu0.b32.cont [10/16] 0.0, 128
          %4441 = vxpose.xlu0.b32.cont [11/16] 0.0, 128
          %4442 = vxpose.xlu0.b32.cont [12/16] 0.0, 128
          %4443 = vxpose.xlu0.b32.cont [13/16] 0.0, 128
          %4444 = vxpose.xlu0.b32.cont [14/16] 0.0, 128
          %4445 = vxpose.xlu0.b32.cont [15/16] 0.0, 128
          %4446 = vxpose.xlu0.b32.end [16/16] 0.0, 128
          %v4447 = vpop.trf.xlu0
          %v4448 = vpop.trf.xlu0
          %v4449 = vpop.trf.xlu0
          %v4450 = vpop.trf.xlu0
          %v4451 = vpop.trf.xlu0
          %v4452 = vpop.trf.xlu0
          %v4453 = vpop.trf.xlu0
          %v4454 = vpop.trf.xlu0
          %v4455 = vpop.trf.xlu0
          %v4456 = vpop.trf.xlu0
          %v4457 = vpop.trf.xlu0
          %v4458 = vpop.trf.xlu0
          %v4459 = vpop.trf.xlu0
          %v4460 = vpop.trf.xlu0
          %v4461 = vpop.trf.xlu0
          %v4462 = vpop.trf.xlu0
          %v4465 = vunpack.c.l.s4 1966171168
          %v4466 = vunpack.c.0.s8 %v4465
          %v4467 = vlaneseq
          %v4468 = vshrl.u32 %v4467, 7
          %v4469 = vsub.s32 %v4466, %v4468
          %v4470 = vrot.slane %v4447, %v4469
          %v4471 = vcombine.high %v4470, %v4470
          %v4473 = vunpack.c.l.s4 1966171168
          %v4474 = vunpack.c.0.s8 %v4473
          %v4475 = vlaneseq
          %v4476 = vshrl.u32 %v4475, 7
          %v4477 = vsub.s32 %v4474, %v4476
          %v4478 = vrot.slane %v4470, %v4477
          %v4480 = vunpack.c.l.s4 1966171168
          %v4481 = vunpack.c.0.s8 %v4480
          %v4482 = vlaneseq
          %v4483 = vshrl.u32 %v4482, 7
          %v4484 = vsub.s32 %v4481, %v4483
          %v4485 = vrot.slane %v4471, %v4484
          %v4486 = vcombine.high %v4478, %v4478
          %v4487 = vcombine.high %v4485, %v4485
          %4492 = vst.msk [vmem:[#allocation2 + $0xe] sm:$0x1] %vm3581, %v4478
          %4493 = vst.msk [vmem:[#allocation2 + $0x1e] sm:$0x1] %vm3581, %v4485
          %4494 = vst.msk [vmem:[#allocation2 + $0x2e] sm:$0x1] %vm3581, %v4486
          %4495 = vst.msk [vmem:[#allocation2 + $0x3e] sm:$0x1] %vm3581, %v4487
          %4496 = vxpose.xlu0.b32.start [1/16] %v3512, 128
          %4497 = vxpose.xlu0.b32.cont [2/16] %v3517, 128
          %4498 = vxpose.xlu0.b32.cont [3/16] 0.0, 128
          %4499 = vxpose.xlu0.b32.cont [4/16] 0.0, 128
          %4500 = vxpose.xlu0.b32.cont [5/16] 0.0, 128
          %4501 = vxpose.xlu0.b32.cont [6/16] 0.0, 128
          %4502 = vxpose.xlu0.b32.cont [7/16] 0.0, 128
          %4503 = vxpose.xlu0.b32.cont [8/16] 0.0, 128
          %4504 = vxpose.xlu0.b32.cont [9/16] 0.0, 128
          %4505 = vxpose.xlu0.b32.cont [10/16] 0.0, 128
          %4506 = vxpose.xlu0.b32.cont [11/16] 0.0, 128
          %4507 = vxpose.xlu0.b32.cont [12/16] 0.0, 128
          %4508 = vxpose.xlu0.b32.cont [13/16] 0.0, 128
          %4509 = vxpose.xlu0.b32.cont [14/16] 0.0, 128
          %4510 = vxpose.xlu0.b32.cont [15/16] 0.0, 128
          %4511 = vxpose.xlu0.b32.end [16/16] 0.0, 128
          %v4512 = vpop.trf.xlu0
          %v4513 = vpop.trf.xlu0
          %v4514 = vpop.trf.xlu0
          %v4515 = vpop.trf.xlu0
          %v4516 = vpop.trf.xlu0
          %v4517 = vpop.trf.xlu0
          %v4518 = vpop.trf.xlu0
          %v4519 = vpop.trf.xlu0
          %v4520 = vpop.trf.xlu0
          %v4521 = vpop.trf.xlu0
          %v4522 = vpop.trf.xlu0
          %v4523 = vpop.trf.xlu0
          %v4524 = vpop.trf.xlu0
          %v4525 = vpop.trf.xlu0
          %v4526 = vpop.trf.xlu0
          %v4527 = vpop.trf.xlu0
          %v4530 = vunpack.c.l.s4 1966171168
          %v4531 = vunpack.c.0.s8 %v4530
          %v4532 = vlaneseq
          %v4533 = vshrl.u32 %v4532, 7
          %v4534 = vsub.s32 %v4531, %v4533
          %v4535 = vrot.slane %v4512, %v4534
          %v4536 = vcombine.high %v4535, %v4535
          %v4538 = vunpack.c.l.s4 1966171168
          %v4539 = vunpack.c.0.s8 %v4538
          %v4540 = vlaneseq
          %v4541 = vshrl.u32 %v4540, 7
          %v4542 = vsub.s32 %v4539, %v4541
          %v4543 = vrot.slane %v4535, %v4542
          %v4545 = vunpack.c.l.s4 1966171168
          %v4546 = vunpack.c.0.s8 %v4545
          %v4547 = vlaneseq
          %v4548 = vshrl.u32 %v4547, 7
          %v4549 = vsub.s32 %v4546, %v4548
          %v4550 = vrot.slane %v4536, %v4549
          %v4551 = vcombine.high %v4543, %v4543
          %v4552 = vcombine.high %v4550, %v4550
          %4557 = vst.msk [vmem:[#allocation2 + $0xf] sm:$0x1] %vm3581, %v4543
          %4558 = vst.msk [vmem:[#allocation2 + $0x1f] sm:$0x1] %vm3581, %v4550
          %4559 = vst.msk [vmem:[#allocation2 + $0x2f] sm:$0x1] %vm3581, %v4551
          %4560 = vst.msk [vmem:[#allocation2 + $0x3f] sm:$0x1] %vm3581, %v4552
        $region52: #{tpu_custom_call.1} parent=47 // pred_fallthru
          _
        %v4561 = vld [vmem:[%s311] sm:$0xff]
        %v4562 = vld [vmem:[%s311 + $0x8] sm:$0xff]
        %v4563 = vld [vmem:[%s311 + $0x10] sm:$0xff]
        %v4564 = vld [vmem:[%s311 + $0x18] sm:$0xff]
        %v4565 = vld [vmem:[%s6] sm:$0xff]
        %v4566 = vld [vmem:[%s6 + $0x8] sm:$0xff]
        %v4567 = vld [vmem:[#allocation2] sm:$0xff]
        %v4568 = vld [vmem:[#allocation2 + $0x8] sm:$0xff]
        %vm4569 = vcmask 130048
        %v4571 = vsel %vm4569, %v4561, 0
        %v4574 = vsel %vm4569, %v4562, 0
        %v4577 = vsel %vm4569, %v4563, 0
        %v4580 = vsel %vm4569, %v4564, 0
        %4582 = vmatprep.subr.mxu0 0.0
        %4583 = vmatpush1.msra.mxu0 %v4567
        %4584 = vmatprep.subr.mxu0 0.0
        %4585 = vmatpush1.msra.mxu0 %v4568
        %4586 = vmatprep.subr.mxu0 0.0
        %4587 = vmatpush1.msra.mxu0 0.0
        %4588 = vmatprep.subr.mxu0 0.0
        %4589 = vmatpush1.msra.mxu0 0.0
        %4590 = vmatprep.subr.mxu0 0.0
        %4591 = vmatpush1.msra.mxu0 0.0
        %4592 = vmatprep.subr.mxu0 0.0
        %4593 = vmatpush1.msra.mxu0 0.0
        %4594 = vmatprep.subr.mxu0 0.0
        %4595 = vmatpush1.msra.mxu0 0.0
        %4596 = vmatprep.subr.mxu0 0.0
        %4597 = vmatpush1.msra.mxu0 0.0
        %4598 = vmatprep.subr.mxu0 0.0
        %4599 = vmatpush1.msra.mxu0 0.0
        %4600 = vmatprep.subr.mxu0 0.0
        %4601 = vmatpush1.msra.mxu0 0.0
        %4602 = vmatprep.subr.mxu0 0.0
        %4603 = vmatpush1.msra.mxu0 0.0
        %4604 = vmatprep.subr.mxu0 0.0
        %4605 = vmatpush1.msra.mxu0 0.0
        %4606 = vmatprep.subr.mxu0 0.0
        %4607 = vmatpush1.msra.mxu0 0.0
        %4608 = vmatprep.subr.mxu0 0.0
        %4609 = vmatpush1.msra.mxu0 0.0
        %4610 = vmatprep.subr.mxu0 0.0
        %4611 = vmatpush1.msra.mxu0 0.0
        %4612 = vmatprep.subr.mxu0 0.0
        %4613 = vmatpush1.msra.mxu0 0.0
        %4614 = vmatprep.subr.mxu0 0.0
        %4615 = vmatpush1.msra.mxu0 0.0
        %4616 = vmatprep.subr.mxu0 0.0
        %4617 = vmatpush1.msra.mxu0 0.0
        %4618 = vmatprep.subr.mxu0 0.0
        %4619 = vmatpush1.msra.mxu0 0.0
        %4620 = vmatprep.subr.mxu0 0.0
        %4621 = vmatpush1.msra.mxu0 0.0
        %4622 = vmatprep.subr.mxu0 0.0
        %4623 = vmatpush1.msra.mxu0 0.0
        %4624 = vmatprep.subr.mxu0 0.0
        %4625 = vmatpush1.msra.mxu0 0.0
        %4626 = vmatprep.subr.mxu0 0.0
        %4627 = vmatpush1.msra.mxu0 0.0
        %4628 = vmatprep.subr.mxu0 0.0
        %4629 = vmatpush1.msra.mxu0 0.0
        %4630 = vmatprep.subr.mxu0 0.0
        %4631 = vmatpush1.msra.mxu0 0.0
        %4632 = vmatprep.subr.mxu0 0.0
        %4633 = vmatpush1.msra.mxu0 0.0
        %4634 = vmatprep.subr.mxu0 0.0
        %4635 = vmatpush1.msra.mxu0 0.0
        %4636 = vmatprep.subr.mxu0 0.0
        %4637 = vmatpush1.msra.mxu0 0.0
        %4638 = vmatprep.subr.mxu0 0.0
        %4639 = vmatpush1.msra.mxu0 0.0
        %4640 = vmatprep.subr.mxu0 0.0
        %4641 = vmatpush1.msra.mxu0 0.0
        %4642 = vmatprep.subr.mxu0 0.0
        %4643 = vmatpush1.msra.mxu0 0.0
        %4644 = vmatprep.subr.mxu0 0.0
        %4645 = vmatpush1.msra.mxu0 0.0
        %4646 = vmatprep.mubr.f32.mxu0 0.0
        %4647 = vmatmul.mubr.f32.gmra.mrb[0].mxu0 %v4571
        %v4648 = vpop.f32.mrb[0].mxu0
        %v4649 = vadd.f32 0.0, %v4648
        %v4650 = vpop.f32.mrb[0].mxu0
        %4651 = vmatprep.mubr.f32.mxu0 0.0
        %4652 = vmatmul.mubr.f32.gmra.mrb[0].mxu0 %v4574
        %v4653 = vpop.f32.mrb[0].mxu0
        %v4654 = vadd.f32 0.0, %v4653
        %v4655 = vpop.f32.mrb[0].mxu0
        %4656 = vmatprep.mubr.f32.mxu0 0.0
        %4657 = vmatmul.mubr.f32.gmra.mrb[0].mxu0 %v4577
        %v4658 = vpop.f32.mrb[0].mxu0
        %v4659 = vadd.f32 0.0, %v4658
        %v4660 = vpop.f32.mrb[0].mxu0
        %4661 = vmatprep.mubr.f32.mxu0 0.0
        %4662 = vmatmul.mubr.f32.gmra.mrb[0].mxu0 %v4580
        %v4663 = vpop.f32.mrb[0].mxu0
        %v4664 = vadd.f32 0.0, %v4663
        %v4665 = vpop.f32.mrb[0].mxu0
        %4666 = vdwg.mxu0
        %v4668 = vsel %vm4569, %v4649, 0
        %v4671 = vsel %vm4569, %v4654, 0
        %v4674 = vsel %vm4569, %v4659, 0
        %v4677 = vsel %vm4569, %v4664, 0
        %4679 = vmatprep.subr.mxu0 0.0
        %4680 = vmatpush1.msra.mxu0 %v4565
        %4681 = vmatprep.subr.mxu0 0.0
        %4682 = vmatpush1.msra.mxu0 %v4566
        %4683 = vmatprep.subr.mxu0 0.0
        %4684 = vmatpush1.msra.mxu0 0.0
        %4685 = vmatprep.subr.mxu0 0.0
        %4686 = vmatpush1.msra.mxu0 0.0
        %4687 = vmatprep.subr.mxu0 0.0
        %4688 = vmatpush1.msra.mxu0 0.0
        %4689 = vmatprep.subr.mxu0 0.0
        %4690 = vmatpush1.msra.mxu0 0.0
        %4691 = vmatprep.subr.mxu0 0.0
        %4692 = vmatpush1.msra.mxu0 0.0
        %4693 = vmatprep.subr.mxu0 0.0
        %4694 = vmatpush1.msra.mxu0 0.0
        %4695 = vmatprep.subr.mxu0 0.0
        %4696 = vmatpush1.msra.mxu0 0.0
        %4697 = vmatprep.subr.mxu0 0.0
        %4698 = vmatpush1.msra.mxu0 0.0
        %4699 = vmatprep.subr.mxu0 0.0
        %4700 = vmatpush1.msra.mxu0 0.0
        %4701 = vmatprep.subr.mxu0 0.0
        %4702 = vmatpush1.msra.mxu0 0.0
        %4703 = vmatprep.subr.mxu0 0.0
        %4704 = vmatpush1.msra.mxu0 0.0
        %4705 = vmatprep.subr.mxu0 0.0
        %4706 = vmatpush1.msra.mxu0 0.0
        %4707 = vmatprep.subr.mxu0 0.0
        %4708 = vmatpush1.msra.mxu0 0.0
        %4709 = vmatprep.subr.mxu0 0.0
        %4710 = vmatpush1.msra.mxu0 0.0
        %4711 = vmatprep.subr.mxu0 0.0
        %4712 = vmatpush1.msra.mxu0 0.0
        %4713 = vmatprep.subr.mxu0 0.0
        %4714 = vmatpush1.msra.mxu0 0.0
        %4715 = vmatprep.subr.mxu0 0.0
        %4716 = vmatpush1.msra.mxu0 0.0
        %4717 = vmatprep.subr.mxu0 0.0
        %4718 = vmatpush1.msra.mxu0 0.0
        %4719 = vmatprep.subr.mxu0 0.0
        %4720 = vmatpush1.msra.mxu0 0.0
        %4721 = vmatprep.subr.mxu0 0.0
        %4722 = vmatpush1.msra.mxu0 0.0
        %4723 = vmatprep.subr.mxu0 0.0
        %4724 = vmatpush1.msra.mxu0 0.0
        %4725 = vmatprep.subr.mxu0 0.0
        %4726 = vmatpush1.msra.mxu0 0.0
        %4727 = vmatprep.subr.mxu0 0.0
        %4728 = vmatpush1.msra.mxu0 0.0
        %4729 = vmatprep.subr.mxu0 0.0
        %4730 = vmatpush1.msra.mxu0 0.0
        %4731 = vmatprep.subr.mxu0 0.0
        %4732 = vmatpush1.msra.mxu0 0.0
        %4733 = vmatprep.subr.mxu0 0.0
        %4734 = vmatpush1.msra.mxu0 0.0
        %4735 = vmatprep.subr.mxu0 0.0
        %4736 = vmatpush1.msra.mxu0 0.0
        %4737 = vmatprep.subr.mxu0 0.0
        %4738 = vmatpush1.msra.mxu0 0.0
        %4739 = vmatprep.subr.mxu0 0.0
        %4740 = vmatpush1.msra.mxu0 0.0
        %4741 = vmatprep.subr.mxu0 0.0
        %4742 = vmatpush1.msra.mxu0 0.0
        %4743 = vmatprep.mubr.f32.mxu0 0.0
        %4744 = vmatmul.mubr.f32.gmra.mrb[0].mxu0 %v4668
        %v4745 = vpop.f32.mrb[0].mxu0
        %v4746 = vadd.f32 0.0, %v4745
        %v4747 = vpop.f32.mrb[0].mxu0
        %4748 = vmatprep.mubr.f32.mxu0 0.0
        %4749 = vmatmul.mubr.f32.gmra.mrb[0].mxu0 %v4671
        %v4750 = vpop.f32.mrb[0].mxu0
        %v4751 = vadd.f32 0.0, %v4750
        %v4752 = vpop.f32.mrb[0].mxu0
        %4753 = vmatprep.mubr.f32.mxu0 0.0
        %4754 = vmatmul.mubr.f32.gmra.mrb[0].mxu0 %v4674
        %v4755 = vpop.f32.mrb[0].mxu0
        %v4756 = vadd.f32 0.0, %v4755
        %v4757 = vpop.f32.mrb[0].mxu0
        %4758 = vmatprep.mubr.f32.mxu0 0.0
        %4759 = vmatmul.mubr.f32.gmra.mrb[0].mxu0 %v4677
        %v4760 = vpop.f32.mrb[0].mxu0
        %v4761 = vadd.f32 0.0, %v4760
        %v4762 = vpop.f32.mrb[0].mxu0
        %4763 = vdwg.mxu0
        %vm4764 = vcmask 523264
        %4765 = vst.msk [vmem:[%s301] sm:$0xff] %vm4764, %v4746
        %4766 = vst.msk [vmem:[%s301 + $0x8] sm:$0xff] %vm4764, %v4751
        %4767 = vst.msk [vmem:[%s301 + $0x10] sm:$0xff] %vm4764, %v4756
        %4768 = vst.msk [vmem:[%s301 + $0x18] sm:$0xff] %vm4764, %v4761
        %s4769 = scalar_lea.vmem [#allocation2], 16
        %v4770 = vld [vmem:[%s4769] sm:$0xff]
        %v4771 = vld [vmem:[%s4769 + $0x8] sm:$0xff]
        %4772 = vmatprep.subr.mxu0 0.0
        %4773 = vmatpush1.msra.mxu0 %v4770
        %4774 = vmatprep.subr.mxu0 0.0
        %4775 = vmatpush1.msra.mxu0 %v4771
        %4776 = vmatprep.subr.mxu0 0.0
        %4777 = vmatpush1.msra.mxu0 0.0
        %4778 = vmatprep.subr.mxu0 0.0
        %4779 = vmatpush1.msra.mxu0 0.0
        %4780 = vmatprep.subr.mxu0 0.0
        %4781 = vmatpush1.msra.mxu0 0.0
        %4782 = vmatprep.subr.mxu0 0.0
        %4783 = vmatpush1.msra.mxu0 0.0
        %4784 = vmatprep.subr.mxu0 0.0
        %4785 = vmatpush1.msra.mxu0 0.0
        %4786 = vmatprep.subr.mxu0 0.0
        %4787 = vmatpush1.msra.mxu0 0.0
        %4788 = vmatprep.subr.mxu0 0.0
        %4789 = vmatpush1.msra.mxu0 0.0
        %4790 = vmatprep.subr.mxu0 0.0
        %4791 = vmatpush1.msra.mxu0 0.0
        %4792 = vmatprep.subr.mxu0 0.0
        %4793 = vmatpush1.msra.mxu0 0.0
        %4794 = vmatprep.subr.mxu0 0.0
        %4795 = vmatpush1.msra.mxu0 0.0
        %4796 = vmatprep.subr.mxu0 0.0
        %4797 = vmatpush1.msra.mxu0 0.0
        %4798 = vmatprep.subr.mxu0 0.0
        %4799 = vmatpush1.msra.mxu0 0.0
        %4800 = vmatprep.subr.mxu0 0.0
        %4801 = vmatpush1.msra.mxu0 0.0
        %4802 = vmatprep.subr.mxu0 0.0
        %4803 = vmatpush1.msra.mxu0 0.0
        %4804 = vmatprep.subr.mxu0 0.0
        %4805 = vmatpush1.msra.mxu0 0.0
        %4806 = vmatprep.subr.mxu0 0.0
        %4807 = vmatpush1.msra.mxu0 0.0
        %4808 = vmatprep.subr.mxu0 0.0
        %4809 = vmatpush1.msra.mxu0 0.0
        %4810 = vmatprep.subr.mxu0 0.0
        %4811 = vmatpush1.msra.mxu0 0.0
        %4812 = vmatprep.subr.mxu0 0.0
        %4813 = vmatpush1.msra.mxu0 0.0
        %4814 = vmatprep.subr.mxu0 0.0
        %4815 = vmatpush1.msra.mxu0 0.0
        %4816 = vmatprep.subr.mxu0 0.0
        %4817 = vmatpush1.msra.mxu0 0.0
        %4818 = vmatprep.subr.mxu0 0.0
        %4819 = vmatpush1.msra.mxu0 0.0
        %4820 = vmatprep.subr.mxu0 0.0
        %4821 = vmatpush1.msra.mxu0 0.0
        %4822 = vmatprep.subr.mxu0 0.0
        %4823 = vmatpush1.msra.mxu0 0.0
        %4824 = vmatprep.subr.mxu0 0.0
        %4825 = vmatpush1.msra.mxu0 0.0
        %4826 = vmatprep.subr.mxu0 0.0
        %4827 = vmatpush1.msra.mxu0 0.0
        %4828 = vmatprep.subr.mxu0 0.0
        %4829 = vmatpush1.msra.mxu0 0.0
        %4830 = vmatprep.subr.mxu0 0.0
        %4831 = vmatpush1.msra.mxu0 0.0
        %4832 = vmatprep.subr.mxu0 0.0
        %4833 = vmatpush1.msra.mxu0 0.0
        %4834 = vmatprep.subr.mxu0 0.0
        %4835 = vmatpush1.msra.mxu0 0.0
        %4836 = vmatprep.mubr.f32.mxu0 0.0
        %4837 = vmatmul.mubr.f32.gmra.mrb[0].mxu0 %v4571
        %v4838 = vpop.f32.mrb[0].mxu0
        %v4839 = vadd.f32 0.0, %v4838
        %v4840 = vpop.f32.mrb[0].mxu0
        %4841 = vmatprep.mubr.f32.mxu0 0.0
        %4842 = vmatmul.mubr.f32.gmra.mrb[0].mxu0 %v4574
        %v4843 = vpop.f32.mrb[0].mxu0
        %v4844 = vadd.f32 0.0, %v4843
        %v4845 = vpop.f32.mrb[0].mxu0
        %4846 = vmatprep.mubr.f32.mxu0 0.0
        %4847 = vmatmul.mubr.f32.gmra.mrb[0].mxu0 %v4577
        %v4848 = vpop.f32.mrb[0].mxu0
        %v4849 = vadd.f32 0.0, %v4848
        %v4850 = vpop.f32.mrb[0].mxu0
        %4851 = vmatprep.mubr.f32.mxu0 0.0
        %4852 = vmatmul.mubr.f32.gmra.mrb[0].mxu0 %v4580
        %v4853 = vpop.f32.mrb[0].mxu0
        %v4854 = vadd.f32 0.0, %v4853
        %v4855 = vpop.f32.mrb[0].mxu0
        %4856 = vdwg.mxu0
        %v4858 = vsel %vm4569, %v4839, 0
        %v4861 = vsel %vm4569, %v4844, 0
        %v4864 = vsel %vm4569, %v4849, 0
        %v4867 = vsel %vm4569, %v4854, 0
        %4869 = vmatprep.subr.mxu0 0.0
        %4870 = vmatpush1.msra.mxu0 %v4565
        %4871 = vmatprep.subr.mxu0 0.0
        %4872 = vmatpush1.msra.mxu0 %v4566
        %4873 = vmatprep.subr.mxu0 0.0
        %4874 = vmatpush1.msra.mxu0 0.0
        %4875 = vmatprep.subr.mxu0 0.0
        %4876 = vmatpush1.msra.mxu0 0.0
        %4877 = vmatprep.subr.mxu0 0.0
        %4878 = vmatpush1.msra.mxu0 0.0
        %4879 = vmatprep.subr.mxu0 0.0
        %4880 = vmatpush1.msra.mxu0 0.0
        %4881 = vmatprep.subr.mxu0 0.0
        %4882 = vmatpush1.msra.mxu0 0.0
        %4883 = vmatprep.subr.mxu0 0.0
        %4884 = vmatpush1.msra.mxu0 0.0
        %4885 = vmatprep.subr.mxu0 0.0
        %4886 = vmatpush1.msra.mxu0 0.0
        %4887 = vmatprep.subr.mxu0 0.0
        %4888 = vmatpush1.msra.mxu0 0.0
        %4889 = vmatprep.subr.mxu0 0.0
        %4890 = vmatpush1.msra.mxu0 0.0
        %4891 = vmatprep.subr.mxu0 0.0
        %4892 = vmatpush1.msra.mxu0 0.0
        %4893 = vmatprep.subr.mxu0 0.0
        %4894 = vmatpush1.msra.mxu0 0.0
        %4895 = vmatprep.subr.mxu0 0.0
        %4896 = vmatpush1.msra.mxu0 0.0
        %4897 = vmatprep.subr.mxu0 0.0
        %4898 = vmatpush1.msra.mxu0 0.0
        %4899 = vmatprep.subr.mxu0 0.0
        %4900 = vmatpush1.msra.mxu0 0.0
        %4901 = vmatprep.subr.mxu0 0.0
        %4902 = vmatpush1.msra.mxu0 0.0
        %4903 = vmatprep.subr.mxu0 0.0
        %4904 = vmatpush1.msra.mxu0 0.0
        %4905 = vmatprep.subr.mxu0 0.0
        %4906 = vmatpush1.msra.mxu0 0.0
        %4907 = vmatprep.subr.mxu0 0.0
        %4908 = vmatpush1.msra.mxu0 0.0
        %4909 = vmatprep.subr.mxu0 0.0
        %4910 = vmatpush1.msra.mxu0 0.0
        %4911 = vmatprep.subr.mxu0 0.0
        %4912 = vmatpush1.msra.mxu0 0.0
        %4913 = vmatprep.subr.mxu0 0.0
        %4914 = vmatpush1.msra.mxu0 0.0
        %4915 = vmatprep.subr.mxu0 0.0
        %4916 = vmatpush1.msra.mxu0 0.0
        %4917 = vmatprep.subr.mxu0 0.0
        %4918 = vmatpush1.msra.mxu0 0.0
        %4919 = vmatprep.subr.mxu0 0.0
        %4920 = vmatpush1.msra.mxu0 0.0
        %4921 = vmatprep.subr.mxu0 0.0
        %4922 = vmatpush1.msra.mxu0 0.0
        %4923 = vmatprep.subr.mxu0 0.0
        %4924 = vmatpush1.msra.mxu0 0.0
        %4925 = vmatprep.subr.mxu0 0.0
        %4926 = vmatpush1.msra.mxu0 0.0
        %4927 = vmatprep.subr.mxu0 0.0
        %4928 = vmatpush1.msra.mxu0 0.0
        %4929 = vmatprep.subr.mxu0 0.0
        %4930 = vmatpush1.msra.mxu0 0.0
        %4931 = vmatprep.subr.mxu0 0.0
        %4932 = vmatpush1.msra.mxu0 0.0
        %4933 = vmatprep.mubr.f32.mxu0 0.0
        %4934 = vmatmul.mubr.f32.gmra.mrb[0].mxu0 %v4858
        %v4935 = vpop.f32.mrb[0].mxu0
        %v4936 = vadd.f32 0.0, %v4935
        %v4937 = vpop.f32.mrb[0].mxu0
        %4938 = vmatprep.mubr.f32.mxu0 0.0
        %4939 = vmatmul.mubr.f32.gmra.mrb[0].mxu0 %v4861
        %v4940 = vpop.f32.mrb[0].mxu0
        %v4941 = vadd.f32 0.0, %v4940
        %v4942 = vpop.f32.mrb[0].mxu0
        %4943 = vmatprep.mubr.f32.mxu0 0.0
        %4944 = vmatmul.mubr.f32.gmra.mrb[0].mxu0 %v4864
        %v4945 = vpop.f32.mrb[0].mxu0
        %v4946 = vadd.f32 0.0, %v4945
        %v4947 = vpop.f32.mrb[0].mxu0
        %4948 = vmatprep.mubr.f32.mxu0 0.0
        %4949 = vmatmul.mubr.f32.gmra.mrb[0].mxu0 %v4867
        %v4950 = vpop.f32.mrb[0].mxu0
        %v4951 = vadd.f32 0.0, %v4950
        %v4952 = vpop.f32.mrb[0].mxu0
        %4953 = vdwg.mxu0
        %s4954 = scalar_lea.vmem %s301, 32 [#allocation3]
        %4955 = vst.msk [vmem:[%s4954] sm:$0xff] %vm4764, %v4936
        %4956 = vst.msk [vmem:[%s4954 + $0x8] sm:$0xff] %vm4764, %v4941
        %4957 = vst.msk [vmem:[%s4954 + $0x10] sm:$0xff] %vm4764, %v4946
        %4958 = vst.msk [vmem:[%s4954 + $0x18] sm:$0xff] %vm4764, %v4951
        %s4959 = scalar_lea.vmem [#allocation2], 32
        %v4960 = vld [vmem:[%s4959] sm:$0xff]
        %v4961 = vld [vmem:[%s4959 + $0x8] sm:$0xff]
        %4962 = vmatprep.subr.mxu0 0.0
        %4963 = vmatpush1.msra.mxu0 %v4960
        %4964 = vmatprep.subr.mxu0 0.0
        %4965 = vmatpush1.msra.mxu0 %v4961
        %4966 = vmatprep.subr.mxu0 0.0
        %4967 = vmatpush1.msra.mxu0 0.0
        %4968 = vmatprep.subr.mxu0 0.0
        %4969 = vmatpush1.msra.mxu0 0.0
        %4970 = vmatprep.subr.mxu0 0.0
        %4971 = vmatpush1.msra.mxu0 0.0
        %4972 = vmatprep.subr.mxu0 0.0
        %4973 = vmatpush1.msra.mxu0 0.0
        %4974 = vmatprep.subr.mxu0 0.0
        %4975 = vmatpush1.msra.mxu0 0.0
        %4976 = vmatprep.subr.mxu0 0.0
        %4977 = vmatpush1.msra.mxu0 0.0
        %4978 = vmatprep.subr.mxu0 0.0
        %4979 = vmatpush1.msra.mxu0 0.0
        %4980 = vmatprep.subr.mxu0 0.0
        %4981 = vmatpush1.msra.mxu0 0.0
        %4982 = vmatprep.subr.mxu0 0.0
        %4983 = vmatpush1.msra.mxu0 0.0
        %4984 = vmatprep.subr.mxu0 0.0
        %4985 = vmatpush1.msra.mxu0 0.0
        %4986 = vmatprep.subr.mxu0 0.0
        %4987 = vmatpush1.msra.mxu0 0.0
        %4988 = vmatprep.subr.mxu0 0.0
        %4989 = vmatpush1.msra.mxu0 0.0
        %4990 = vmatprep.subr.mxu0 0.0
        %4991 = vmatpush1.msra.mxu0 0.0
        %4992 = vmatprep.subr.mxu0 0.0
        %4993 = vmatpush1.msra.mxu0 0.0
        %4994 = vmatprep.subr.mxu0 0.0
        %4995 = vmatpush1.msra.mxu0 0.0
        %4996 = vmatprep.subr.mxu0 0.0
        %4997 = vmatpush1.msra.mxu0 0.0
        %4998 = vmatprep.subr.mxu0 0.0
        %4999 = vmatpush1.msra.mxu0 0.0
        %5000 = vmatprep.subr.mxu0 0.0
        %5001 = vmatpush1.msra.mxu0 0.0
        %5002 = vmatprep.subr.mxu0 0.0
        %5003 = vmatpush1.msra.mxu0 0.0
        %5004 = vmatprep.subr.mxu0 0.0
        %5005 = vmatpush1.msra.mxu0 0.0
        %5006 = vmatprep.subr.mxu0 0.0
        %5007 = vmatpush1.msra.mxu0 0.0
        %5008 = vmatprep.subr.mxu0 0.0
        %5009 = vmatpush1.msra.mxu0 0.0
        %5010 = vmatprep.subr.mxu0 0.0
        %5011 = vmatpush1.msra.mxu0 0.0
        %5012 = vmatprep.subr.mxu0 0.0
        %5013 = vmatpush1.msra.mxu0 0.0
        %5014 = vmatprep.subr.mxu0 0.0
        %5015 = vmatpush1.msra.mxu0 0.0
        %5016 = vmatprep.subr.mxu0 0.0
        %5017 = vmatpush1.msra.mxu0 0.0
        %5018 = vmatprep.subr.mxu0 0.0
        %5019 = vmatpush1.msra.mxu0 0.0
        %5020 = vmatprep.subr.mxu0 0.0
        %5021 = vmatpush1.msra.mxu0 0.0
        %5022 = vmatprep.subr.mxu0 0.0
        %5023 = vmatpush1.msra.mxu0 0.0
        %5024 = vmatprep.subr.mxu0 0.0
        %5025 = vmatpush1.msra.mxu0 0.0
        %5026 = vmatprep.mubr.f32.mxu0 0.0
        %5027 = vmatmul.mubr.f32.gmra.mrb[0].mxu0 %v4571
        %v5028 = vpop.f32.mrb[0].mxu0
        %v5029 = vadd.f32 0.0, %v5028
        %v5030 = vpop.f32.mrb[0].mxu0
        %5031 = vmatprep.mubr.f32.mxu0 0.0
        %5032 = vmatmul.mubr.f32.gmra.mrb[0].mxu0 %v4574
        %v5033 = vpop.f32.mrb[0].mxu0
        %v5034 = vadd.f32 0.0, %v5033
        %v5035 = vpop.f32.mrb[0].mxu0
        %5036 = vmatprep.mubr.f32.mxu0 0.0
        %5037 = vmatmul.mubr.f32.gmra.mrb[0].mxu0 %v4577
        %v5038 = vpop.f32.mrb[0].mxu0
        %v5039 = vadd.f32 0.0, %v5038
        %v5040 = vpop.f32.mrb[0].mxu0
        %5041 = vmatprep.mubr.f32.mxu0 0.0
        %5042 = vmatmul.mubr.f32.gmra.mrb[0].mxu0 %v4580
        %v5043 = vpop.f32.mrb[0].mxu0
        %v5044 = vadd.f32 0.0, %v5043
        %v5045 = vpop.f32.mrb[0].mxu0
        %5046 = vdwg.mxu0
        %v5048 = vsel %vm4569, %v5029, 0
        %v5051 = vsel %vm4569, %v5034, 0
        %v5054 = vsel %vm4569, %v5039, 0
        %v5057 = vsel %vm4569, %v5044, 0
        %5059 = vmatprep.subr.mxu0 0.0
        %5060 = vmatpush1.msra.mxu0 %v4565
        %5061 = vmatprep.subr.mxu0 0.0
        %5062 = vmatpush1.msra.mxu0 %v4566
        %5063 = vmatprep.subr.mxu0 0.0
        %5064 = vmatpush1.msra.mxu0 0.0
        %5065 = vmatprep.subr.mxu0 0.0
        %5066 = vmatpush1.msra.mxu0 0.0
        %5067 = vmatprep.subr.mxu0 0.0
        %5068 = vmatpush1.msra.mxu0 0.0
        %5069 = vmatprep.subr.mxu0 0.0
        %5070 = vmatpush1.msra.mxu0 0.0
        %5071 = vmatprep.subr.mxu0 0.0
        %5072 = vmatpush1.msra.mxu0 0.0
        %5073 = vmatprep.subr.mxu0 0.0
        %5074 = vmatpush1.msra.mxu0 0.0
        %5075 = vmatprep.subr.mxu0 0.0
        %5076 = vmatpush1.msra.mxu0 0.0
        %5077 = vmatprep.subr.mxu0 0.0
        %5078 = vmatpush1.msra.mxu0 0.0
        %5079 = vmatprep.subr.mxu0 0.0
        %5080 = vmatpush1.msra.mxu0 0.0
        %5081 = vmatprep.subr.mxu0 0.0
        %5082 = vmatpush1.msra.mxu0 0.0
        %5083 = vmatprep.subr.mxu0 0.0
        %5084 = vmatpush1.msra.mxu0 0.0
        %5085 = vmatprep.subr.mxu0 0.0
        %5086 = vmatpush1.msra.mxu0 0.0
        %5087 = vmatprep.subr.mxu0 0.0
        %5088 = vmatpush1.msra.mxu0 0.0
        %5089 = vmatprep.subr.mxu0 0.0
        %5090 = vmatpush1.msra.mxu0 0.0
        %5091 = vmatprep.subr.mxu0 0.0
        %5092 = vmatpush1.msra.mxu0 0.0
        %5093 = vmatprep.subr.mxu0 0.0
        %5094 = vmatpush1.msra.mxu0 0.0
        %5095 = vmatprep.subr.mxu0 0.0
        %5096 = vmatpush1.msra.mxu0 0.0
        %5097 = vmatprep.subr.mxu0 0.0
        %5098 = vmatpush1.msra.mxu0 0.0
        %5099 = vmatprep.subr.mxu0 0.0
        %5100 = vmatpush1.msra.mxu0 0.0
        %5101 = vmatprep.subr.mxu0 0.0
        %5102 = vmatpush1.msra.mxu0 0.0
        %5103 = vmatprep.subr.mxu0 0.0
        %5104 = vmatpush1.msra.mxu0 0.0
        %5105 = vmatprep.subr.mxu0 0.0
        %5106 = vmatpush1.msra.mxu0 0.0
        %5107 = vmatprep.subr.mxu0 0.0
        %5108 = vmatpush1.msra.mxu0 0.0
        %5109 = vmatprep.subr.mxu0 0.0
        %5110 = vmatpush1.msra.mxu0 0.0
        %5111 = vmatprep.subr.mxu0 0.0
        %5112 = vmatpush1.msra.mxu0 0.0
        %5113 = vmatprep.subr.mxu0 0.0
        %5114 = vmatpush1.msra.mxu0 0.0
        %5115 = vmatprep.subr.mxu0 0.0
        %5116 = vmatpush1.msra.mxu0 0.0
        %5117 = vmatprep.subr.mxu0 0.0
        %5118 = vmatpush1.msra.mxu0 0.0
        %5119 = vmatprep.subr.mxu0 0.0
        %5120 = vmatpush1.msra.mxu0 0.0
        %5121 = vmatprep.subr.mxu0 0.0
        %5122 = vmatpush1.msra.mxu0 0.0
        %5123 = vmatprep.mubr.f32.mxu0 0.0
        %5124 = vmatmul.mubr.f32.gmra.mrb[0].mxu0 %v5048
        %v5125 = vpop.f32.mrb[0].mxu0
        %v5126 = vadd.f32 0.0, %v5125
        %v5127 = vpop.f32.mrb[0].mxu0
        %5128 = vmatprep.mubr.f32.mxu0 0.0
        %5129 = vmatmul.mubr.f32.gmra.mrb[0].mxu0 %v5051
        %v5130 = vpop.f32.mrb[0].mxu0
        %v5131 = vadd.f32 0.0, %v5130
        %v5132 = vpop.f32.mrb[0].mxu0
        %5133 = vmatprep.mubr.f32.mxu0 0.0
        %5134 = vmatmul.mubr.f32.gmra.mrb[0].mxu0 %v5054
        %v5135 = vpop.f32.mrb[0].mxu0
        %v5136 = vadd.f32 0.0, %v5135
        %v5137 = vpop.f32.mrb[0].mxu0
        %5138 = vmatprep.mubr.f32.mxu0 0.0
        %5139 = vmatmul.mubr.f32.gmra.mrb[0].mxu0 %v5057
        %v5140 = vpop.f32.mrb[0].mxu0
        %v5141 = vadd.f32 0.0, %v5140
        %v5142 = vpop.f32.mrb[0].mxu0
        %5143 = vdwg.mxu0
        %s5144 = scalar_lea.vmem %s301, 64 [#allocation3]
        %5145 = vst.msk [vmem:[%s5144] sm:$0xff] %vm4764, %v5126
        %5146 = vst.msk [vmem:[%s5144 + $0x8] sm:$0xff] %vm4764, %v5131
        %5147 = vst.msk [vmem:[%s5144 + $0x10] sm:$0xff] %vm4764, %v5136
        %5148 = vst.msk [vmem:[%s5144 + $0x18] sm:$0xff] %vm4764, %v5141
        %s5149 = scalar_lea.vmem [#allocation2], 48
        %v5150 = vld [vmem:[%s5149] sm:$0xff]
        %v5151 = vld [vmem:[%s5149 + $0x8] sm:$0xff]
        %5152 = vmatprep.subr.mxu0 0.0
        %5153 = vmatpush1.msra.mxu0 %v5150
        %5154 = vmatprep.subr.mxu0 0.0
        %5155 = vmatpush1.msra.mxu0 %v5151
        %5156 = vmatprep.subr.mxu0 0.0
        %5157 = vmatpush1.msra.mxu0 0.0
        %5158 = vmatprep.subr.mxu0 0.0
        %5159 = vmatpush1.msra.mxu0 0.0
        %5160 = vmatprep.subr.mxu0 0.0
        %5161 = vmatpush1.msra.mxu0 0.0
        %5162 = vmatprep.subr.mxu0 0.0
        %5163 = vmatpush1.msra.mxu0 0.0
        %5164 = vmatprep.subr.mxu0 0.0
        %5165 = vmatpush1.msra.mxu0 0.0
        %5166 = vmatprep.subr.mxu0 0.0
        %5167 = vmatpush1.msra.mxu0 0.0
        %5168 = vmatprep.subr.mxu0 0.0
        %5169 = vmatpush1.msra.mxu0 0.0
        %5170 = vmatprep.subr.mxu0 0.0
        %5171 = vmatpush1.msra.mxu0 0.0
        %5172 = vmatprep.subr.mxu0 0.0
        %5173 = vmatpush1.msra.mxu0 0.0
        %5174 = vmatprep.subr.mxu0 0.0
        %5175 = vmatpush1.msra.mxu0 0.0
        %5176 = vmatprep.subr.mxu0 0.0
        %5177 = vmatpush1.msra.mxu0 0.0
        %5178 = vmatprep.subr.mxu0 0.0
        %5179 = vmatpush1.msra.mxu0 0.0
        %5180 = vmatprep.subr.mxu0 0.0
        %5181 = vmatpush1.msra.mxu0 0.0
        %5182 = vmatprep.subr.mxu0 0.0
        %5183 = vmatpush1.msra.mxu0 0.0
        %5184 = vmatprep.subr.mxu0 0.0
        %5185 = vmatpush1.msra.mxu0 0.0
        %5186 = vmatprep.subr.mxu0 0.0
        %5187 = vmatpush1.msra.mxu0 0.0
        %5188 = vmatprep.subr.mxu0 0.0
        %5189 = vmatpush1.msra.mxu0 0.0
        %5190 = vmatprep.subr.mxu0 0.0
        %5191 = vmatpush1.msra.mxu0 0.0
        %5192 = vmatprep.subr.mxu0 0.0
        %5193 = vmatpush1.msra.mxu0 0.0
        %5194 = vmatprep.subr.mxu0 0.0
        %5195 = vmatpush1.msra.mxu0 0.0
        %5196 = vmatprep.subr.mxu0 0.0
        %5197 = vmatpush1.msra.mxu0 0.0
        %5198 = vmatprep.subr.mxu0 0.0
        %5199 = vmatpush1.msra.mxu0 0.0
        %5200 = vmatprep.subr.mxu0 0.0
        %5201 = vmatpush1.msra.mxu0 0.0
        %5202 = vmatprep.subr.mxu0 0.0
        %5203 = vmatpush1.msra.mxu0 0.0
        %5204 = vmatprep.subr.mxu0 0.0
        %5205 = vmatpush1.msra.mxu0 0.0
        %5206 = vmatprep.subr.mxu0 0.0
        %5207 = vmatpush1.msra.mxu0 0.0
        %5208 = vmatprep.subr.mxu0 0.0
        %5209 = vmatpush1.msra.mxu0 0.0
        %5210 = vmatprep.subr.mxu0 0.0
        %5211 = vmatpush1.msra.mxu0 0.0
        %5212 = vmatprep.subr.mxu0 0.0
        %5213 = vmatpush1.msra.mxu0 0.0
        %5214 = vmatprep.subr.mxu0 0.0
        %5215 = vmatpush1.msra.mxu0 0.0
        %5216 = vmatprep.mubr.f32.mxu0 0.0
        %5217 = vmatmul.mubr.f32.gmra.mrb[0].mxu0 %v4571
        %v5218 = vpop.f32.mrb[0].mxu0
        %v5219 = vadd.f32 0.0, %v5218
        %v5220 = vpop.f32.mrb[0].mxu0
        %5221 = vmatprep.mubr.f32.mxu0 0.0
        %5222 = vmatmul.mubr.f32.gmra.mrb[0].mxu0 %v4574
        %v5223 = vpop.f32.mrb[0].mxu0
        %v5224 = vadd.f32 0.0, %v5223
        %v5225 = vpop.f32.mrb[0].mxu0
        %5226 = vmatprep.mubr.f32.mxu0 0.0
        %5227 = vmatmul.mubr.f32.gmra.mrb[0].mxu0 %v4577
        %v5228 = vpop.f32.mrb[0].mxu0
        %v5229 = vadd.f32 0.0, %v5228
        %v5230 = vpop.f32.mrb[0].mxu0
        %5231 = vmatprep.mubr.f32.mxu0 0.0
        %5232 = vmatmul.mubr.f32.gmra.mrb[0].mxu0 %v4580
        %v5233 = vpop.f32.mrb[0].mxu0
        %v5234 = vadd.f32 0.0, %v5233
        %v5235 = vpop.f32.mrb[0].mxu0
        %5236 = vdwg.mxu0
        %v5238 = vsel %vm4569, %v5219, 0
        %v5241 = vsel %vm4569, %v5224, 0
        %v5244 = vsel %vm4569, %v5229, 0
        %v5247 = vsel %vm4569, %v5234, 0
        %5249 = vmatprep.subr.mxu0 0.0
        %5250 = vmatpush1.msra.mxu0 %v4565
        %5251 = vmatprep.subr.mxu0 0.0
        %5252 = vmatpush1.msra.mxu0 %v4566
        %5253 = vmatprep.subr.mxu0 0.0
        %5254 = vmatpush1.msra.mxu0 0.0
        %5255 = vmatprep.subr.mxu0 0.0
        %5256 = vmatpush1.msra.mxu0 0.0
        %5257 = vmatprep.subr.mxu0 0.0
        %5258 = vmatpush1.msra.mxu0 0.0
        %5259 = vmatprep.subr.mxu0 0.0
        %5260 = vmatpush1.msra.mxu0 0.0
        %5261 = vmatprep.subr.mxu0 0.0
        %5262 = vmatpush1.msra.mxu0 0.0
        %5263 = vmatprep.subr.mxu0 0.0
        %5264 = vmatpush1.msra.mxu0 0.0
        %5265 = vmatprep.subr.mxu0 0.0
        %5266 = vmatpush1.msra.mxu0 0.0
        %5267 = vmatprep.subr.mxu0 0.0
        %5268 = vmatpush1.msra.mxu0 0.0
        %5269 = vmatprep.subr.mxu0 0.0
        %5270 = vmatpush1.msra.mxu0 0.0
        %5271 = vmatprep.subr.mxu0 0.0
        %5272 = vmatpush1.msra.mxu0 0.0
        %5273 = vmatprep.subr.mxu0 0.0
        %5274 = vmatpush1.msra.mxu0 0.0
        %5275 = vmatprep.subr.mxu0 0.0
        %5276 = vmatpush1.msra.mxu0 0.0
        %5277 = vmatprep.subr.mxu0 0.0
        %5278 = vmatpush1.msra.mxu0 0.0
        %5279 = vmatprep.subr.mxu0 0.0
        %5280 = vmatpush1.msra.mxu0 0.0
        %5281 = vmatprep.subr.mxu0 0.0
        %5282 = vmatpush1.msra.mxu0 0.0
        %5283 = vmatprep.subr.mxu0 0.0
        %5284 = vmatpush1.msra.mxu0 0.0
        %5285 = vmatprep.subr.mxu0 0.0
        %5286 = vmatpush1.msra.mxu0 0.0
        %5287 = vmatprep.subr.mxu0 0.0
        %5288 = vmatpush1.msra.mxu0 0.0
        %5289 = vmatprep.subr.mxu0 0.0
        %5290 = vmatpush1.msra.mxu0 0.0
        %5291 = vmatprep.subr.mxu0 0.0
        %5292 = vmatpush1.msra.mxu0 0.0
        %5293 = vmatprep.subr.mxu0 0.0
        %5294 = vmatpush1.msra.mxu0 0.0
        %5295 = vmatprep.subr.mxu0 0.0
        %5296 = vmatpush1.msra.mxu0 0.0
        %5297 = vmatprep.subr.mxu0 0.0
        %5298 = vmatpush1.msra.mxu0 0.0
        %5299 = vmatprep.subr.mxu0 0.0
        %5300 = vmatpush1.msra.mxu0 0.0
        %5301 = vmatprep.subr.mxu0 0.0
        %5302 = vmatpush1.msra.mxu0 0.0
        %5303 = vmatprep.subr.mxu0 0.0
        %5304 = vmatpush1.msra.mxu0 0.0
        %5305 = vmatprep.subr.mxu0 0.0
        %5306 = vmatpush1.msra.mxu0 0.0
        %5307 = vmatprep.subr.mxu0 0.0
        %5308 = vmatpush1.msra.mxu0 0.0
        %5309 = vmatprep.subr.mxu0 0.0
        %5310 = vmatpush1.msra.mxu0 0.0
        %5311 = vmatprep.subr.mxu0 0.0
        %5312 = vmatpush1.msra.mxu0 0.0
        %5313 = vmatprep.mubr.f32.mxu0 0.0
        %5314 = vmatmul.mubr.f32.gmra.mrb[0].mxu0 %v5238
        %v5315 = vpop.f32.mrb[0].mxu0
        %v5316 = vadd.f32 0.0, %v5315
        %v5317 = vpop.f32.mrb[0].mxu0
        %5318 = vmatprep.mubr.f32.mxu0 0.0
        %5319 = vmatmul.mubr.f32.gmra.mrb[0].mxu0 %v5241
        %v5320 = vpop.f32.mrb[0].mxu0
        %v5321 = vadd.f32 0.0, %v5320
        %v5322 = vpop.f32.mrb[0].mxu0
        %5323 = vmatprep.mubr.f32.mxu0 0.0
        %5324 = vmatmul.mubr.f32.gmra.mrb[0].mxu0 %v5244
        %v5325 = vpop.f32.mrb[0].mxu0
        %v5326 = vadd.f32 0.0, %v5325
        %v5327 = vpop.f32.mrb[0].mxu0
        %5328 = vmatprep.mubr.f32.mxu0 0.0
        %5329 = vmatmul.mubr.f32.gmra.mrb[0].mxu0 %v5247
        %v5330 = vpop.f32.mrb[0].mxu0
        %v5331 = vadd.f32 0.0, %v5330
        %v5332 = vpop.f32.mrb[0].mxu0
        %5333 = vdwg.mxu0
        %s5334 = scalar_lea.vmem %s301, 96 [#allocation3]
        %5335 = vst.msk [vmem:[%s5334] sm:$0xff] %vm4764, %v5316
        %5336 = vst.msk [vmem:[%s5334 + $0x8] sm:$0xff] %vm4764, %v5321
        %5337 = vst.msk [vmem:[%s5334 + $0x10] sm:$0xff] %vm4764, %v5326
        %5338 = vst.msk [vmem:[%s5334 + $0x18] sm:$0xff] %vm4764, %v5331
        %s5339 = sand.u32 %s200, 1
        %s5340 = scalar_lea.sflag [#allocation4], %s5339
        %s5341 = sand.u32 %s200, 1
        %s5342 = smul.addr %s5341, 128
        %s5343 = scalar_lea.vmem [#allocation3], %s5342
        // Predicated region
        $region53: #{tpu_custom_call.1} parent=47 // pred_check
          %p5344 = pneg %p210
        $region54: #{tpu_custom_call.1} parent=47 // pred_check_branch
          %5346 = sbr.rel (%p5344) target = $region56
        $region55: #{tpu_custom_call.1} parent=47 // pred_region
          #allocation6 [shape = 'u32[6]{0}', space=smem, size = 0x18, scoped, tag = 'DMA stride descriptor']
          %s5347 = smul.u32 4, %s26
          %s5349 = ssub.s32 2048, 2048
          %5350 = vsyncadd %s5340, %s5349
          %s5351 = smul.addr %s25, 32
          %s5352 = sadd.s32 %s5347, %s5351
          %s5353 = smul.addr %s5352, 128
          %s5354 = scalar_lea.hbm %s7, %s5353
          %s5356 = sshll.u32 1, 14
          %s5357 = sxor.u32 4294967295, %s5356
          %s5360 = sshll.u32 7, 18
          %s5361 = sxor.u32 4294967295, %s5360
          %s5362 = sand.u32 0, %s5361
          %s5364 = sor.u32 %s5362, 0
          %s5366 = sshll.u32 3, 24
          %s5367 = sxor.u32 4294967295, %s5366
          %s5368 = sand.u32 %s5364, %s5367
          %s5370 = sor.u32 %s5368, 0
          %s5371 = sshll.u32 %s5343, 4
          %s5372 = int_to_ptr.vmem [resolvable:$true] %s5371
          %5378 = sst [smem:[#allocation6]] 512
          %s5379 = scalar_lea.smem [#allocation6], 1
          %5380 = sst [smem:[%s5379]] 1024
          %s5381 = scalar_lea.smem [#allocation6], 2
          %5382 = sst [smem:[%s5381]] 4
          %s5383 = scalar_lea.smem [#allocation6], 3
          %5384 = sst [smem:[%s5383]] 128
          %s5385 = scalar_lea.smem [#allocation6], 4
          %5386 = sst [smem:[%s5385]] 128
          %s5387 = scalar_lea.smem [#allocation6], 5
          %5388 = sst [smem:[%s5387]] 8
          %5390 = dma.general %s5372, 2048, %s5354, %s5340, [#allocation5], [#allocation6], %s5370, 0
        $region56: #{tpu_custom_call.1} parent=47 // pred_fallthru
          _
      $region48: #{tpu_custom_call.1} parent=5 // pred_fallthru
        _
      %p5391 = scmp.le.s32.totalorder 2, %s16
      // Predicated region
      $region57: #{tpu_custom_call.1} parent=5 // pred_check
        %p5392 = pneg %p5391
      $region58: #{tpu_custom_call.1} parent=5 // pred_check_branch
        %5394 = sbr.rel (%p5392) target = $region60
      $region59: #{tpu_custom_call.1} parent=5 // pred_region
        %s5395 = ssub.s32 %s16, 2
        // Predicated region
        $region61: #{tpu_custom_call.1} parent=59 // pred_check
          %p5396 = pneg %p216
        $region62: #{tpu_custom_call.1} parent=59 // pred_check_branch
          %5398 = sbr.rel (%p5396) target = $region64
        $region63: #{tpu_custom_call.1} parent=59 // pred_region
          %s5399 = sand.u32 %s201, 1
          %s5400 = scalar_lea.sflag [#allocation4], %s5399
          %s5401 = sand.u32 %s201, 1
          %s5402 = smul.addr %s5401, 128
          %s5403 = scalar_lea.vmem [#allocation3], %s5402
          %5404 = dma.done %s5400, 2048
        $region64: #{tpu_custom_call.1} parent=59 // pred_fallthru
          _
      $region60: #{tpu_custom_call.1} parent=5 // pred_fallthru
        _
    $region6: #{tpu_custom_call.1} parent=1 // loop_footer
      %s20 = sadd.s32 1, %s16
    $region7: #{tpu_custom_call.1} parent=1 // loop_footer_branch
      %15 = sbr.rel target = $region3
    $region8: #{tpu_custom_call.1} parent=1 // loop_exit
      _
    %5405 = vsyncpa [#allocation4], 1
    %s5406 = scalar_lea.sflag [#allocation4], 1
    %5407 = vsyncpa %s5406, 1

</llo_original>
